<compile_context>
chip_gen: v7x
topology: tpu7x:2x2x1
jax: 0.10.0
libtpu: 0.0.40
codegen_flags: <defaults>
</compile_context>

<pallas_src>
import functools
import math

import jax
import jax.numpy as jnp
from jax import lax
from jax.experimental import pallas as pl
from jax.experimental.pallas import tpu as pltpu

EPS = 1e-5


def mha_kernel(q_ref, k_ref, v_ref,
               wq_ref, bq_ref, wk_ref, bk_ref, wv_ref, bv_ref,
               wfc_ref, bfc_ref, gamma_ref, beta_ref,
               o_ref, attn_ref, *, n_head, d_k, d_v):
    # q_ref: (1, TQ, Dm); k_ref/v_ref: (1, Lk, Dm)
    # wq/wk: (Dm, nH*dk); wv: (Dm, nH*dv); wfc: (nH*dv, Dm)   (packed, head-major)
    # bq/bk: (1, nH*dk); bv: (1, nH*dv); bfc/gamma/beta: (1, Dm)
    # o_ref: (1, TQ, Dm); attn_ref: (nH, 1, TQ, Lk)
    xq = q_ref[0]                                   # (TQ, Dm) native dtype -- also the residual
    xk = k_ref[0]                                   # (Lk, Dm)
    xv = v_ref[0]                                   # (Lk, Dm)

    # --- packed projections: three full-width MXU matmuls, f32 accumulation ---
    # (1/sqrt(d_k) is already folded into wq/bq host-side.)
    qh = jnp.dot(xq, wq_ref[...], preferred_element_type=jnp.float32) + bq_ref[...]  # (TQ, nH*dk)
    kh = jnp.dot(xk, wk_ref[...], preferred_element_type=jnp.float32) + bk_ref[...]  # (Lk, nH*dk)
    vh = jnp.dot(xv, wv_ref[...], preferred_element_type=jnp.float32) + bv_ref[...]  # (Lk, nH*dv)

    # --- scaled dot-product attention per head (mask=None), softmax over keys ---
    head_outs = []
    for h in range(n_head):                          # static loop; nH is small
        qs = qh[:, h * d_k:(h + 1) * d_k]            # (TQ, dk)
        ks = kh[:, h * d_k:(h + 1) * d_k]            # (Lk, dk)
        vs = vh[:, h * d_v:(h + 1) * d_v]            # (Lk, dv)
        # contract on the last dim of both -> no transpose of K
        scores = lax.dot_general(qs, ks, (((1,), (1,)), ((), ())),
                                 preferred_element_type=jnp.float32)   # (TQ, Lk)
        m = jnp.max(scores, axis=-1, keepdims=True)
        e = jnp.exp(scores - m)
        s = jnp.sum(e, axis=-1, keepdims=True)
        attn = e / s                                 # exact softmax (returned to caller)
        attn_ref[h, 0] = attn.astype(attn_ref.dtype)
        head_outs.append(jnp.dot(attn, vs, preferred_element_type=jnp.float32))  # (TQ, dv)

    # --- output projection: single matmul over the packed head dim, then epilogue ---
    oh = jnp.concatenate(head_outs, axis=-1)         # (TQ, nH*dv), head-major as torch concat
    y = jnp.dot(oh, wfc_ref[...], preferred_element_type=jnp.float32) + bfc_ref[...]
    y = y + xq.astype(jnp.float32)                   # residual add (dropout = identity, eval)
    mean = jnp.mean(y, axis=-1, keepdims=True)
    var = jnp.mean((y - mean) ** 2, axis=-1, keepdims=True)
    yn = (y - mean) * lax.rsqrt(var + EPS)
    o_ref[0] = (yn * gamma_ref[...] + beta_ref[...]).astype(o_ref.dtype)


def multi_head_attention(q, k, v, wq, bq, wk, bk, wv, bv, wfc, bfc, gamma, beta,
                         *, attn_dtype=jnp.float32, q_tile=None):
    """q/k/v: (B, L, d_model).
    wq/wk: (n_head, d_model, d_k)  (= torch w_qs.weight[h*d_k:(h+1)*d_k, :].T per head)
    bq/bk: (n_head, d_k); wv: (n_head, d_model, d_v); bv: (n_head, d_v)
    wfc:   (n_head, d_v, d_model)  (= torch fc.weight.T[h*d_v:(h+1)*d_v, :] per head)
    bfc, gamma, beta: (d_model,)
    Returns (out (B, Lq, d_model), attn (n_head*B, Lq, Lk))."""
    B, Lq, Dm = q.shape
    _, Lk, _ = k.shape
    nH, _, dk = wq.shape
    dv = wv.shape[2]

    # Host-side packing: head-major concat along the output feature dim (matches the
    # torch permute/view), and fold the 1/sqrt(d_k) temperature into the Q projection.
    scale = 1.0 / math.sqrt(dk)
    wq_p = (wq * scale).transpose(1, 0, 2).reshape(Dm, nH * dk)
    bq_p = (bq * scale).reshape(1, nH * dk)
    wk_p = wk.transpose(1, 0, 2).reshape(Dm, nH * dk)
    bk_p = bk.reshape(1, nH * dk)
    wv_p = wv.transpose(1, 0, 2).reshape(Dm, nH * dv)
    bv_p = bv.reshape(1, nH * dv)
    wfc_p = wfc.reshape(nH * dv, Dm)
    bfc2 = bfc.reshape(1, Dm)
    g2 = gamma.reshape(1, Dm)
    be2 = beta.reshape(1, Dm)

    # Query tiling: bounds live VMEM ((TQ, Lk) scores/attn per head + double-buffered
    # attn output block) at real FastSpeech lengths; falls back to the full sequence
    # for small Lq. Re-derive / shrink for v7x's 64 MiB VMEM if needed.
    if q_tile is None:
        q_tile = Lq
        for cand in (512, 256, 128):
            if Lq > cand and Lq % cand == 0:
                q_tile = cand
                break
    assert Lq % q_tile == 0
    n_qt = Lq // q_tile

    kernel = functools.partial(mha_kernel, n_head=nH, d_k=dk, d_v=dv)

    out, attn = pl.pallas_call(
        kernel,
        out_shape=(jax.ShapeDtypeStruct((B, Lq, Dm), q.dtype),
                   jax.ShapeDtypeStruct((nH, B, Lq, Lk), attn_dtype)),
        grid_spec=pltpu.PrefetchScalarGridSpec(
            num_scalar_prefetch=0,
            grid=(B, n_qt),                                           # both axes independent
            in_specs=[
                pl.BlockSpec((1, q_tile, Dm), lambda b, t: (b, t, 0)),   # q (tile of rows)
                pl.BlockSpec((1, Lk, Dm), lambda b, t: (b, 0, 0)),       # k (resident across t)
                pl.BlockSpec((1, Lk, Dm), lambda b, t: (b, 0, 0)),       # v (resident across t)
                pl.BlockSpec((Dm, nH * dk), lambda b, t: (0, 0)),        # wq packed (resident)
                pl.BlockSpec((1, nH * dk), lambda b, t: (0, 0)),         # bq
                pl.BlockSpec((Dm, nH * dk), lambda b, t: (0, 0)),        # wk packed
                pl.BlockSpec((1, nH * dk), lambda b, t: (0, 0)),         # bk
                pl.BlockSpec((Dm, nH * dv), lambda b, t: (0, 0)),        # wv packed
                pl.BlockSpec((1, nH * dv), lambda b, t: (0, 0)),         # bv
                pl.BlockSpec((nH * dv, Dm), lambda b, t: (0, 0)),        # wfc packed
                pl.BlockSpec((1, Dm), lambda b, t: (0, 0)),              # bfc
                pl.BlockSpec((1, Dm), lambda b, t: (0, 0)),              # gamma
                pl.BlockSpec((1, Dm), lambda b, t: (0, 0)),              # beta
            ],
            out_specs=[
                pl.BlockSpec((1, q_tile, Dm), lambda b, t: (b, t, 0)),       # out
                pl.BlockSpec((nH, 1, q_tile, Lk), lambda b, t: (0, b, t, 0)),  # attn (all heads)
            ],
        ),
        compiler_params=pltpu.CompilerParams(
            dimension_semantics=("parallel", "parallel"),
            # Raise per-generation (with headroom) for long-sequence FastSpeech configs.
            vmem_limit_bytes=32 * 1024 * 1024),
    )(q, k, v, wq_p, bq_p, wk_p, bk_p, wv_p, bv_p, wfc_p, bfc2, g2, be2)

    # (nH, B, Lq, Lk) -> (nH*B, Lq, Lk): contiguous head-major view, as torch returns it.
    return out, attn.reshape(nH * B, Lq, Lk)


def ref_forward(q, k, v, wq, bq, wk, bk, wv, bv, wfc, bfc, gamma, beta):
    """Pure-JAX reference matching the PyTorch module (eval mode, mask=None)."""
    B, Lq, Dm = q.shape
    nH, _, dk = wq.shape
    qh = jnp.einsum('bld,hdk->hblk', q, wq) + bq[:, None, None, :]
    kh = jnp.einsum('bld,hdk->hblk', k, wk) + bk[:, None, None, :]
    vh = jnp.einsum('bld,hdv->hblv', v, wv) + bv[:, None, None, :]
    scores = jnp.einsum('hbqd,hbkd->hbqk', qh, kh) / math.sqrt(dk)
    attn = jax.nn.softmax(scores, axis=-1)
    oh = jnp.einsum('hbqk,hbkv->hbqv', attn, vh)
    out = jnp.einsum('hbqv,hvd->bqd', oh, wfc) + bfc
    y = out + q
    mean = y.mean(-1, keepdims=True)
    var = ((y - mean) ** 2).mean(-1, keepdims=True)
    out = (y - mean) / jnp.sqrt(var + EPS) * gamma + beta
    return out, attn.reshape(nH * B, Lq, -1)


if __name__ == "__main__":
    # Keep the f32 reference matmuls in full precision so they match the kernel's
    # f32-accumulating MXU dots to tight tolerance.
    jax.config.update("jax_default_matmul_precision", "highest")

    B, L, Dm = 2, 16, 32        # batch, seq len, d_model
    nH, dk, dv = 2, 16, 16      # heads, d_k, d_v

    key = jax.random.PRNGKey(0)
    ks = jax.random.split(key, 13)
    q = jax.random.normal(ks[0], (B, L, Dm), dtype=jnp.float32)
    k = jax.random.normal(ks[1], (B, L, Dm), dtype=jnp.float32)
    v = jax.random.normal(ks[2], (B, L, Dm), dtype=jnp.float32)
    wq = 0.1 * jax.random.normal(ks[3], (nH, Dm, dk), dtype=jnp.float32)
    bq = 0.1 * jax.random.normal(ks[4], (nH, dk), dtype=jnp.float32)
    wk = 0.1 * jax.random.normal(ks[5], (nH, Dm, dk), dtype=jnp.float32)
    bk = 0.1 * jax.random.normal(ks[6], (nH, dk), dtype=jnp.float32)
    wv = 0.1 * jax.random.normal(ks[7], (nH, Dm, dv), dtype=jnp.float32)
    bv = 0.1 * jax.random.normal(ks[8], (nH, dv), dtype=jnp.float32)
    wfc = 0.1 * jax.random.normal(ks[9], (nH, dv, Dm), dtype=jnp.float32)
    bfc = 0.1 * jax.random.normal(ks[10], (Dm,), dtype=jnp.float32)
    gamma = 1.0 + 0.1 * jax.random.normal(ks[11], (Dm,), dtype=jnp.float32)
    beta = 0.1 * jax.random.normal(ks[12], (Dm,), dtype=jnp.float32)

    out, attn = multi_head_attention(q, k, v, wq, bq, wk, bk, wv, bv, wfc, bfc, gamma, beta)
    out = jax.block_until_ready(out)
    attn = jax.block_until_ready(attn)

    exp_out, exp_attn = ref_forward(q, k, v, wq, bq, wk, bk, wv, bv, wfc, bfc, gamma, beta)
    assert jnp.allclose(out, exp_out, atol=1e-4, rtol=1e-4), (
        float(jnp.max(jnp.abs(out - exp_out))))
    assert jnp.allclose(attn, exp_attn, atol=1e-4, rtol=1e-4), (
        float(jnp.max(jnp.abs(attn - exp_attn))))

    print("KERNEL_OK")
</pallas_src>

<mosaic_0001>
module attributes {stable_mosaic.version = 11 : i64} {
  func.func @mha_kernel(%arg0: i32, %arg1: i32, %arg2: memref<1x16x32xf32, #tpu.memory_space<vmem>>, %arg3: memref<1x16x32xf32, #tpu.memory_space<vmem>>, %arg4: memref<1x16x32xf32, #tpu.memory_space<vmem>>, %arg5: memref<32x32xf32, #tpu.memory_space<vmem>>, %arg6: memref<1x32xf32, #tpu.memory_space<vmem>>, %arg7: memref<32x32xf32, #tpu.memory_space<vmem>>, %arg8: memref<1x32xf32, #tpu.memory_space<vmem>>, %arg9: memref<32x32xf32, #tpu.memory_space<vmem>>, %arg10: memref<1x32xf32, #tpu.memory_space<vmem>>, %arg11: memref<32x32xf32, #tpu.memory_space<vmem>>, %arg12: memref<1x32xf32, #tpu.memory_space<vmem>>, %arg13: memref<1x32xf32, #tpu.memory_space<vmem>>, %arg14: memref<1x32xf32, #tpu.memory_space<vmem>>, %arg15: memref<1x16x32xf32, #tpu.memory_space<vmem>>, %arg16: memref<2x1x16x16xf32, #tpu.memory_space<vmem>>) attributes {dimension_semantics = [#tpu.dimension_semantics<parallel>, #tpu.dimension_semantics<parallel>], iteration_bounds = array<i64: 2, 1>, scalar_prefetch = 0 : i64, scratch_operands = 0 : i64, tpu.core_type = #tpu.core_type<tc>, window_params = [{transform_indices = @transform_0, window_bounds = array<i64: 1, 16, 32>}, {transform_indices = @transform_1, window_bounds = array<i64: 1, 16, 32>}, {transform_indices = @transform_2, window_bounds = array<i64: 1, 16, 32>}, {pipeline_mode = #tpu.pipeline_mode<synchronous>, transform_indices = @transform_3, window_bounds = array<i64: 32, 32>}, {pipeline_mode = #tpu.pipeline_mode<synchronous>, transform_indices = @transform_4, window_bounds = array<i64: 1, 32>}, {pipeline_mode = #tpu.pipeline_mode<synchronous>, transform_indices = @transform_5, window_bounds = array<i64: 32, 32>}, {pipeline_mode = #tpu.pipeline_mode<synchronous>, transform_indices = @transform_6, window_bounds = array<i64: 1, 32>}, {pipeline_mode = #tpu.pipeline_mode<synchronous>, transform_indices = @transform_7, window_bounds = array<i64: 32, 32>}, {pipeline_mode = #tpu.pipeline_mode<synchronous>, transform_indices = @transform_8, window_bounds = array<i64: 1, 32>}, {pipeline_mode = #tpu.pipeline_mode<synchronous>, transform_indices = @transform_9, window_bounds = array<i64: 32, 32>}, {pipeline_mode = #tpu.pipeline_mode<synchronous>, transform_indices = @transform_10, window_bounds = array<i64: 1, 32>}, {pipeline_mode = #tpu.pipeline_mode<synchronous>, transform_indices = @transform_11, window_bounds = array<i64: 1, 32>}, {pipeline_mode = #tpu.pipeline_mode<synchronous>, transform_indices = @transform_12, window_bounds = array<i64: 1, 32>}, {transform_indices = @transform_13, window_bounds = array<i64: 1, 16, 32>}, {transform_indices = @transform_14, window_bounds = array<i64: 2, 1, 16, 16>}]} {
    %c0 = arith.constant 0 : index
    %c0_0 = arith.constant 0 : index
    %c0_1 = arith.constant 0 : index
    %0 = vector.load %arg2[%c0, %c0_0, %c0_1] : memref<1x16x32xf32, #tpu.memory_space<vmem>>, vector<1x16x32xf32>
    %1 = vector.shape_cast %0 : vector<1x16x32xf32> to vector<16x32xf32>
    %c0_2 = arith.constant 0 : index
    %c0_3 = arith.constant 0 : index
    %c0_4 = arith.constant 0 : index
    %2 = vector.load %arg3[%c0_2, %c0_3, %c0_4] : memref<1x16x32xf32, #tpu.memory_space<vmem>>, vector<1x16x32xf32>
    %3 = vector.shape_cast %2 : vector<1x16x32xf32> to vector<16x32xf32>
    %c0_5 = arith.constant 0 : index
    %c0_6 = arith.constant 0 : index
    %c0_7 = arith.constant 0 : index
    %4 = vector.load %arg4[%c0_5, %c0_6, %c0_7] : memref<1x16x32xf32, #tpu.memory_space<vmem>>, vector<1x16x32xf32>
    %5 = vector.shape_cast %4 : vector<1x16x32xf32> to vector<16x32xf32>
    %c0_8 = arith.constant 0 : index
    %c0_9 = arith.constant 0 : index
    %6 = vector.load %arg5[%c0_8, %c0_9] : memref<32x32xf32, #tpu.memory_space<vmem>>, vector<32x32xf32>
    %cst = arith.constant dense<0.000000e+00> : vector<16x32xf32>
    %7 = tpu.matmul %1, %6, %cst {dimension_numbers = #tpu.dot_dimension_numbers<[1], [0], [0], [1], [0, 0, 1, 1], [], []>, precision = #tpu.contract_precision<fp32>} : vector<16x32xf32>, vector<32x32xf32>, vector<16x32xf32> -> vector<16x32xf32>
    %c0_10 = arith.constant 0 : index
    %c0_11 = arith.constant 0 : index
    %8 = vector.load %arg6[%c0_10, %c0_11] : memref<1x32xf32, #tpu.memory_space<vmem>>, vector<1x32xf32>
    %9 = vector.broadcast %8 : vector<1x32xf32> to vector<16x32xf32>
    %10 = arith.addf %7, %9 : vector<16x32xf32>
    %c0_12 = arith.constant 0 : index
    %c0_13 = arith.constant 0 : index
    %11 = vector.load %arg7[%c0_12, %c0_13] : memref<32x32xf32, #tpu.memory_space<vmem>>, vector<32x32xf32>
    %cst_14 = arith.constant dense<0.000000e+00> : vector<16x32xf32>
    %12 = tpu.matmul %3, %11, %cst_14 {dimension_numbers = #tpu.dot_dimension_numbers<[1], [0], [0], [1], [0, 0, 1, 1], [], []>, precision = #tpu.contract_precision<fp32>} : vector<16x32xf32>, vector<32x32xf32>, vector<16x32xf32> -> vector<16x32xf32>
    %c0_15 = arith.constant 0 : index
    %c0_16 = arith.constant 0 : index
    %13 = vector.load %arg8[%c0_15, %c0_16] : memref<1x32xf32, #tpu.memory_space<vmem>>, vector<1x32xf32>
    %14 = vector.broadcast %13 : vector<1x32xf32> to vector<16x32xf32>
    %15 = arith.addf %12, %14 : vector<16x32xf32>
    %c0_17 = arith.constant 0 : index
    %c0_18 = arith.constant 0 : index
    %16 = vector.load %arg9[%c0_17, %c0_18] : memref<32x32xf32, #tpu.memory_space<vmem>>, vector<32x32xf32>
    %cst_19 = arith.constant dense<0.000000e+00> : vector<16x32xf32>
    %17 = tpu.matmul %5, %16, %cst_19 {dimension_numbers = #tpu.dot_dimension_numbers<[1], [0], [0], [1], [0, 0, 1, 1], [], []>, precision = #tpu.contract_precision<fp32>} : vector<16x32xf32>, vector<32x32xf32>, vector<16x32xf32> -> vector<16x32xf32>
    %c0_20 = arith.constant 0 : index
    %c0_21 = arith.constant 0 : index
    %18 = vector.load %arg10[%c0_20, %c0_21] : memref<1x32xf32, #tpu.memory_space<vmem>>, vector<1x32xf32>
    %19 = vector.broadcast %18 : vector<1x32xf32> to vector<16x32xf32>
    %20 = arith.addf %17, %19 : vector<16x32xf32>
    %21 = vector.extract_strided_slice %10 {offsets = [0, 0], sizes = [16, 16], strides = [1, 1]} : vector<16x32xf32> to vector<16x16xf32>
    %22 = vector.extract_strided_slice %15 {offsets = [0, 0], sizes = [16, 16], strides = [1, 1]} : vector<16x32xf32> to vector<16x16xf32>
    %23 = vector.extract_strided_slice %20 {offsets = [0, 0], sizes = [16, 16], strides = [1, 1]} : vector<16x32xf32> to vector<16x16xf32>
    %cst_22 = arith.constant dense<0.000000e+00> : vector<16x16xf32>
    %24 = tpu.matmul %21, %22, %cst_22 {dimension_numbers = #tpu.dot_dimension_numbers<[1], [1], [0], [0], [0, 0, 1, 0], [], []>, precision = #tpu.contract_precision<fp32>} : vector<16x16xf32>, vector<16x16xf32>, vector<16x16xf32> -> vector<16x16xf32>
    %cst_23 = arith.constant dense<0xFF800000> : vector<16xf32>
    %25 = vector.multi_reduction <maximumf>, %24, %cst_23 [1] : vector<16x16xf32> to vector<16xf32>
    %26 = vector.shape_cast %25 : vector<16xf32> to vector<16x1xf32>
    %27 = vector.broadcast %26 : vector<16x1xf32> to vector<16x16xf32>
    %28 = arith.subf %24, %27 : vector<16x16xf32>
    %29 = math.exp %28 : vector<16x16xf32>
    %cst_24 = arith.constant dense<0.000000e+00> : vector<16xf32>
    %30 = vector.multi_reduction <add>, %29, %cst_24 [1] : vector<16x16xf32> to vector<16xf32>
    %31 = vector.shape_cast %30 : vector<16xf32> to vector<16x1xf32>
    %32 = vector.broadcast %31 : vector<16x1xf32> to vector<16x16xf32>
    %33 = arith.divf %29, %32 : vector<16x16xf32>
    %c0_25 = arith.constant 0 : index
    %c0_26 = arith.constant 0 : index
    %c0_27 = arith.constant 0 : index
    %c0_28 = arith.constant 0 : index
    %34 = vector.load %arg16[%c0_25, %c0_26, %c0_27, %c0_28] : memref<2x1x16x16xf32, #tpu.memory_space<vmem>>, vector<1x1x16x16xf32>
    %35 = vector.shape_cast %34 : vector<1x1x16x16xf32> to vector<16x16xf32>
    %36 = vector.shape_cast %33 : vector<16x16xf32> to vector<1x1x16x16xf32>
    tpu.vector_store %arg16[%c0_25, %c0_26, %c0_27, %c0_28], %36 {strides = array<i32>} : memref<2x1x16x16xf32, #tpu.memory_space<vmem>>, vector<1x1x16x16xf32>,
    %cst_29 = arith.constant dense<0.000000e+00> : vector<16x16xf32>
    %37 = tpu.matmul %33, %23, %cst_29 {dimension_numbers = #tpu.dot_dimension_numbers<[1], [0], [0], [1], [0, 0, 1, 1], [], []>, precision = #tpu.contract_precision<fp32>} : vector<16x16xf32>, vector<16x16xf32>, vector<16x16xf32> -> vector<16x16xf32>
    %38 = vector.extract_strided_slice %10 {offsets = [0, 16], sizes = [16, 16], strides = [1, 1]} : vector<16x32xf32> to vector<16x16xf32>
    %39 = vector.extract_strided_slice %15 {offsets = [0, 16], sizes = [16, 16], strides = [1, 1]} : vector<16x32xf32> to vector<16x16xf32>
    %40 = vector.extract_strided_slice %20 {offsets = [0, 16], sizes = [16, 16], strides = [1, 1]} : vector<16x32xf32> to vector<16x16xf32>
    %cst_30 = arith.constant dense<0.000000e+00> : vector<16x16xf32>
    %41 = tpu.matmul %38, %39, %cst_30 {dimension_numbers = #tpu.dot_dimension_numbers<[1], [1], [0], [0], [0, 0, 1, 0], [], []>, precision = #tpu.contract_precision<fp32>} : vector<16x16xf32>, vector<16x16xf32>, vector<16x16xf32> -> vector<16x16xf32>
    %cst_31 = arith.constant dense<0xFF800000> : vector<16xf32>
    %42 = vector.multi_reduction <maximumf>, %41, %cst_31 [1] : vector<16x16xf32> to vector<16xf32>
    %43 = vector.shape_cast %42 : vector<16xf32> to vector<16x1xf32>
    %44 = vector.broadcast %43 : vector<16x1xf32> to vector<16x16xf32>
    %45 = arith.subf %41, %44 : vector<16x16xf32>
    %46 = math.exp %45 : vector<16x16xf32>
    %cst_32 = arith.constant dense<0.000000e+00> : vector<16xf32>
    %47 = vector.multi_reduction <add>, %46, %cst_32 [1] : vector<16x16xf32> to vector<16xf32>
    %48 = vector.shape_cast %47 : vector<16xf32> to vector<16x1xf32>
    %49 = vector.broadcast %48 : vector<16x1xf32> to vector<16x16xf32>
    %50 = arith.divf %46, %49 : vector<16x16xf32>
    %c1 = arith.constant 1 : index
    %c0_33 = arith.constant 0 : index
    %c0_34 = arith.constant 0 : index
    %c0_35 = arith.constant 0 : index
    %51 = vector.load %arg16[%c1, %c0_33, %c0_34, %c0_35] : memref<2x1x16x16xf32, #tpu.memory_space<vmem>>, vector<1x1x16x16xf32>
    %52 = vector.shape_cast %51 : vector<1x1x16x16xf32> to vector<16x16xf32>
    %53 = vector.shape_cast %50 : vector<16x16xf32> to vector<1x1x16x16xf32>
    tpu.vector_store %arg16[%c1, %c0_33, %c0_34, %c0_35], %53 {strides = array<i32>} : memref<2x1x16x16xf32, #tpu.memory_space<vmem>>, vector<1x1x16x16xf32>,
    %cst_36 = arith.constant dense<0.000000e+00> : vector<16x16xf32>
    %54 = tpu.matmul %50, %40, %cst_36 {dimension_numbers = #tpu.dot_dimension_numbers<[1], [0], [0], [1], [0, 0, 1, 1], [], []>, precision = #tpu.contract_precision<fp32>} : vector<16x16xf32>, vector<16x16xf32>, vector<16x16xf32> -> vector<16x16xf32>
    %55 = tpu.concatenate %37, %54 in 1 : vector<16x16xf32>, vector<16x16xf32> -> vector<16x32xf32>
    %c0_37 = arith.constant 0 : index
    %c0_38 = arith.constant 0 : index
    %56 = vector.load %arg11[%c0_37, %c0_38] : memref<32x32xf32, #tpu.memory_space<vmem>>, vector<32x32xf32>
    %cst_39 = arith.constant dense<0.000000e+00> : vector<16x32xf32>
    %57 = tpu.matmul %55, %56, %cst_39 {dimension_numbers = #tpu.dot_dimension_numbers<[1], [0], [0], [1], [0, 0, 1, 1], [], []>, precision = #tpu.contract_precision<fp32>} : vector<16x32xf32>, vector<32x32xf32>, vector<16x32xf32> -> vector<16x32xf32>
    %c0_40 = arith.constant 0 : index
    %c0_41 = arith.constant 0 : index
    %58 = vector.load %arg12[%c0_40, %c0_41] : memref<1x32xf32, #tpu.memory_space<vmem>>, vector<1x32xf32>
    %59 = vector.broadcast %58 : vector<1x32xf32> to vector<16x32xf32>
    %60 = arith.addf %57, %59 : vector<16x32xf32>
    %61 = arith.addf %60, %1 : vector<16x32xf32>
    %cst_42 = arith.constant dense<0.000000e+00> : vector<16xf32>
    %62 = vector.multi_reduction <add>, %61, %cst_42 [1] : vector<16x32xf32> to vector<16xf32>
    %63 = vector.shape_cast %62 : vector<16xf32> to vector<16x1xf32>
    %cst_43 = arith.constant 3.200000e+01 : f32
    %64 = vector.broadcast %cst_43 : f32 to vector<16x1xf32>
    %65 = arith.divf %63, %64 : vector<16x1xf32>
    %66 = vector.broadcast %65 : vector<16x1xf32> to vector<16x32xf32>
    %67 = arith.subf %61, %66 : vector<16x32xf32>
    %68 = arith.mulf %67, %67 : vector<16x32xf32>
    %cst_44 = arith.constant dense<0.000000e+00> : vector<16xf32>
    %69 = vector.multi_reduction <add>, %68, %cst_44 [1] : vector<16x32xf32> to vector<16xf32>
    %70 = vector.shape_cast %69 : vector<16xf32> to vector<16x1xf32>
    %cst_45 = arith.constant 3.200000e+01 : f32
    %71 = vector.broadcast %cst_45 : f32 to vector<16x1xf32>
    %72 = arith.divf %70, %71 : vector<16x1xf32>
    %73 = vector.broadcast %65 : vector<16x1xf32> to vector<16x32xf32>
    %74 = arith.subf %61, %73 : vector<16x32xf32>
    %cst_46 = arith.constant 9.99999974E-6 : f32
    %75 = vector.broadcast %cst_46 : f32 to vector<16x1xf32>
    %76 = arith.addf %72, %75 : vector<16x1xf32>
    %77 = math.rsqrt %76 : vector<16x1xf32>
    %78 = vector.broadcast %77 : vector<16x1xf32> to vector<16x32xf32>
    %79 = arith.mulf %74, %78 : vector<16x32xf32>
    %c0_47 = arith.constant 0 : index
    %c0_48 = arith.constant 0 : index
    %80 = vector.load %arg13[%c0_47, %c0_48] : memref<1x32xf32, #tpu.memory_space<vmem>>, vector<1x32xf32>
    %81 = vector.broadcast %80 : vector<1x32xf32> to vector<16x32xf32>
    %82 = arith.mulf %79, %81 : vector<16x32xf32>
    %c0_49 = arith.constant 0 : index
    %c0_50 = arith.constant 0 : index
    %83 = vector.load %arg14[%c0_49, %c0_50] : memref<1x32xf32, #tpu.memory_space<vmem>>, vector<1x32xf32>
    %84 = vector.broadcast %83 : vector<1x32xf32> to vector<16x32xf32>
    %85 = arith.addf %82, %84 : vector<16x32xf32>
    %c0_51 = arith.constant 0 : index
    %c0_52 = arith.constant 0 : index
    %c0_53 = arith.constant 0 : index
    %86 = vector.load %arg15[%c0_51, %c0_52, %c0_53] : memref<1x16x32xf32, #tpu.memory_space<vmem>>, vector<1x16x32xf32>
    %87 = vector.shape_cast %86 : vector<1x16x32xf32> to vector<16x32xf32>
    %88 = vector.shape_cast %85 : vector<16x32xf32> to vector<1x16x32xf32>
    tpu.vector_store %arg15[%c0_51, %c0_52, %c0_53], %88 {strides = array<i32>} : memref<1x16x32xf32, #tpu.memory_space<vmem>>, vector<1x16x32xf32>,
    return
  }
  func.func @transform_0(%arg0: i32, %arg1: i32) -> (i32, i32, i32) {
    %c0_i32 = arith.constant 0 : i32
    %c0_i32_0 = arith.constant 0 : i32
    return %arg0, %arg1, %c0_i32 : i32, i32, i32
  }
  func.func @transform_1(%arg0: i32, %arg1: i32) -> (i32, i32, i32) {
    %c0_i32 = arith.constant 0 : i32
    %c0_i32_0 = arith.constant 0 : i32
    %c0_i32_1 = arith.constant 0 : i32
    return %arg0, %c0_i32, %c0_i32_0 : i32, i32, i32
  }
  func.func @transform_2(%arg0: i32, %arg1: i32) -> (i32, i32, i32) {
    %c0_i32 = arith.constant 0 : i32
    %c0_i32_0 = arith.constant 0 : i32
    %c0_i32_1 = arith.constant 0 : i32
    return %arg0, %c0_i32, %c0_i32_0 : i32, i32, i32
  }
  func.func @transform_3(%arg0: i32, %arg1: i32) -> (i32, i32) {
    %c0_i32 = arith.constant 0 : i32
    %c0_i32_0 = arith.constant 0 : i32
    %c0_i32_1 = arith.constant 0 : i32
    return %c0_i32, %c0_i32_0 : i32, i32
  }
  func.func @transform_4(%arg0: i32, %arg1: i32) -> (i32, i32) {
    %c0_i32 = arith.constant 0 : i32
    %c0_i32_0 = arith.constant 0 : i32
    %c0_i32_1 = arith.constant 0 : i32
    return %c0_i32, %c0_i32_0 : i32, i32
  }
  func.func @transform_5(%arg0: i32, %arg1: i32) -> (i32, i32) {
    %c0_i32 = arith.constant 0 : i32
    %c0_i32_0 = arith.constant 0 : i32
    %c0_i32_1 = arith.constant 0 : i32
    return %c0_i32, %c0_i32_0 : i32, i32
  }
  func.func @transform_6(%arg0: i32, %arg1: i32) -> (i32, i32) {
    %c0_i32 = arith.constant 0 : i32
    %c0_i32_0 = arith.constant 0 : i32
    %c0_i32_1 = arith.constant 0 : i32
    return %c0_i32, %c0_i32_0 : i32, i32
  }
  func.func @transform_7(%arg0: i32, %arg1: i32) -> (i32, i32) {
    %c0_i32 = arith.constant 0 : i32
    %c0_i32_0 = arith.constant 0 : i32
    %c0_i32_1 = arith.constant 0 : i32
    return %c0_i32, %c0_i32_0 : i32, i32
  }
  func.func @transform_8(%arg0: i32, %arg1: i32) -> (i32, i32) {
    %c0_i32 = arith.constant 0 : i32
    %c0_i32_0 = arith.constant 0 : i32
    %c0_i32_1 = arith.constant 0 : i32
    return %c0_i32, %c0_i32_0 : i32, i32
  }
  func.func @transform_9(%arg0: i32, %arg1: i32) -> (i32, i32) {
    %c0_i32 = arith.constant 0 : i32
    %c0_i32_0 = arith.constant 0 : i32
    %c0_i32_1 = arith.constant 0 : i32
    return %c0_i32, %c0_i32_0 : i32, i32
  }
  func.func @transform_10(%arg0: i32, %arg1: i32) -> (i32, i32) {
    %c0_i32 = arith.constant 0 : i32
    %c0_i32_0 = arith.constant 0 : i32
    %c0_i32_1 = arith.constant 0 : i32
    return %c0_i32, %c0_i32_0 : i32, i32
  }
  func.func @transform_11(%arg0: i32, %arg1: i32) -> (i32, i32) {
    %c0_i32 = arith.constant 0 : i32
    %c0_i32_0 = arith.constant 0 : i32
    %c0_i32_1 = arith.constant 0 : i32
    return %c0_i32, %c0_i32_0 : i32, i32
  }
  func.func @transform_12(%arg0: i32, %arg1: i32) -> (i32, i32) {
    %c0_i32 = arith.constant 0 : i32
    %c0_i32_0 = arith.constant 0 : i32
    %c0_i32_1 = arith.constant 0 : i32
    return %c0_i32, %c0_i32_0 : i32, i32
  }
  func.func @transform_13(%arg0: i32, %arg1: i32) -> (i32, i32, i32) {
    %c0_i32 = arith.constant 0 : i32
    %c0_i32_0 = arith.constant 0 : i32
    return %arg0, %arg1, %c0_i32 : i32, i32, i32
  }
  func.func @transform_14(%arg0: i32, %arg1: i32) -> (i32, i32, i32, i32) {
    %c0_i32 = arith.constant 0 : i32
    %c0_i32_0 = arith.constant 0 : i32
    %c0_i32_1 = arith.constant 0 : i32
    return %c0_i32, %arg0, %arg1, %c0_i32_0 : i32, i32, i32, i32
  }
}

</mosaic_0001>

<llo_original>
// kernel: tpu_custom_call.1
$region0: #{tpu_custom_call.1}
  #allocation0 [shape = 'u32[]', space=smem, size = 0x4, offset = 0x4, fixed_abs, tag = 'smem constant byte address 0x4 - core index']
  #allocation1 [shape = 'u32[144,128]{1,0:T(1,128)}', space=vmem, size = 0x12000, scoped, tag = 'internal scratch']
  #allocation17 [shape = 's32[]', space=sflag, size = 0x4, offset = 0, fixed_abs, tag = 'sflag constant byte address 0x0 - dummy sync flag']
  %s0 = inlined_call_operand.hbm [shape: f32[2,16,32], index: 0, kind: input, shape index: {}]
  %s1 = inlined_call_operand.hbm [shape: f32[2,16,32], index: 1, kind: input, shape index: {}]
  %s2 = inlined_call_operand.hbm [shape: f32[2,16,32], index: 2, kind: input, shape index: {}]
  %s3 = inlined_call_operand.hbm [shape: f32[32,32], index: 3, kind: input, shape index: {}]
  %s4 = inlined_call_operand.vmem [shape: f32[1,32], index: 4, kind: input, shape index: {}]
  %s5 = inlined_call_operand.hbm [shape: f32[32,32], index: 5, kind: input, shape index: {}]
  %s6 = inlined_call_operand.vmem [shape: f32[1,32], index: 6, kind: input, shape index: {}]
  %s7 = inlined_call_operand.hbm [shape: f32[32,32], index: 7, kind: input, shape index: {}]
  %s8 = inlined_call_operand.hbm [shape: f32[1,32], index: 8, kind: input, shape index: {}]
  %s9 = inlined_call_operand.vmem [shape: f32[32,32], index: 9, kind: input, shape index: {}]
  %s10 = inlined_call_operand.vmem [shape: f32[1,32], index: 10, kind: input, shape index: {}]
  %s11 = inlined_call_operand.vmem [shape: f32[1,32], index: 11, kind: input, shape index: {}]
  %s12 = inlined_call_operand.vmem [shape: f32[1,32], index: 12, kind: input, shape index: {}]
  %s13 = inlined_call_operand.hbm [shape: f32[2,16,32], index: 13, kind: output, shape index: {0}]
  %s14 = inlined_call_operand.hbm [shape: f32[2,2,16,16], index: 14, kind: output, shape index: {1}]
  %15 = xla_tuple %s13, %s14
  %s16 = sld [smem:[#allocation0]]
  $region121: #{tpu_custom_call.1} parent=0
    _
  %s18 = ssub.s32 1, %s16
  %s19 = scalar_select 0, %s18, %s16
  $region1: #{tpu_custom_call.1} parent=0
    #allocation2 [shape = 'u8[16384]{0}', space=vmem, size = 0x4000, scoped, tag = 'input window, operand 0']
    #allocation3 [shape = 's32[2]{0}', space=sflag, size = 0x8, scoped, tag = 'scoped memory for tpu_custom_call.1']
    #allocation4 [shape = 's32[2]{0}', space=sflag, size = 0x8, scoped, tag = 'scoped memory for tpu_custom_call.1']
    #allocation5 [shape = 'u8[16384]{0}', space=vmem, size = 0x4000, scoped, tag = 'input window, operand 1']
    #allocation6 [shape = 's32[2]{0}', space=sflag, size = 0x8, scoped, tag = 'scoped memory for tpu_custom_call.1']
    #allocation7 [shape = 'u8[16384]{0}', space=vmem, size = 0x4000, scoped, tag = 'input window, operand 2']
    #allocation8 [shape = 'u8[16384]{0}', space=vmem, size = 0x4000, scoped, tag = 'input window, operand 3, single buffered']
    #allocation9 [shape = 's32[1]{0}', space=sflag, size = 0x4, scoped, tag = 'scoped memory for tpu_custom_call.1']
    #allocation10 [shape = 'u8[16384]{0}', space=vmem, size = 0x4000, scoped, tag = 'input window, operand 5, single buffered']
    #allocation11 [shape = 'u8[16384]{0}', space=vmem, size = 0x4000, scoped, tag = 'input window, operand 7, single buffered']
    #allocation12 [shape = 's32[1]{0}', space=sflag, size = 0x4, scoped, tag = 'scoped memory for tpu_custom_call.1']
    #allocation13 [shape = 'u8[512]{0}', space=vmem, size = 0x400, scoped, tag = 'input window, operand 8, single buffered']
    #allocation14 [shape = 'u8[16384]{0}', space=vmem, size = 0x4000, scoped, tag = 'output window, operand 0']
    #allocation15 [shape = 'u8[32768]{0}', space=vmem, size = 0x8000, scoped, tag = 'output window, operand 1']
    #allocation16 [shape = 's32[2]{0}', space=sflag, size = 0x8, scoped, tag = 'scoped memory for tpu_custom_call.1']
    %20 = vsyncpa [#allocation3], 0
    %s21 = scalar_lea.sflag [#allocation3], 1
    %22 = vsyncpa %s21, 0
    %23 = vsyncpa [#allocation6], 0
    %s24 = scalar_lea.sflag [#allocation6], 1
    %25 = vsyncpa %s24, 0
    %26 = vsyncpa [#allocation9], 0
    %27 = vsyncpa [#allocation12], 0
    %28 = vsyncpa [#allocation4], 0
    %s29 = scalar_lea.sflag [#allocation4], 1
    %30 = vsyncpa %s29, 0
    %31 = vsyncpa [#allocation16], 0
    %s32 = scalar_lea.sflag [#allocation16], 1
    %33 = vsyncpa %s32, 0
    loop: start=0, step=1, limit=4
    $region2: #{tpu_custom_call.1} parent=1 // loop_pre_header
      _
    $region3: #{tpu_custom_call.1} parent=1 // loop_header
      %s35 = sphi 0, %s39
      %p36 = scmp.ge.s32.totalorder %s35, 4
      %s42 = sphi 0, %s54
      %s43 = sphi 0, %s50
      %s44 = sphi 0, %s42
      %s45 = sphi 0, %s43
      %s46 = sphi 0, %s44
      %s47 = sphi 0, %s45
      %s59 = sphi 0, %s61
      %s62 = sphi 0, %s59
      %s63 = sphi 0, %s62
      %s79 = sphi 0, %s63
      %s85 = sphi 0, %s87
      %s88 = sphi 0, %s85
      %s89 = sphi 0, %s88
      %s105 = sphi 0, %s89
      %s111 = sphi 0, %s113
      %s114 = sphi 0, %s111
      %s115 = sphi 0, %s114
      %s131 = sphi 0, %s115
      %s135 = sphi 0, %s135
      %s137 = sphi 0, %s135
      %s138 = sphi 0, %s137
      %s152 = sphi 0, %s138
      %s156 = sphi 0, %s156
      %s158 = sphi 0, %s156
      %s159 = sphi 0, %s158
      %s173 = sphi 0, %s159
      %s177 = sphi 0, %s177
      %s179 = sphi 0, %s177
      %s180 = sphi 0, %s179
      %s194 = sphi 0, %s180
      %s198 = sphi 0, %s198
      %s200 = sphi 0, %s198
      %s201 = sphi 0, %s200
      %s215 = sphi 0, %s201
      %s219 = sphi 0, %s219
      %s221 = sphi 0, %s219
      %s222 = sphi 0, %s221
      %s236 = sphi 0, %s222
      %s240 = sphi 0, %s240
      %s242 = sphi 0, %s240
      %s243 = sphi 0, %s242
      %s257 = sphi 0, %s243
      %s261 = sphi 0, %s261
      %s263 = sphi 0, %s261
      %s264 = sphi 0, %s263
      %s278 = sphi 0, %s264
      %s282 = sphi 0, %s282
      %s284 = sphi 0, %s282
      %s285 = sphi 0, %s284
      %s299 = sphi 0, %s285
      %s303 = sphi 0, %s303
      %s305 = sphi 0, %s303
      %s306 = sphi 0, %s305
      %s320 = sphi 0, %s306
      %s324 = sphi 0, %s324
      %s326 = sphi 0, %s324
      %s327 = sphi 0, %s326
      %s341 = sphi 0, %s327
      %s349 = sphi 0, %s351
      %s352 = sphi 0, %s349
      %s353 = sphi 0, %s352
      %s369 = sphi 0, %s353
      %s377 = sphi 0, %s379
      %s380 = sphi 0, %s377
      %s381 = sphi 0, %s380
      %s397 = sphi 0, %s381
    $region4: #{tpu_custom_call.1} parent=1 // loop_header_branch
      %38 = sbr.rel (%p36) target = $region8
    $region5: #{tpu_custom_call.1} parent=1 // loop_body
      %s40 = ssub.s32 %s35, 1
      %s41 = ssub.s32 %s35, 2
      %s48 = sadd.s32 1, %s43
      %p49 = scmp.ge.s32.totalorder %s48, 1
      %s50 = scalar_select %p49, 0, %s48
      %s51 = sadd.s32 1, %s42
      %s52 = scalar_select %p49, %s51, %s42
      %p53 = scmp.ge.s32.totalorder %s52, 2
      %s54 = scalar_select %p53, 0, %s52
      %s55 = ssub.s32 %s42, %s54
      %s56 = ssub.s32 %s43, %s50
      %s57 = sor.u32 %s55, %s56
      %p58 = scmp.eq.s32.totalorder %s57, 0
      %s60 = sadd.s32 %s59, 1
      %s61 = scalar_select %p58, %s59, %s60
      %p64 = pneg %p58
      %p65 = scmp.eq.s32.totalorder %s35, 1
      %p66 = por %p64, %p65
      %p67 = scmp.ne.s32.totalorder %s59, %s62
      %p68 = scmp.eq.s32.totalorder %s35, 0
      %p69 = por %p67, %p68
      %p70 = scmp.ne.s32.totalorder %s59, %s62
      %p71 = scmp.eq.s32.totalorder %s40, 1
      %p72 = por %p70, %p71
      %p73 = scmp.ne.s32.totalorder %s62, %s63
      %p74 = scmp.eq.s32.totalorder %s40, 0
      %p75 = por %p73, %p74
      %p76 = scmp.ne.s32.totalorder %s62, %s63
      %p77 = scmp.eq.s32.totalorder %s41, 1
      %p78 = por %p76, %p77
      %p80 = scmp.ne.s32.totalorder %s63, %s79
      %p81 = scmp.eq.s32.totalorder %s41, 0
      %p82 = por %p80, %p81
      %s83 = ssub.s32 %s42, %s54
      %p84 = scmp.eq.s32.totalorder %s83, 0
      %s86 = sadd.s32 %s85, 1
      %s87 = scalar_select %p84, %s85, %s86
      %p90 = pneg %p84
      %p91 = scmp.eq.s32.totalorder %s35, 1
      %p92 = por %p90, %p91
      %p93 = scmp.ne.s32.totalorder %s85, %s88
      %p94 = scmp.eq.s32.totalorder %s35, 0
      %p95 = por %p93, %p94
      %p96 = scmp.ne.s32.totalorder %s85, %s88
      %p97 = scmp.eq.s32.totalorder %s40, 1
      %p98 = por %p96, %p97
      %p99 = scmp.ne.s32.totalorder %s88, %s89
      %p100 = scmp.eq.s32.totalorder %s40, 0
      %p101 = por %p99, %p100
      %p102 = scmp.ne.s32.totalorder %s88, %s89
      %p103 = scmp.eq.s32.totalorder %s41, 1
      %p104 = por %p102, %p103
      %p106 = scmp.ne.s32.totalorder %s89, %s105
      %p107 = scmp.eq.s32.totalorder %s41, 0
      %p108 = por %p106, %p107
      %s109 = ssub.s32 %s42, %s54
      %p110 = scmp.eq.s32.totalorder %s109, 0
      %s112 = sadd.s32 %s111, 1
      %s113 = scalar_select %p110, %s111, %s112
      %p116 = pneg %p110
      %p117 = scmp.eq.s32.totalorder %s35, 1
      %p118 = por %p116, %p117
      %p119 = scmp.ne.s32.totalorder %s111, %s114
      %p120 = scmp.eq.s32.totalorder %s35, 0
      %p121 = por %p119, %p120
      %p122 = scmp.ne.s32.totalorder %s111, %s114
      %p123 = scmp.eq.s32.totalorder %s40, 1
      %p124 = por %p122, %p123
      %p125 = scmp.ne.s32.totalorder %s114, %s115
      %p126 = scmp.eq.s32.totalorder %s40, 0
      %p127 = por %p125, %p126
      %p128 = scmp.ne.s32.totalorder %s114, %s115
      %p129 = scmp.eq.s32.totalorder %s41, 1
      %p130 = por %p128, %p129
      %p132 = scmp.ne.s32.totalorder %s115, %s131
      %p133 = scmp.eq.s32.totalorder %s41, 0
      %p134 = por %p132, %p133
      %s136 = sadd.s32 %s135, 1
      %p139 = scmp.eq.s32.totalorder %s35, 1
      %p140 = scmp.ne.s32.totalorder %s135, %s137
      %p141 = scmp.eq.s32.totalorder %s35, 0
      %p142 = por %p140, %p141
      %p143 = scmp.ne.s32.totalorder %s135, %s137
      %p144 = scmp.eq.s32.totalorder %s40, 1
      %p145 = por %p143, %p144
      %p146 = scmp.ne.s32.totalorder %s137, %s138
      %p147 = scmp.eq.s32.totalorder %s40, 0
      %p148 = por %p146, %p147
      %p149 = scmp.ne.s32.totalorder %s137, %s138
      %p150 = scmp.eq.s32.totalorder %s41, 1
      %p151 = por %p149, %p150
      %p153 = scmp.ne.s32.totalorder %s138, %s152
      %p154 = scmp.eq.s32.totalorder %s41, 0
      %p155 = por %p153, %p154
      %s157 = sadd.s32 %s156, 1
      %p160 = scmp.eq.s32.totalorder %s35, 1
      %p161 = scmp.ne.s32.totalorder %s156, %s158
      %p162 = scmp.eq.s32.totalorder %s35, 0
      %p163 = por %p161, %p162
      %p164 = scmp.ne.s32.totalorder %s156, %s158
      %p165 = scmp.eq.s32.totalorder %s40, 1
      %p166 = por %p164, %p165
      %p167 = scmp.ne.s32.totalorder %s158, %s159
      %p168 = scmp.eq.s32.totalorder %s40, 0
      %p169 = por %p167, %p168
      %p170 = scmp.ne.s32.totalorder %s158, %s159
      %p171 = scmp.eq.s32.totalorder %s41, 1
      %p172 = por %p170, %p171
      %p174 = scmp.ne.s32.totalorder %s159, %s173
      %p175 = scmp.eq.s32.totalorder %s41, 0
      %p176 = por %p174, %p175
      %s178 = sadd.s32 %s177, 1
      %p181 = scmp.eq.s32.totalorder %s35, 1
      %p182 = scmp.ne.s32.totalorder %s177, %s179
      %p183 = scmp.eq.s32.totalorder %s35, 0
      %p184 = por %p182, %p183
      %p185 = scmp.ne.s32.totalorder %s177, %s179
      %p186 = scmp.eq.s32.totalorder %s40, 1
      %p187 = por %p185, %p186
      %p188 = scmp.ne.s32.totalorder %s179, %s180
      %p189 = scmp.eq.s32.totalorder %s40, 0
      %p190 = por %p188, %p189
      %p191 = scmp.ne.s32.totalorder %s179, %s180
      %p192 = scmp.eq.s32.totalorder %s41, 1
      %p193 = por %p191, %p192
      %p195 = scmp.ne.s32.totalorder %s180, %s194
      %p196 = scmp.eq.s32.totalorder %s41, 0
      %p197 = por %p195, %p196
      %s199 = sadd.s32 %s198, 1
      %p202 = scmp.eq.s32.totalorder %s35, 1
      %p203 = scmp.ne.s32.totalorder %s198, %s200
      %p204 = scmp.eq.s32.totalorder %s35, 0
      %p205 = por %p203, %p204
      %p206 = scmp.ne.s32.totalorder %s198, %s200
      %p207 = scmp.eq.s32.totalorder %s40, 1
      %p208 = por %p206, %p207
      %p209 = scmp.ne.s32.totalorder %s200, %s201
      %p210 = scmp.eq.s32.totalorder %s40, 0
      %p211 = por %p209, %p210
      %p212 = scmp.ne.s32.totalorder %s200, %s201
      %p213 = scmp.eq.s32.totalorder %s41, 1
      %p214 = por %p212, %p213
      %p216 = scmp.ne.s32.totalorder %s201, %s215
      %p217 = scmp.eq.s32.totalorder %s41, 0
      %p218 = por %p216, %p217
      %s220 = sadd.s32 %s219, 1
      %p223 = scmp.eq.s32.totalorder %s35, 1
      %p224 = scmp.ne.s32.totalorder %s219, %s221
      %p225 = scmp.eq.s32.totalorder %s35, 0
      %p226 = por %p224, %p225
      %p227 = scmp.ne.s32.totalorder %s219, %s221
      %p228 = scmp.eq.s32.totalorder %s40, 1
      %p229 = por %p227, %p228
      %p230 = scmp.ne.s32.totalorder %s221, %s222
      %p231 = scmp.eq.s32.totalorder %s40, 0
      %p232 = por %p230, %p231
      %p233 = scmp.ne.s32.totalorder %s221, %s222
      %p234 = scmp.eq.s32.totalorder %s41, 1
      %p235 = por %p233, %p234
      %p237 = scmp.ne.s32.totalorder %s222, %s236
      %p238 = scmp.eq.s32.totalorder %s41, 0
      %p239 = por %p237, %p238
      %s241 = sadd.s32 %s240, 1
      %p244 = scmp.eq.s32.totalorder %s35, 1
      %p245 = scmp.ne.s32.totalorder %s240, %s242
      %p246 = scmp.eq.s32.totalorder %s35, 0
      %p247 = por %p245, %p246
      %p248 = scmp.ne.s32.totalorder %s240, %s242
      %p249 = scmp.eq.s32.totalorder %s40, 1
      %p250 = por %p248, %p249
      %p251 = scmp.ne.s32.totalorder %s242, %s243
      %p252 = scmp.eq.s32.totalorder %s40, 0
      %p253 = por %p251, %p252
      %p254 = scmp.ne.s32.totalorder %s242, %s243
      %p255 = scmp.eq.s32.totalorder %s41, 1
      %p256 = por %p254, %p255
      %p258 = scmp.ne.s32.totalorder %s243, %s257
      %p259 = scmp.eq.s32.totalorder %s41, 0
      %p260 = por %p258, %p259
      %s262 = sadd.s32 %s261, 1
      %p265 = scmp.eq.s32.totalorder %s35, 1
      %p266 = scmp.ne.s32.totalorder %s261, %s263
      %p267 = scmp.eq.s32.totalorder %s35, 0
      %p268 = por %p266, %p267
      %p269 = scmp.ne.s32.totalorder %s261, %s263
      %p270 = scmp.eq.s32.totalorder %s40, 1
      %p271 = por %p269, %p270
      %p272 = scmp.ne.s32.totalorder %s263, %s264
      %p273 = scmp.eq.s32.totalorder %s40, 0
      %p274 = por %p272, %p273
      %p275 = scmp.ne.s32.totalorder %s263, %s264
      %p276 = scmp.eq.s32.totalorder %s41, 1
      %p277 = por %p275, %p276
      %p279 = scmp.ne.s32.totalorder %s264, %s278
      %p280 = scmp.eq.s32.totalorder %s41, 0
      %p281 = por %p279, %p280
      %s283 = sadd.s32 %s282, 1
      %p286 = scmp.eq.s32.totalorder %s35, 1
      %p287 = scmp.ne.s32.totalorder %s282, %s284
      %p288 = scmp.eq.s32.totalorder %s35, 0
      %p289 = por %p287, %p288
      %p290 = scmp.ne.s32.totalorder %s282, %s284
      %p291 = scmp.eq.s32.totalorder %s40, 1
      %p292 = por %p290, %p291
      %p293 = scmp.ne.s32.totalorder %s284, %s285
      %p294 = scmp.eq.s32.totalorder %s40, 0
      %p295 = por %p293, %p294
      %p296 = scmp.ne.s32.totalorder %s284, %s285
      %p297 = scmp.eq.s32.totalorder %s41, 1
      %p298 = por %p296, %p297
      %p300 = scmp.ne.s32.totalorder %s285, %s299
      %p301 = scmp.eq.s32.totalorder %s41, 0
      %p302 = por %p300, %p301
      %s304 = sadd.s32 %s303, 1
      %p307 = scmp.eq.s32.totalorder %s35, 1
      %p308 = scmp.ne.s32.totalorder %s303, %s305
      %p309 = scmp.eq.s32.totalorder %s35, 0
      %p310 = por %p308, %p309
      %p311 = scmp.ne.s32.totalorder %s303, %s305
      %p312 = scmp.eq.s32.totalorder %s40, 1
      %p313 = por %p311, %p312
      %p314 = scmp.ne.s32.totalorder %s305, %s306
      %p315 = scmp.eq.s32.totalorder %s40, 0
      %p316 = por %p314, %p315
      %p317 = scmp.ne.s32.totalorder %s305, %s306
      %p318 = scmp.eq.s32.totalorder %s41, 1
      %p319 = por %p317, %p318
      %p321 = scmp.ne.s32.totalorder %s306, %s320
      %p322 = scmp.eq.s32.totalorder %s41, 0
      %p323 = por %p321, %p322
      %s325 = sadd.s32 %s324, 1
      %p328 = scmp.eq.s32.totalorder %s35, 1
      %p329 = scmp.ne.s32.totalorder %s324, %s326
      %p330 = scmp.eq.s32.totalorder %s35, 0
      %p331 = por %p329, %p330
      %p332 = scmp.ne.s32.totalorder %s324, %s326
      %p333 = scmp.eq.s32.totalorder %s40, 1
      %p334 = por %p332, %p333
      %p335 = scmp.ne.s32.totalorder %s326, %s327
      %p336 = scmp.eq.s32.totalorder %s40, 0
      %p337 = por %p335, %p336
      %p338 = scmp.ne.s32.totalorder %s326, %s327
      %p339 = scmp.eq.s32.totalorder %s41, 1
      %p340 = por %p338, %p339
      %p342 = scmp.ne.s32.totalorder %s327, %s341
      %p343 = scmp.eq.s32.totalorder %s41, 0
      %p344 = por %p342, %p343
      %s345 = ssub.s32 %s42, %s54
      %s346 = ssub.s32 %s43, %s50
      %s347 = sor.u32 %s345, %s346
      %p348 = scmp.eq.s32.totalorder %s347, 0
      %s350 = sadd.s32 %s349, 1
      %s351 = scalar_select %p348, %s349, %s350
      %p354 = pneg %p348
      %p355 = scmp.eq.s32.totalorder %s35, 1
      %p356 = por %p354, %p355
      %p357 = scmp.ne.s32.totalorder %s349, %s352
      %p358 = scmp.eq.s32.totalorder %s35, 0
      %p359 = por %p357, %p358
      %p360 = scmp.ne.s32.totalorder %s349, %s352
      %p361 = scmp.eq.s32.totalorder %s40, 1
      %p362 = por %p360, %p361
      %p363 = scmp.ne.s32.totalorder %s352, %s353
      %p364 = scmp.eq.s32.totalorder %s40, 0
      %p365 = por %p363, %p364
      %p366 = scmp.ne.s32.totalorder %s352, %s353
      %p367 = scmp.eq.s32.totalorder %s41, 1
      %p368 = por %p366, %p367
      %p370 = scmp.ne.s32.totalorder %s353, %s369
      %p371 = scmp.eq.s32.totalorder %s41, 0
      %p372 = por %p370, %p371
      %s373 = ssub.s32 %s42, %s54
      %s374 = ssub.s32 %s43, %s50
      %s375 = sor.u32 %s373, %s374
      %p376 = scmp.eq.s32.totalorder %s375, 0
      %s378 = sadd.s32 %s377, 1
      %s379 = scalar_select %p376, %s377, %s378
      %p382 = pneg %p376
      %p383 = scmp.eq.s32.totalorder %s35, 1
      %p384 = por %p382, %p383
      %p385 = scmp.ne.s32.totalorder %s377, %s380
      %p386 = scmp.eq.s32.totalorder %s35, 0
      %p387 = por %p385, %p386
      %p388 = scmp.ne.s32.totalorder %s377, %s380
      %p389 = scmp.eq.s32.totalorder %s40, 1
      %p390 = por %p388, %p389
      %p391 = scmp.ne.s32.totalorder %s380, %s381
      %p392 = scmp.eq.s32.totalorder %s40, 0
      %p393 = por %p391, %p392
      %p394 = scmp.ne.s32.totalorder %s380, %s381
      %p395 = scmp.eq.s32.totalorder %s41, 1
      %p396 = por %p394, %p395
      %p398 = scmp.ne.s32.totalorder %s381, %s397
      %p399 = scmp.eq.s32.totalorder %s41, 0
      %p400 = por %p398, %p399
      %p401 = scmp.le.s32.totalorder 1, %s35
      %p402 = scmp.lt.s32.totalorder %s35, 3
      %p403 = pnand %p401, %p402
      %p404 = pneg %p403
      // Predicated region
      $region9: #{tpu_custom_call.1} parent=5 // pred_check
        _
      $region10: #{tpu_custom_call.1} parent=5 // pred_check_branch
        %406 = sbr.rel (%p403) target = $region12
      $region11: #{tpu_custom_call.1} parent=5 // pred_region
        %s407 = ssub.s32 %s35, 1
        // Predicated region
        $region13: #{tpu_custom_call.1} parent=11 // pred_check
          %p408 = pneg %p148
        $region14: #{tpu_custom_call.1} parent=11 // pred_check_branch
          %410 = sbr.rel (%p408) target = $region16
        $region15: #{tpu_custom_call.1} parent=11 // pred_region
          %s412 = ssub.s32 512, 512
          %413 = vsyncadd [#allocation9], %s412
          %s414 = sshll.u32 [#allocation8], 4
          %s415 = int_to_ptr.vmem [resolvable:$true] %s414
          %420 = dma.hbm_to_vmem [thread:$0]  %s3, 512, %s415, [#allocation9], 128, 128, 8
        $region16: #{tpu_custom_call.1} parent=11 // pred_fallthru
          _
        // Predicated region
        $region17: #{tpu_custom_call.1} parent=11 // pred_check
          %p421 = pneg %p169
        $region18: #{tpu_custom_call.1} parent=11 // pred_check_branch
          %423 = sbr.rel (%p421) target = $region20
        $region19: #{tpu_custom_call.1} parent=11 // pred_region
          _
        $region20: #{tpu_custom_call.1} parent=11 // pred_fallthru
          _
        // Predicated region
        $region21: #{tpu_custom_call.1} parent=11 // pred_check
          %p424 = pneg %p190
        $region22: #{tpu_custom_call.1} parent=11 // pred_check_branch
          %426 = sbr.rel (%p424) target = $region24
        $region23: #{tpu_custom_call.1} parent=11 // pred_region
          %s428 = ssub.s32 512, 512
          %429 = vsyncadd [#allocation9], %s428
          %s430 = sshll.u32 [#allocation10], 4
          %s431 = int_to_ptr.vmem [resolvable:$true] %s430
          %436 = dma.hbm_to_vmem [thread:$0]  %s5, 512, %s431, [#allocation9], 128, 128, 8
        $region24: #{tpu_custom_call.1} parent=11 // pred_fallthru
          _
        // Predicated region
        $region25: #{tpu_custom_call.1} parent=11 // pred_check
          %p437 = pneg %p211
        $region26: #{tpu_custom_call.1} parent=11 // pred_check_branch
          %439 = sbr.rel (%p437) target = $region28
        $region27: #{tpu_custom_call.1} parent=11 // pred_region
          _
        $region28: #{tpu_custom_call.1} parent=11 // pred_fallthru
          _
        // Predicated region
        $region29: #{tpu_custom_call.1} parent=11 // pred_check
          %p440 = pneg %p232
        $region30: #{tpu_custom_call.1} parent=11 // pred_check_branch
          %442 = sbr.rel (%p440) target = $region32
        $region31: #{tpu_custom_call.1} parent=11 // pred_region
          %s444 = ssub.s32 512, 512
          %445 = vsyncadd [#allocation12], %s444
          %s446 = sshll.u32 [#allocation11], 4
          %s447 = int_to_ptr.vmem [resolvable:$true] %s446
          %452 = dma.hbm_to_vmem [thread:$0]  %s7, 512, %s447, [#allocation12], 128, 128, 8
        $region32: #{tpu_custom_call.1} parent=11 // pred_fallthru
          _
        // Predicated region
        $region33: #{tpu_custom_call.1} parent=11 // pred_check
          %p453 = pneg %p253
        $region34: #{tpu_custom_call.1} parent=11 // pred_check_branch
          %455 = sbr.rel (%p453) target = $region36
        $region35: #{tpu_custom_call.1} parent=11 // pred_region
          %s457 = ssub.s32 16, 16
          %458 = vsyncadd [#allocation12], %s457
          %s460 = sshll.u32 [#allocation13], 4
          %s461 = int_to_ptr.vmem [resolvable:$true] %s460
          %463 = dma.hbm_to_vmem [thread:$0]  %s8, 16, %s461, [#allocation12]
        $region36: #{tpu_custom_call.1} parent=11 // pred_fallthru
          _
        // Predicated region
        $region37: #{tpu_custom_call.1} parent=11 // pred_check
          %p464 = pneg %p274
        $region38: #{tpu_custom_call.1} parent=11 // pred_check_branch
          %466 = sbr.rel (%p464) target = $region40
        $region39: #{tpu_custom_call.1} parent=11 // pred_region
          _
        $region40: #{tpu_custom_call.1} parent=11 // pred_fallthru
          _
        // Predicated region
        $region41: #{tpu_custom_call.1} parent=11 // pred_check
          %p467 = pneg %p295
        $region42: #{tpu_custom_call.1} parent=11 // pred_check_branch
          %469 = sbr.rel (%p467) target = $region44
        $region43: #{tpu_custom_call.1} parent=11 // pred_region
          _
        $region44: #{tpu_custom_call.1} parent=11 // pred_fallthru
          _
        // Predicated region
        $region45: #{tpu_custom_call.1} parent=11 // pred_check
          %p470 = pneg %p316
        $region46: #{tpu_custom_call.1} parent=11 // pred_check_branch
          %472 = sbr.rel (%p470) target = $region48
        $region47: #{tpu_custom_call.1} parent=11 // pred_region
          _
        $region48: #{tpu_custom_call.1} parent=11 // pred_fallthru
          _
        // Predicated region
        $region49: #{tpu_custom_call.1} parent=11 // pred_check
          %p473 = pneg %p337
        $region50: #{tpu_custom_call.1} parent=11 // pred_check_branch
          %475 = sbr.rel (%p473) target = $region52
        $region51: #{tpu_custom_call.1} parent=11 // pred_region
          _
        $region52: #{tpu_custom_call.1} parent=11 // pred_fallthru
          _
      $region12: #{tpu_custom_call.1} parent=5 // pred_fallthru
        _
      %p476 = scmp.lt.s32.totalorder %s35, 2
      // Predicated region
      $region53: #{tpu_custom_call.1} parent=5 // pred_check
        %p477 = pneg %p476
      $region54: #{tpu_custom_call.1} parent=5 // pred_check_branch
        %479 = sbr.rel (%p477) target = $region56
      $region55: #{tpu_custom_call.1} parent=5 // pred_region
        // Predicated region
        $region57: #{tpu_custom_call.1} parent=55 // pred_check
          %p480 = pneg %p69
        $region58: #{tpu_custom_call.1} parent=55 // pred_check_branch
          %482 = sbr.rel (%p480) target = $region60
        $region59: #{tpu_custom_call.1} parent=55 // pred_region
          %s483 = sand.u32 %s59, 1
          %s484 = scalar_lea.sflag [#allocation3], %s483
          %s485 = sand.u32 %s59, 1
          %s486 = smul.addr %s485, 16
          %s487 = scalar_lea.vmem [#allocation2], %s486
          %s488 = smul.u32 2, %s43
          %s490 = ssub.s32 256, 256
          %491 = vsyncadd %s484, %s490
          %s492 = smul.addr %s42, 2
          %s493 = sadd.s32 %s488, %s492
          %s494 = smul.addr %s493, 128
          %s495 = scalar_lea.hbm %s0, %s494
          %s496 = sshll.u32 %s487, 4
          %s497 = int_to_ptr.vmem [resolvable:$true] %s496
          %502 = dma.hbm_to_vmem [thread:$0]  %s495, 256, %s497, %s484, 128, 128, 8
        $region60: #{tpu_custom_call.1} parent=55 // pred_fallthru
          _
        // Predicated region
        $region61: #{tpu_custom_call.1} parent=55 // pred_check
          %p503 = pneg %p95
        $region62: #{tpu_custom_call.1} parent=55 // pred_check_branch
          %505 = sbr.rel (%p503) target = $region64
        $region63: #{tpu_custom_call.1} parent=55 // pred_region
          %s506 = sand.u32 %s35, 1
          %s507 = scalar_lea.sflag [#allocation6], %s506
          %s508 = sand.u32 %s85, 1
          %s509 = smul.addr %s508, 16
          %s510 = scalar_lea.vmem [#allocation5], %s509
          %s512 = ssub.s32 256, 256
          %513 = vsyncadd %s507, %s512
          %s514 = smul.addr %s42, 2
          %s515 = smul.addr %s514, 128
          %s516 = scalar_lea.hbm %s1, %s515
          %s517 = sshll.u32 %s510, 4
          %s518 = int_to_ptr.vmem [resolvable:$true] %s517
          %523 = dma.hbm_to_vmem [thread:$0]  %s516, 256, %s518, %s507, 128, 128, 8
        $region64: #{tpu_custom_call.1} parent=55 // pred_fallthru
          _
        // Predicated region
        $region65: #{tpu_custom_call.1} parent=55 // pred_check
          %p524 = pneg %p121
        $region66: #{tpu_custom_call.1} parent=55 // pred_check_branch
          %526 = sbr.rel (%p524) target = $region68
        $region67: #{tpu_custom_call.1} parent=55 // pred_region
          %s527 = sand.u32 %s35, 1
          %s528 = scalar_lea.sflag [#allocation6], %s527
          %s529 = sand.u32 %s111, 1
          %s530 = smul.addr %s529, 16
          %s531 = scalar_lea.vmem [#allocation7], %s530
          %s533 = ssub.s32 256, 256
          %534 = vsyncadd %s528, %s533
          %s535 = smul.addr %s42, 2
          %s536 = smul.addr %s535, 128
          %s537 = scalar_lea.hbm %s2, %s536
          %s538 = sshll.u32 %s531, 4
          %s539 = int_to_ptr.vmem [resolvable:$true] %s538
          %544 = dma.hbm_to_vmem [thread:$0]  %s537, 256, %s539, %s528, 128, 128, 8
        $region68: #{tpu_custom_call.1} parent=55 // pred_fallthru
          _
      $region56: #{tpu_custom_call.1} parent=5 // pred_fallthru
        _
      %p545 = scmp.le.s32.totalorder 1, %s35
      %p546 = scmp.lt.s32.totalorder %s35, 3
      %p547 = pnand %p545, %p546
      %p548 = pneg %p547
      // Predicated region
      $region69: #{tpu_custom_call.1} parent=5 // pred_check
        _
      $region70: #{tpu_custom_call.1} parent=5 // pred_check_branch
        %550 = sbr.rel (%p547) target = $region72
      $region71: #{tpu_custom_call.1} parent=5 // pred_region
        %s551 = ssub.s32 %s35, 1
        %s552 = sand.u32 %s62, 1
        %s553 = scalar_lea.sflag [#allocation3], %s552
        %s554 = sand.u32 %s62, 1
        %s555 = smul.addr %s554, 16
        %s556 = scalar_lea.vmem [#allocation2], %s555
        // Predicated region
        $region73: #{tpu_custom_call.1} parent=71 // pred_check
          %p557 = pneg %p75
        $region74: #{tpu_custom_call.1} parent=71 // pred_check_branch
          %559 = sbr.rel (%p557) target = $region76
        $region75: #{tpu_custom_call.1} parent=71 // pred_region
          %560 = dma.done %s553, 256
        $region76: #{tpu_custom_call.1} parent=71 // pred_fallthru
          _
        %s561 = sand.u32 %s40, 1
        %s562 = scalar_lea.sflag [#allocation6], %s561
        %s563 = sand.u32 %s88, 1
        %s564 = smul.addr %s563, 16
        %s565 = scalar_lea.vmem [#allocation5], %s564
        // Predicated region
        $region77: #{tpu_custom_call.1} parent=71 // pred_check
          %p566 = pneg %p101
        $region78: #{tpu_custom_call.1} parent=71 // pred_check_branch
          %568 = sbr.rel (%p566) target = $region80
        $region79: #{tpu_custom_call.1} parent=71 // pred_region
          %569 = dma.done %s562, 256
        $region80: #{tpu_custom_call.1} parent=71 // pred_fallthru
          _
        %s570 = sand.u32 %s40, 1
        %s571 = scalar_lea.sflag [#allocation6], %s570
        %s572 = sand.u32 %s114, 1
        %s573 = smul.addr %s572, 16
        %s574 = scalar_lea.vmem [#allocation7], %s573
        // Predicated region
        $region81: #{tpu_custom_call.1} parent=71 // pred_check
          %p575 = pneg %p127
        $region82: #{tpu_custom_call.1} parent=71 // pred_check_branch
          %577 = sbr.rel (%p575) target = $region84
        $region83: #{tpu_custom_call.1} parent=71 // pred_region
          %578 = dma.done %s571, 256
        $region84: #{tpu_custom_call.1} parent=71 // pred_fallthru
          _
        // Predicated region
        $region85: #{tpu_custom_call.1} parent=71 // pred_check
          %p579 = pneg %p148
        $region86: #{tpu_custom_call.1} parent=71 // pred_check_branch
          %581 = sbr.rel (%p579) target = $region88
        $region87: #{tpu_custom_call.1} parent=71 // pred_region
          %582 = dma.done [#allocation9], 512
        $region88: #{tpu_custom_call.1} parent=71 // pred_fallthru
          _
        // Predicated region
        $region89: #{tpu_custom_call.1} parent=71 // pred_check
          %p583 = pneg %p190
        $region90: #{tpu_custom_call.1} parent=71 // pred_check_branch
          %585 = sbr.rel (%p583) target = $region92
        $region91: #{tpu_custom_call.1} parent=71 // pred_region
          %586 = dma.done [#allocation9], 512
        $region92: #{tpu_custom_call.1} parent=71 // pred_fallthru
          _
        // Predicated region
        $region93: #{tpu_custom_call.1} parent=71 // pred_check
          %p587 = pneg %p232
        $region94: #{tpu_custom_call.1} parent=71 // pred_check_branch
          %589 = sbr.rel (%p587) target = $region96
        $region95: #{tpu_custom_call.1} parent=71 // pred_region
          %590 = dma.done [#allocation12], 512
        $region96: #{tpu_custom_call.1} parent=71 // pred_fallthru
          _
        // Predicated region
        $region97: #{tpu_custom_call.1} parent=71 // pred_check
          %p591 = pneg %p253
        $region98: #{tpu_custom_call.1} parent=71 // pred_check_branch
          %593 = sbr.rel (%p591) target = $region100
        $region99: #{tpu_custom_call.1} parent=71 // pred_region
          %594 = dma.done [#allocation12], 16
        $region100: #{tpu_custom_call.1} parent=71 // pred_fallthru
          _
        %s595 = sand.u32 %s62, 1
        %s596 = scalar_lea.sflag [#allocation3], %s595
        %s597 = sand.u32 %s62, 1
        %s598 = smul.addr %s597, 16
        %s599 = scalar_lea.vmem [#allocation2], %s598
        %p600 = pneg %p75
        %p601 = pneg %p72
        %s602 = sand.u32 %s40, 1
        %s603 = scalar_lea.sflag [#allocation6], %s602
        %s604 = sand.u32 %s88, 1
        %s605 = smul.addr %s604, 16
        %s606 = scalar_lea.vmem [#allocation5], %s605
        %p607 = pneg %p101
        %p608 = pneg %p98
        %s609 = sand.u32 %s40, 1
        %s610 = scalar_lea.sflag [#allocation6], %s609
        %s611 = sand.u32 %s114, 1
        %s612 = smul.addr %s611, 16
        %s613 = scalar_lea.vmem [#allocation7], %s612
        %p614 = pneg %p127
        %p615 = pneg %p124
        %p616 = pneg %p148
        %p617 = pneg %p145
        %p618 = pneg %p169
        %p619 = pneg %p166
        %p620 = pneg %p190
        %p621 = pneg %p187
        %p622 = pneg %p211
        %p623 = pneg %p208
        %p624 = pneg %p232
        %p625 = pneg %p229
        %p626 = pneg %p253
        %p627 = pneg %p250
        %p628 = pneg %p274
        %p629 = pneg %p271
        %p630 = pneg %p295
        %p631 = pneg %p292
        %p632 = pneg %p316
        %p633 = pneg %p313
        %p634 = pneg %p337
        %p635 = pneg %p334
        %p636 = pneg %p365
        %p637 = pneg %p362
        %s638 = sand.u32 %s352, 1
        %s639 = scalar_lea.sflag [#allocation4], %s638
        %s640 = sand.u32 %s352, 1
        %s641 = smul.addr %s640, 16
        %s642 = scalar_lea.vmem [#allocation14], %s641
        %p643 = pneg %p393
        %p644 = pneg %p390
        %s645 = sand.u32 %s380, 1
        %s646 = scalar_lea.sflag [#allocation16], %s645
        %s647 = sand.u32 %s380, 1
        %s648 = smul.addr %s647, 32
        %s649 = scalar_lea.vmem [#allocation15], %s648
        %s650 = smul.u32 2, %s45
        %s651 = smul.u32 2, %s45
        %s652 = smul.u32 2, %s45
        %v653 = vld [vmem:[%s556] sm:$0xff]
        %v654 = vld [vmem:[%s556 + $0x8] sm:$0xff]
        %v655 = vld [vmem:[%s565] sm:$0xff]
        %v656 = vld [vmem:[%s565 + $0x8] sm:$0xff]
        %v657 = vld [vmem:[%s574] sm:$0xff]
        %v658 = vld [vmem:[%s574 + $0x8] sm:$0xff]
        %v659 = vld [vmem:[#allocation8] sm:$0xff]
        %v660 = vld [vmem:[#allocation8 + $0x8] sm:$0xff]
        %v661 = vld [vmem:[#allocation8 + $0x10] sm:$0xff]
        %v662 = vld [vmem:[#allocation8 + $0x18] sm:$0xff]
        %v663 = vld [vmem:[%s4] sm:$0x1]
        %v665 = vlaneseq
        %v666 = vshrl.u32 %v665, 7
        %v667 = vsub.s32 0, %v666
        %v668 = vrot.slane %v663, %v667
        %vm670 = vcmask 261120
        %v672 = vsel %vm670, %v653, 0
        %v675 = vsel %vm670, %v654, 0
        %677 = vmatprep.subr.mxu0 0.0
        %v678 = vand.u32 %v659, 4294901760
        %679 = vmatpush1.msra.mxu0 %v678
        %680 = vmatprep.subr.mxu0 0.0
        %v681 = vand.u32 %v660, 4294901760
        %682 = vmatpush1.msra.mxu0 %v681
        %683 = vmatprep.subr.mxu0 0.0
        %v684 = vand.u32 %v661, 4294901760
        %685 = vmatpush1.msra.mxu0 %v684
        %686 = vmatprep.subr.mxu0 0.0
        %v687 = vand.u32 %v662, 4294901760
        %688 = vmatpush1.msra.mxu0 %v687
        %689 = vmatprep.subr.mxu0 0.0
        %690 = vmatpush1.msra.mxu0 0.0
        %691 = vmatprep.subr.mxu0 0.0
        %692 = vmatpush1.msra.mxu0 0.0
        %693 = vmatprep.subr.mxu0 0.0
        %694 = vmatpush1.msra.mxu0 0.0
        %695 = vmatprep.subr.mxu0 0.0
        %696 = vmatpush1.msra.mxu0 0.0
        %697 = vmatprep.subr.mxu0 0.0
        %698 = vmatpush1.msra.mxu0 0.0
        %699 = vmatprep.subr.mxu0 0.0
        %700 = vmatpush1.msra.mxu0 0.0
        %701 = vmatprep.subr.mxu0 0.0
        %702 = vmatpush1.msra.mxu0 0.0
        %703 = vmatprep.subr.mxu0 0.0
        %704 = vmatpush1.msra.mxu0 0.0
        %705 = vmatprep.subr.mxu0 0.0
        %706 = vmatpush1.msra.mxu0 0.0
        %707 = vmatprep.subr.mxu0 0.0
        %708 = vmatpush1.msra.mxu0 0.0
        %709 = vmatprep.subr.mxu0 0.0
        %710 = vmatpush1.msra.mxu0 0.0
        %711 = vmatprep.subr.mxu0 0.0
        %712 = vmatpush1.msra.mxu0 0.0
        %713 = vmatprep.subr.mxu0 0.0
        %714 = vmatpush1.msra.mxu0 0.0
        %715 = vmatprep.subr.mxu0 0.0
        %716 = vmatpush1.msra.mxu0 0.0
        %717 = vmatprep.subr.mxu0 0.0
        %718 = vmatpush1.msra.mxu0 0.0
        %719 = vmatprep.subr.mxu0 0.0
        %720 = vmatpush1.msra.mxu0 0.0
        %721 = vmatprep.subr.mxu0 0.0
        %722 = vmatpush1.msra.mxu0 0.0
        %723 = vmatprep.subr.mxu0 0.0
        %724 = vmatpush1.msra.mxu0 0.0
        %725 = vmatprep.subr.mxu0 0.0
        %726 = vmatpush1.msra.mxu0 0.0
        %727 = vmatprep.subr.mxu0 0.0
        %728 = vmatpush1.msra.mxu0 0.0
        %729 = vmatprep.subr.mxu0 0.0
        %730 = vmatpush1.msra.mxu0 0.0
        %731 = vmatprep.subr.mxu0 0.0
        %732 = vmatpush1.msra.mxu0 0.0
        %733 = vmatprep.subr.mxu0 0.0
        %734 = vmatpush1.msra.mxu0 0.0
        %735 = vmatprep.subr.mxu0 0.0
        %736 = vmatpush1.msra.mxu0 0.0
        %737 = vmatprep.subr.mxu0 0.0
        %738 = vmatpush1.msra.mxu0 0.0
        %739 = vmatprep.subr.mxu0 0.0
        %740 = vmatpush1.msra.mxu0 0.0
        %741 = vmatprep.subr.mxu0 0.0
        %742 = vmatpush1.msra.mxu0 0.0
        %743 = vmatprep.subr.mxu0 0.0
        %744 = vmatpush1.msra.mxu0 0.0
        %745 = vmatprep.mubr.f32.mxu0 0.0
        %v746 = vand.u32 %v672, 4294901760
        %v747 = vsub.f32 %v672, %v746
        %v748 = vand.u32 %v747, 4294901760
        %v749 = vsub.f32 %v747, %v748
        %v750 = vand.u32 %v749, 4294901760
        %751 = vmatmul.mubr.f32.gmra.mrb[0].mxu0 %v750
        %v752 = vpop.f32.mrb[0].mxu0
        %v753 = vadd.f32 %v668, %v752
        %v754 = vpop.f32.mrb[0].mxu0
        %755 = vmatprep.mubr.f32.mxu0 0.0
        %v756 = vand.u32 %v675, 4294901760
        %v757 = vsub.f32 %v675, %v756
        %v758 = vand.u32 %v757, 4294901760
        %v759 = vsub.f32 %v757, %v758
        %v760 = vand.u32 %v759, 4294901760
        %761 = vmatmul.mubr.f32.gmra.mrb[0].mxu0 %v760
        %v762 = vpop.f32.mrb[0].mxu0
        %v763 = vadd.f32 %v668, %v762
        %v764 = vpop.f32.mrb[0].mxu0
        %765 = vdwg.mxu0
        %766 = vmatprep.subr.mxu0 0.0
        %v767 = vand.u32 %v659, 4294901760
        %v768 = vsub.f32 %v659, %v767
        %v769 = vand.u32 %v768, 4294901760
        %v770 = vsub.f32 %v768, %v769
        %v771 = vand.u32 %v770, 4294901760
        %772 = vmatpush1.msra.mxu0 %v771
        %773 = vmatprep.subr.mxu0 0.0
        %v774 = vand.u32 %v660, 4294901760
        %v775 = vsub.f32 %v660, %v774
        %v776 = vand.u32 %v775, 4294901760
        %v777 = vsub.f32 %v775, %v776
        %v778 = vand.u32 %v777, 4294901760
        %779 = vmatpush1.msra.mxu0 %v778
        %780 = vmatprep.subr.mxu0 0.0
        %v781 = vand.u32 %v661, 4294901760
        %v782 = vsub.f32 %v661, %v781
        %v783 = vand.u32 %v782, 4294901760
        %v784 = vsub.f32 %v782, %v783
        %v785 = vand.u32 %v784, 4294901760
        %786 = vmatpush1.msra.mxu0 %v785
        %787 = vmatprep.subr.mxu0 0.0
        %v788 = vand.u32 %v662, 4294901760
        %v789 = vsub.f32 %v662, %v788
        %v790 = vand.u32 %v789, 4294901760
        %v791 = vsub.f32 %v789, %v790
        %v792 = vand.u32 %v791, 4294901760
        %793 = vmatpush1.msra.mxu0 %v792
        %794 = vmatprep.subr.mxu0 0.0
        %795 = vmatpush1.msra.mxu0 0.0
        %796 = vmatprep.subr.mxu0 0.0
        %797 = vmatpush1.msra.mxu0 0.0
        %798 = vmatprep.subr.mxu0 0.0
        %799 = vmatpush1.msra.mxu0 0.0
        %800 = vmatprep.subr.mxu0 0.0
        %801 = vmatpush1.msra.mxu0 0.0
        %802 = vmatprep.subr.mxu0 0.0
        %803 = vmatpush1.msra.mxu0 0.0
        %804 = vmatprep.subr.mxu0 0.0
        %805 = vmatpush1.msra.mxu0 0.0
        %806 = vmatprep.subr.mxu0 0.0
        %807 = vmatpush1.msra.mxu0 0.0
        %808 = vmatprep.subr.mxu0 0.0
        %809 = vmatpush1.msra.mxu0 0.0
        %810 = vmatprep.subr.mxu0 0.0
        %811 = vmatpush1.msra.mxu0 0.0
        %812 = vmatprep.subr.mxu0 0.0
        %813 = vmatpush1.msra.mxu0 0.0
        %814 = vmatprep.subr.mxu0 0.0
        %815 = vmatpush1.msra.mxu0 0.0
        %816 = vmatprep.subr.mxu0 0.0
        %817 = vmatpush1.msra.mxu0 0.0
        %818 = vmatprep.subr.mxu0 0.0
        %819 = vmatpush1.msra.mxu0 0.0
        %820 = vmatprep.subr.mxu0 0.0
        %821 = vmatpush1.msra.mxu0 0.0
        %822 = vmatprep.subr.mxu0 0.0
        %823 = vmatpush1.msra.mxu0 0.0
        %824 = vmatprep.subr.mxu0 0.0
        %825 = vmatpush1.msra.mxu0 0.0
        %826 = vmatprep.subr.mxu0 0.0
        %827 = vmatpush1.msra.mxu0 0.0
        %828 = vmatprep.subr.mxu0 0.0
        %829 = vmatpush1.msra.mxu0 0.0
        %830 = vmatprep.subr.mxu0 0.0
        %831 = vmatpush1.msra.mxu0 0.0
        %832 = vmatprep.subr.mxu0 0.0
        %833 = vmatpush1.msra.mxu0 0.0
        %834 = vmatprep.subr.mxu0 0.0
        %835 = vmatpush1.msra.mxu0 0.0
        %836 = vmatprep.subr.mxu0 0.0
        %837 = vmatpush1.msra.mxu0 0.0
        %838 = vmatprep.subr.mxu0 0.0
        %839 = vmatpush1.msra.mxu0 0.0
        %840 = vmatprep.subr.mxu0 0.0
        %841 = vmatpush1.msra.mxu0 0.0
        %842 = vmatprep.subr.mxu0 0.0
        %843 = vmatpush1.msra.mxu0 0.0
        %844 = vmatprep.subr.mxu0 0.0
        %845 = vmatpush1.msra.mxu0 0.0
        %846 = vmatprep.subr.mxu0 0.0
        %847 = vmatpush1.msra.mxu0 0.0
        %848 = vmatprep.subr.mxu0 0.0
        %849 = vmatpush1.msra.mxu0 0.0
        %850 = vmatprep.mubr.f32.mxu0 0.0
        %v851 = vand.u32 %v672, 4294901760
        %852 = vmatmul.mubr.f32.gmra.mrb[0].mxu0 %v851
        %v853 = vpop.f32.mrb[0].mxu0
        %v854 = vadd.f32 %v753, %v853
        %v855 = vpop.f32.mrb[0].mxu0
        %856 = vmatprep.mubr.f32.mxu0 0.0
        %v857 = vand.u32 %v675, 4294901760
        %858 = vmatmul.mubr.f32.gmra.mrb[0].mxu0 %v857
        %v859 = vpop.f32.mrb[0].mxu0
        %v860 = vadd.f32 %v763, %v859
        %v861 = vpop.f32.mrb[0].mxu0
        %862 = vdwg.mxu0
        %863 = vmatprep.subr.mxu0 0.0
        %v864 = vand.u32 %v659, 4294901760
        %v865 = vsub.f32 %v659, %v864
        %866 = vmatpush1.msra.mxu0 %v865
        %867 = vmatprep.subr.mxu0 0.0
        %v868 = vand.u32 %v660, 4294901760
        %v869 = vsub.f32 %v660, %v868
        %870 = vmatpush1.msra.mxu0 %v869
        %871 = vmatprep.subr.mxu0 0.0
        %v872 = vand.u32 %v661, 4294901760
        %v873 = vsub.f32 %v661, %v872
        %874 = vmatpush1.msra.mxu0 %v873
        %875 = vmatprep.subr.mxu0 0.0
        %v876 = vand.u32 %v662, 4294901760
        %v877 = vsub.f32 %v662, %v876
        %878 = vmatpush1.msra.mxu0 %v877
        %879 = vmatprep.subr.mxu0 0.0
        %880 = vmatpush1.msra.mxu0 0.0
        %881 = vmatprep.subr.mxu0 0.0
        %882 = vmatpush1.msra.mxu0 0.0
        %883 = vmatprep.subr.mxu0 0.0
        %884 = vmatpush1.msra.mxu0 0.0
        %885 = vmatprep.subr.mxu0 0.0
        %886 = vmatpush1.msra.mxu0 0.0
        %887 = vmatprep.subr.mxu0 0.0
        %888 = vmatpush1.msra.mxu0 0.0
        %889 = vmatprep.subr.mxu0 0.0
        %890 = vmatpush1.msra.mxu0 0.0
        %891 = vmatprep.subr.mxu0 0.0
        %892 = vmatpush1.msra.mxu0 0.0
        %893 = vmatprep.subr.mxu0 0.0
        %894 = vmatpush1.msra.mxu0 0.0
        %895 = vmatprep.subr.mxu0 0.0
        %896 = vmatpush1.msra.mxu0 0.0
        %897 = vmatprep.subr.mxu0 0.0
        %898 = vmatpush1.msra.mxu0 0.0
        %899 = vmatprep.subr.mxu0 0.0
        %900 = vmatpush1.msra.mxu0 0.0
        %901 = vmatprep.subr.mxu0 0.0
        %902 = vmatpush1.msra.mxu0 0.0
        %903 = vmatprep.subr.mxu0 0.0
        %904 = vmatpush1.msra.mxu0 0.0
        %905 = vmatprep.subr.mxu0 0.0
        %906 = vmatpush1.msra.mxu0 0.0
        %907 = vmatprep.subr.mxu0 0.0
        %908 = vmatpush1.msra.mxu0 0.0
        %909 = vmatprep.subr.mxu0 0.0
        %910 = vmatpush1.msra.mxu0 0.0
        %911 = vmatprep.subr.mxu0 0.0
        %912 = vmatpush1.msra.mxu0 0.0
        %913 = vmatprep.subr.mxu0 0.0
        %914 = vmatpush1.msra.mxu0 0.0
        %915 = vmatprep.subr.mxu0 0.0
        %916 = vmatpush1.msra.mxu0 0.0
        %917 = vmatprep.subr.mxu0 0.0
        %918 = vmatpush1.msra.mxu0 0.0
        %919 = vmatprep.subr.mxu0 0.0
        %920 = vmatpush1.msra.mxu0 0.0
        %921 = vmatprep.subr.mxu0 0.0
        %922 = vmatpush1.msra.mxu0 0.0
        %923 = vmatprep.subr.mxu0 0.0
        %924 = vmatpush1.msra.mxu0 0.0
        %925 = vmatprep.subr.mxu0 0.0
        %926 = vmatpush1.msra.mxu0 0.0
        %927 = vmatprep.subr.mxu0 0.0
        %928 = vmatpush1.msra.mxu0 0.0
        %929 = vmatprep.subr.mxu0 0.0
        %930 = vmatpush1.msra.mxu0 0.0
        %931 = vmatprep.subr.mxu0 0.0
        %932 = vmatpush1.msra.mxu0 0.0
        %933 = vmatprep.subr.mxu0 0.0
        %934 = vmatpush1.msra.mxu0 0.0
        %935 = vmatprep.mubr.f32.mxu0 0.0
        %v936 = vand.u32 %v672, 4294901760
        %v937 = vsub.f32 %v672, %v936
        %938 = vmatmul.mubr.f32.gmra.mrb[0].mxu0 %v937
        %v939 = vpop.f32.mrb[0].mxu0
        %v940 = vadd.f32 %v854, %v939
        %v941 = vpop.f32.mrb[0].mxu0
        %942 = vmatprep.mubr.f32.mxu0 0.0
        %v943 = vand.u32 %v675, 4294901760
        %v944 = vsub.f32 %v675, %v943
        %945 = vmatmul.mubr.f32.gmra.mrb[0].mxu0 %v944
        %v946 = vpop.f32.mrb[0].mxu0
        %v947 = vadd.f32 %v860, %v946
        %v948 = vpop.f32.mrb[0].mxu0
        %949 = vdwg.mxu0
        %950 = vmatprep.subr.mxu0 0.0
        %v951 = vand.u32 %v659, 4294901760
        %952 = vmatpush1.msra.mxu0 %v951
        %953 = vmatprep.subr.mxu0 0.0
        %v954 = vand.u32 %v660, 4294901760
        %955 = vmatpush1.msra.mxu0 %v954
        %956 = vmatprep.subr.mxu0 0.0
        %v957 = vand.u32 %v661, 4294901760
        %958 = vmatpush1.msra.mxu0 %v957
        %959 = vmatprep.subr.mxu0 0.0
        %v960 = vand.u32 %v662, 4294901760
        %961 = vmatpush1.msra.mxu0 %v960
        %962 = vmatprep.subr.mxu0 0.0
        %963 = vmatpush1.msra.mxu0 0.0
        %964 = vmatprep.subr.mxu0 0.0
        %965 = vmatpush1.msra.mxu0 0.0
        %966 = vmatprep.subr.mxu0 0.0
        %967 = vmatpush1.msra.mxu0 0.0
        %968 = vmatprep.subr.mxu0 0.0
        %969 = vmatpush1.msra.mxu0 0.0
        %970 = vmatprep.subr.mxu0 0.0
        %971 = vmatpush1.msra.mxu0 0.0
        %972 = vmatprep.subr.mxu0 0.0
        %973 = vmatpush1.msra.mxu0 0.0
        %974 = vmatprep.subr.mxu0 0.0
        %975 = vmatpush1.msra.mxu0 0.0
        %976 = vmatprep.subr.mxu0 0.0
        %977 = vmatpush1.msra.mxu0 0.0
        %978 = vmatprep.subr.mxu0 0.0
        %979 = vmatpush1.msra.mxu0 0.0
        %980 = vmatprep.subr.mxu0 0.0
        %981 = vmatpush1.msra.mxu0 0.0
        %982 = vmatprep.subr.mxu0 0.0
        %983 = vmatpush1.msra.mxu0 0.0
        %984 = vmatprep.subr.mxu0 0.0
        %985 = vmatpush1.msra.mxu0 0.0
        %986 = vmatprep.subr.mxu0 0.0
        %987 = vmatpush1.msra.mxu0 0.0
        %988 = vmatprep.subr.mxu0 0.0
        %989 = vmatpush1.msra.mxu0 0.0
        %990 = vmatprep.subr.mxu0 0.0
        %991 = vmatpush1.msra.mxu0 0.0
        %992 = vmatprep.subr.mxu0 0.0
        %993 = vmatpush1.msra.mxu0 0.0
        %994 = vmatprep.subr.mxu0 0.0
        %995 = vmatpush1.msra.mxu0 0.0
        %996 = vmatprep.subr.mxu0 0.0
        %997 = vmatpush1.msra.mxu0 0.0
        %998 = vmatprep.subr.mxu0 0.0
        %999 = vmatpush1.msra.mxu0 0.0
        %1000 = vmatprep.subr.mxu0 0.0
        %1001 = vmatpush1.msra.mxu0 0.0
        %1002 = vmatprep.subr.mxu0 0.0
        %1003 = vmatpush1.msra.mxu0 0.0
        %1004 = vmatprep.subr.mxu0 0.0
        %1005 = vmatpush1.msra.mxu0 0.0
        %1006 = vmatprep.subr.mxu0 0.0
        %1007 = vmatpush1.msra.mxu0 0.0
        %1008 = vmatprep.subr.mxu0 0.0
        %1009 = vmatpush1.msra.mxu0 0.0
        %1010 = vmatprep.subr.mxu0 0.0
        %1011 = vmatpush1.msra.mxu0 0.0
        %1012 = vmatprep.subr.mxu0 0.0
        %1013 = vmatpush1.msra.mxu0 0.0
        %1014 = vmatprep.subr.mxu0 0.0
        %1015 = vmatpush1.msra.mxu0 0.0
        %1016 = vmatprep.subr.mxu0 0.0
        %1017 = vmatpush1.msra.mxu0 0.0
        %1018 = vmatprep.mubr.f32.mxu0 0.0
        %v1019 = vand.u32 %v672, 4294901760
        %v1020 = vsub.f32 %v672, %v1019
        %v1021 = vand.u32 %v1020, 4294901760
        %1022 = vmatmul.mubr.f32.gmra.mrb[0].mxu0 %v1021
        %v1023 = vpop.f32.mrb[0].mxu0
        %v1024 = vadd.f32 %v940, %v1023
        %v1025 = vpop.f32.mrb[0].mxu0
        %1026 = vmatprep.mubr.f32.mxu0 0.0
        %v1027 = vand.u32 %v675, 4294901760
        %v1028 = vsub.f32 %v675, %v1027
        %v1029 = vand.u32 %v1028, 4294901760
        %1030 = vmatmul.mubr.f32.gmra.mrb[0].mxu0 %v1029
        %v1031 = vpop.f32.mrb[0].mxu0
        %v1032 = vadd.f32 %v947, %v1031
        %v1033 = vpop.f32.mrb[0].mxu0
        %1034 = vdwg.mxu0
        %1035 = vmatprep.subr.mxu0 0.0
        %v1036 = vand.u32 %v659, 4294901760
        %v1037 = vsub.f32 %v659, %v1036
        %v1038 = vand.u32 %v1037, 4294901760
        %1039 = vmatpush1.msra.mxu0 %v1038
        %1040 = vmatprep.subr.mxu0 0.0
        %v1041 = vand.u32 %v660, 4294901760
        %v1042 = vsub.f32 %v660, %v1041
        %v1043 = vand.u32 %v1042, 4294901760
        %1044 = vmatpush1.msra.mxu0 %v1043
        %1045 = vmatprep.subr.mxu0 0.0
        %v1046 = vand.u32 %v661, 4294901760
        %v1047 = vsub.f32 %v661, %v1046
        %v1048 = vand.u32 %v1047, 4294901760
        %1049 = vmatpush1.msra.mxu0 %v1048
        %1050 = vmatprep.subr.mxu0 0.0
        %v1051 = vand.u32 %v662, 4294901760
        %v1052 = vsub.f32 %v662, %v1051
        %v1053 = vand.u32 %v1052, 4294901760
        %1054 = vmatpush1.msra.mxu0 %v1053
        %1055 = vmatprep.subr.mxu0 0.0
        %1056 = vmatpush1.msra.mxu0 0.0
        %1057 = vmatprep.subr.mxu0 0.0
        %1058 = vmatpush1.msra.mxu0 0.0
        %1059 = vmatprep.subr.mxu0 0.0
        %1060 = vmatpush1.msra.mxu0 0.0
        %1061 = vmatprep.subr.mxu0 0.0
        %1062 = vmatpush1.msra.mxu0 0.0
        %1063 = vmatprep.subr.mxu0 0.0
        %1064 = vmatpush1.msra.mxu0 0.0
        %1065 = vmatprep.subr.mxu0 0.0
        %1066 = vmatpush1.msra.mxu0 0.0
        %1067 = vmatprep.subr.mxu0 0.0
        %1068 = vmatpush1.msra.mxu0 0.0
        %1069 = vmatprep.subr.mxu0 0.0
        %1070 = vmatpush1.msra.mxu0 0.0
        %1071 = vmatprep.subr.mxu0 0.0
        %1072 = vmatpush1.msra.mxu0 0.0
        %1073 = vmatprep.subr.mxu0 0.0
        %1074 = vmatpush1.msra.mxu0 0.0
        %1075 = vmatprep.subr.mxu0 0.0
        %1076 = vmatpush1.msra.mxu0 0.0
        %1077 = vmatprep.subr.mxu0 0.0
        %1078 = vmatpush1.msra.mxu0 0.0
        %1079 = vmatprep.subr.mxu0 0.0
        %1080 = vmatpush1.msra.mxu0 0.0
        %1081 = vmatprep.subr.mxu0 0.0
        %1082 = vmatpush1.msra.mxu0 0.0
        %1083 = vmatprep.subr.mxu0 0.0
        %1084 = vmatpush1.msra.mxu0 0.0
        %1085 = vmatprep.subr.mxu0 0.0
        %1086 = vmatpush1.msra.mxu0 0.0
        %1087 = vmatprep.subr.mxu0 0.0
        %1088 = vmatpush1.msra.mxu0 0.0
        %1089 = vmatprep.subr.mxu0 0.0
        %1090 = vmatpush1.msra.mxu0 0.0
        %1091 = vmatprep.subr.mxu0 0.0
        %1092 = vmatpush1.msra.mxu0 0.0
        %1093 = vmatprep.subr.mxu0 0.0
        %1094 = vmatpush1.msra.mxu0 0.0
        %1095 = vmatprep.subr.mxu0 0.0
        %1096 = vmatpush1.msra.mxu0 0.0
        %1097 = vmatprep.subr.mxu0 0.0
        %1098 = vmatpush1.msra.mxu0 0.0
        %1099 = vmatprep.subr.mxu0 0.0
        %1100 = vmatpush1.msra.mxu0 0.0
        %1101 = vmatprep.subr.mxu0 0.0
        %1102 = vmatpush1.msra.mxu0 0.0
        %1103 = vmatprep.subr.mxu0 0.0
        %1104 = vmatpush1.msra.mxu0 0.0
        %1105 = vmatprep.subr.mxu0 0.0
        %1106 = vmatpush1.msra.mxu0 0.0
        %1107 = vmatprep.subr.mxu0 0.0
        %1108 = vmatpush1.msra.mxu0 0.0
        %1109 = vmatprep.subr.mxu0 0.0
        %1110 = vmatpush1.msra.mxu0 0.0
        %1111 = vmatprep.mubr.f32.mxu0 0.0
        %v1112 = vand.u32 %v672, 4294901760
        %1113 = vmatmul.mubr.f32.gmra.mrb[0].mxu0 %v1112
        %v1114 = vpop.f32.mrb[0].mxu0
        %v1115 = vadd.f32 %v1024, %v1114
        %v1116 = vpop.f32.mrb[0].mxu0
        %1117 = vmatprep.mubr.f32.mxu0 0.0
        %v1118 = vand.u32 %v675, 4294901760
        %1119 = vmatmul.mubr.f32.gmra.mrb[0].mxu0 %v1118
        %v1120 = vpop.f32.mrb[0].mxu0
        %v1121 = vadd.f32 %v1032, %v1120
        %v1122 = vpop.f32.mrb[0].mxu0
        %1123 = vdwg.mxu0
        %1124 = vmatprep.subr.mxu0 0.0
        %v1125 = vand.u32 %v659, 4294901760
        %1126 = vmatpush1.msra.mxu0 %v1125
        %1127 = vmatprep.subr.mxu0 0.0
        %v1128 = vand.u32 %v660, 4294901760
        %1129 = vmatpush1.msra.mxu0 %v1128
        %1130 = vmatprep.subr.mxu0 0.0
        %v1131 = vand.u32 %v661, 4294901760
        %1132 = vmatpush1.msra.mxu0 %v1131
        %1133 = vmatprep.subr.mxu0 0.0
        %v1134 = vand.u32 %v662, 4294901760
        %1135 = vmatpush1.msra.mxu0 %v1134
        %1136 = vmatprep.subr.mxu0 0.0
        %1137 = vmatpush1.msra.mxu0 0.0
        %1138 = vmatprep.subr.mxu0 0.0
        %1139 = vmatpush1.msra.mxu0 0.0
        %1140 = vmatprep.subr.mxu0 0.0
        %1141 = vmatpush1.msra.mxu0 0.0
        %1142 = vmatprep.subr.mxu0 0.0
        %1143 = vmatpush1.msra.mxu0 0.0
        %1144 = vmatprep.subr.mxu0 0.0
        %1145 = vmatpush1.msra.mxu0 0.0
        %1146 = vmatprep.subr.mxu0 0.0
        %1147 = vmatpush1.msra.mxu0 0.0
        %1148 = vmatprep.subr.mxu0 0.0
        %1149 = vmatpush1.msra.mxu0 0.0
        %1150 = vmatprep.subr.mxu0 0.0
        %1151 = vmatpush1.msra.mxu0 0.0
        %1152 = vmatprep.subr.mxu0 0.0
        %1153 = vmatpush1.msra.mxu0 0.0
        %1154 = vmatprep.subr.mxu0 0.0
        %1155 = vmatpush1.msra.mxu0 0.0
        %1156 = vmatprep.subr.mxu0 0.0
        %1157 = vmatpush1.msra.mxu0 0.0
        %1158 = vmatprep.subr.mxu0 0.0
        %1159 = vmatpush1.msra.mxu0 0.0
        %1160 = vmatprep.subr.mxu0 0.0
        %1161 = vmatpush1.msra.mxu0 0.0
        %1162 = vmatprep.subr.mxu0 0.0
        %1163 = vmatpush1.msra.mxu0 0.0
        %1164 = vmatprep.subr.mxu0 0.0
        %1165 = vmatpush1.msra.mxu0 0.0
        %1166 = vmatprep.subr.mxu0 0.0
        %1167 = vmatpush1.msra.mxu0 0.0
        %1168 = vmatprep.subr.mxu0 0.0
        %1169 = vmatpush1.msra.mxu0 0.0
        %1170 = vmatprep.subr.mxu0 0.0
        %1171 = vmatpush1.msra.mxu0 0.0
        %1172 = vmatprep.subr.mxu0 0.0
        %1173 = vmatpush1.msra.mxu0 0.0
        %1174 = vmatprep.subr.mxu0 0.0
        %1175 = vmatpush1.msra.mxu0 0.0
        %1176 = vmatprep.subr.mxu0 0.0
        %1177 = vmatpush1.msra.mxu0 0.0
        %1178 = vmatprep.subr.mxu0 0.0
        %1179 = vmatpush1.msra.mxu0 0.0
        %1180 = vmatprep.subr.mxu0 0.0
        %1181 = vmatpush1.msra.mxu0 0.0
        %1182 = vmatprep.subr.mxu0 0.0
        %1183 = vmatpush1.msra.mxu0 0.0
        %1184 = vmatprep.subr.mxu0 0.0
        %1185 = vmatpush1.msra.mxu0 0.0
        %1186 = vmatprep.subr.mxu0 0.0
        %1187 = vmatpush1.msra.mxu0 0.0
        %1188 = vmatprep.subr.mxu0 0.0
        %1189 = vmatpush1.msra.mxu0 0.0
        %1190 = vmatprep.subr.mxu0 0.0
        %1191 = vmatpush1.msra.mxu0 0.0
        %1192 = vmatprep.mubr.f32.mxu0 0.0
        %v1193 = vand.u32 %v672, 4294901760
        %1194 = vmatmul.mubr.f32.gmra.mrb[0].mxu0 %v1193
        %v1195 = vpop.f32.mrb[0].mxu0
        %v1196 = vadd.f32 %v1115, %v1195
        %v1197 = vpop.f32.mrb[0].mxu0
        %1198 = vmatprep.mubr.f32.mxu0 0.0
        %v1199 = vand.u32 %v675, 4294901760
        %1200 = vmatmul.mubr.f32.gmra.mrb[0].mxu0 %v1199
        %v1201 = vpop.f32.mrb[0].mxu0
        %v1202 = vadd.f32 %v1121, %v1201
        %v1203 = vpop.f32.mrb[0].mxu0
        %1204 = vdwg.mxu0
        %v1205 = vld [vmem:[#allocation10] sm:$0xff]
        %v1206 = vld [vmem:[#allocation10 + $0x8] sm:$0xff]
        %v1207 = vld [vmem:[#allocation10 + $0x10] sm:$0xff]
        %v1208 = vld [vmem:[#allocation10 + $0x18] sm:$0xff]
        %v1209 = vld [vmem:[%s6] sm:$0x1]
        %v1211 = vlaneseq
        %v1212 = vshrl.u32 %v1211, 7
        %v1213 = vsub.s32 0, %v1212
        %v1214 = vrot.slane %v1209, %v1213
        %v1217 = vsel %vm670, %v655, 0
        %v1220 = vsel %vm670, %v656, 0
        %1222 = vmatprep.subr.mxu0 0.0
        %v1223 = vand.u32 %v1205, 4294901760
        %1224 = vmatpush1.msra.mxu0 %v1223
        %1225 = vmatprep.subr.mxu0 0.0
        %v1226 = vand.u32 %v1206, 4294901760
        %1227 = vmatpush1.msra.mxu0 %v1226
        %1228 = vmatprep.subr.mxu0 0.0
        %v1229 = vand.u32 %v1207, 4294901760
        %1230 = vmatpush1.msra.mxu0 %v1229
        %1231 = vmatprep.subr.mxu0 0.0
        %v1232 = vand.u32 %v1208, 4294901760
        %1233 = vmatpush1.msra.mxu0 %v1232
        %1234 = vmatprep.subr.mxu0 0.0
        %1235 = vmatpush1.msra.mxu0 0.0
        %1236 = vmatprep.subr.mxu0 0.0
        %1237 = vmatpush1.msra.mxu0 0.0
        %1238 = vmatprep.subr.mxu0 0.0
        %1239 = vmatpush1.msra.mxu0 0.0
        %1240 = vmatprep.subr.mxu0 0.0
        %1241 = vmatpush1.msra.mxu0 0.0
        %1242 = vmatprep.subr.mxu0 0.0
        %1243 = vmatpush1.msra.mxu0 0.0
        %1244 = vmatprep.subr.mxu0 0.0
        %1245 = vmatpush1.msra.mxu0 0.0
        %1246 = vmatprep.subr.mxu0 0.0
        %1247 = vmatpush1.msra.mxu0 0.0
        %1248 = vmatprep.subr.mxu0 0.0
        %1249 = vmatpush1.msra.mxu0 0.0
        %1250 = vmatprep.subr.mxu0 0.0
        %1251 = vmatpush1.msra.mxu0 0.0
        %1252 = vmatprep.subr.mxu0 0.0
        %1253 = vmatpush1.msra.mxu0 0.0
        %1254 = vmatprep.subr.mxu0 0.0
        %1255 = vmatpush1.msra.mxu0 0.0
        %1256 = vmatprep.subr.mxu0 0.0
        %1257 = vmatpush1.msra.mxu0 0.0
        %1258 = vmatprep.subr.mxu0 0.0
        %1259 = vmatpush1.msra.mxu0 0.0
        %1260 = vmatprep.subr.mxu0 0.0
        %1261 = vmatpush1.msra.mxu0 0.0
        %1262 = vmatprep.subr.mxu0 0.0
        %1263 = vmatpush1.msra.mxu0 0.0
        %1264 = vmatprep.subr.mxu0 0.0
        %1265 = vmatpush1.msra.mxu0 0.0
        %1266 = vmatprep.subr.mxu0 0.0
        %1267 = vmatpush1.msra.mxu0 0.0
        %1268 = vmatprep.subr.mxu0 0.0
        %1269 = vmatpush1.msra.mxu0 0.0
        %1270 = vmatprep.subr.mxu0 0.0
        %1271 = vmatpush1.msra.mxu0 0.0
        %1272 = vmatprep.subr.mxu0 0.0
        %1273 = vmatpush1.msra.mxu0 0.0
        %1274 = vmatprep.subr.mxu0 0.0
        %1275 = vmatpush1.msra.mxu0 0.0
        %1276 = vmatprep.subr.mxu0 0.0
        %1277 = vmatpush1.msra.mxu0 0.0
        %1278 = vmatprep.subr.mxu0 0.0
        %1279 = vmatpush1.msra.mxu0 0.0
        %1280 = vmatprep.subr.mxu0 0.0
        %1281 = vmatpush1.msra.mxu0 0.0
        %1282 = vmatprep.subr.mxu0 0.0
        %1283 = vmatpush1.msra.mxu0 0.0
        %1284 = vmatprep.subr.mxu0 0.0
        %1285 = vmatpush1.msra.mxu0 0.0
        %1286 = vmatprep.subr.mxu0 0.0
        %1287 = vmatpush1.msra.mxu0 0.0
        %1288 = vmatprep.subr.mxu0 0.0
        %1289 = vmatpush1.msra.mxu0 0.0
        %1290 = vmatprep.mubr.f32.mxu0 0.0
        %v1291 = vand.u32 %v1217, 4294901760
        %v1292 = vsub.f32 %v1217, %v1291
        %v1293 = vand.u32 %v1292, 4294901760
        %v1294 = vsub.f32 %v1292, %v1293
        %v1295 = vand.u32 %v1294, 4294901760
        %1296 = vmatmul.mubr.f32.gmra.mrb[0].mxu0 %v1295
        %v1297 = vpop.f32.mrb[0].mxu0
        %v1298 = vadd.f32 %v1214, %v1297
        %v1299 = vpop.f32.mrb[0].mxu0
        %1300 = vmatprep.mubr.f32.mxu0 0.0
        %v1301 = vand.u32 %v1220, 4294901760
        %v1302 = vsub.f32 %v1220, %v1301
        %v1303 = vand.u32 %v1302, 4294901760
        %v1304 = vsub.f32 %v1302, %v1303
        %v1305 = vand.u32 %v1304, 4294901760
        %1306 = vmatmul.mubr.f32.gmra.mrb[0].mxu0 %v1305
        %v1307 = vpop.f32.mrb[0].mxu0
        %v1308 = vadd.f32 %v1214, %v1307
        %v1309 = vpop.f32.mrb[0].mxu0
        %1310 = vdwg.mxu0
        %1311 = vmatprep.subr.mxu0 0.0
        %v1312 = vand.u32 %v1205, 4294901760
        %v1313 = vsub.f32 %v1205, %v1312
        %v1314 = vand.u32 %v1313, 4294901760
        %v1315 = vsub.f32 %v1313, %v1314
        %v1316 = vand.u32 %v1315, 4294901760
        %1317 = vmatpush1.msra.mxu0 %v1316
        %1318 = vmatprep.subr.mxu0 0.0
        %v1319 = vand.u32 %v1206, 4294901760
        %v1320 = vsub.f32 %v1206, %v1319
        %v1321 = vand.u32 %v1320, 4294901760
        %v1322 = vsub.f32 %v1320, %v1321
        %v1323 = vand.u32 %v1322, 4294901760
        %1324 = vmatpush1.msra.mxu0 %v1323
        %1325 = vmatprep.subr.mxu0 0.0
        %v1326 = vand.u32 %v1207, 4294901760
        %v1327 = vsub.f32 %v1207, %v1326
        %v1328 = vand.u32 %v1327, 4294901760
        %v1329 = vsub.f32 %v1327, %v1328
        %v1330 = vand.u32 %v1329, 4294901760
        %1331 = vmatpush1.msra.mxu0 %v1330
        %1332 = vmatprep.subr.mxu0 0.0
        %v1333 = vand.u32 %v1208, 4294901760
        %v1334 = vsub.f32 %v1208, %v1333
        %v1335 = vand.u32 %v1334, 4294901760
        %v1336 = vsub.f32 %v1334, %v1335
        %v1337 = vand.u32 %v1336, 4294901760
        %1338 = vmatpush1.msra.mxu0 %v1337
        %1339 = vmatprep.subr.mxu0 0.0
        %1340 = vmatpush1.msra.mxu0 0.0
        %1341 = vmatprep.subr.mxu0 0.0
        %1342 = vmatpush1.msra.mxu0 0.0
        %1343 = vmatprep.subr.mxu0 0.0
        %1344 = vmatpush1.msra.mxu0 0.0
        %1345 = vmatprep.subr.mxu0 0.0
        %1346 = vmatpush1.msra.mxu0 0.0
        %1347 = vmatprep.subr.mxu0 0.0
        %1348 = vmatpush1.msra.mxu0 0.0
        %1349 = vmatprep.subr.mxu0 0.0
        %1350 = vmatpush1.msra.mxu0 0.0
        %1351 = vmatprep.subr.mxu0 0.0
        %1352 = vmatpush1.msra.mxu0 0.0
        %1353 = vmatprep.subr.mxu0 0.0
        %1354 = vmatpush1.msra.mxu0 0.0
        %1355 = vmatprep.subr.mxu0 0.0
        %1356 = vmatpush1.msra.mxu0 0.0
        %1357 = vmatprep.subr.mxu0 0.0
        %1358 = vmatpush1.msra.mxu0 0.0
        %1359 = vmatprep.subr.mxu0 0.0
        %1360 = vmatpush1.msra.mxu0 0.0
        %1361 = vmatprep.subr.mxu0 0.0
        %1362 = vmatpush1.msra.mxu0 0.0
        %1363 = vmatprep.subr.mxu0 0.0
        %1364 = vmatpush1.msra.mxu0 0.0
        %1365 = vmatprep.subr.mxu0 0.0
        %1366 = vmatpush1.msra.mxu0 0.0
        %1367 = vmatprep.subr.mxu0 0.0
        %1368 = vmatpush1.msra.mxu0 0.0
        %1369 = vmatprep.subr.mxu0 0.0
        %1370 = vmatpush1.msra.mxu0 0.0
        %1371 = vmatprep.subr.mxu0 0.0
        %1372 = vmatpush1.msra.mxu0 0.0
        %1373 = vmatprep.subr.mxu0 0.0
        %1374 = vmatpush1.msra.mxu0 0.0
        %1375 = vmatprep.subr.mxu0 0.0
        %1376 = vmatpush1.msra.mxu0 0.0
        %1377 = vmatprep.subr.mxu0 0.0
        %1378 = vmatpush1.msra.mxu0 0.0
        %1379 = vmatprep.subr.mxu0 0.0
        %1380 = vmatpush1.msra.mxu0 0.0
        %1381 = vmatprep.subr.mxu0 0.0
        %1382 = vmatpush1.msra.mxu0 0.0
        %1383 = vmatprep.subr.mxu0 0.0
        %1384 = vmatpush1.msra.mxu0 0.0
        %1385 = vmatprep.subr.mxu0 0.0
        %1386 = vmatpush1.msra.mxu0 0.0
        %1387 = vmatprep.subr.mxu0 0.0
        %1388 = vmatpush1.msra.mxu0 0.0
        %1389 = vmatprep.subr.mxu0 0.0
        %1390 = vmatpush1.msra.mxu0 0.0
        %1391 = vmatprep.subr.mxu0 0.0
        %1392 = vmatpush1.msra.mxu0 0.0
        %1393 = vmatprep.subr.mxu0 0.0
        %1394 = vmatpush1.msra.mxu0 0.0
        %1395 = vmatprep.mubr.f32.mxu0 0.0
        %v1396 = vand.u32 %v1217, 4294901760
        %1397 = vmatmul.mubr.f32.gmra.mrb[0].mxu0 %v1396
        %v1398 = vpop.f32.mrb[0].mxu0
        %v1399 = vadd.f32 %v1298, %v1398
        %v1400 = vpop.f32.mrb[0].mxu0
        %1401 = vmatprep.mubr.f32.mxu0 0.0
        %v1402 = vand.u32 %v1220, 4294901760
        %1403 = vmatmul.mubr.f32.gmra.mrb[0].mxu0 %v1402
        %v1404 = vpop.f32.mrb[0].mxu0
        %v1405 = vadd.f32 %v1308, %v1404
        %v1406 = vpop.f32.mrb[0].mxu0
        %1407 = vdwg.mxu0
        %1408 = vmatprep.subr.mxu0 0.0
        %v1409 = vand.u32 %v1205, 4294901760
        %v1410 = vsub.f32 %v1205, %v1409
        %1411 = vmatpush1.msra.mxu0 %v1410
        %1412 = vmatprep.subr.mxu0 0.0
        %v1413 = vand.u32 %v1206, 4294901760
        %v1414 = vsub.f32 %v1206, %v1413
        %1415 = vmatpush1.msra.mxu0 %v1414
        %1416 = vmatprep.subr.mxu0 0.0
        %v1417 = vand.u32 %v1207, 4294901760
        %v1418 = vsub.f32 %v1207, %v1417
        %1419 = vmatpush1.msra.mxu0 %v1418
        %1420 = vmatprep.subr.mxu0 0.0
        %v1421 = vand.u32 %v1208, 4294901760
        %v1422 = vsub.f32 %v1208, %v1421
        %1423 = vmatpush1.msra.mxu0 %v1422
        %1424 = vmatprep.subr.mxu0 0.0
        %1425 = vmatpush1.msra.mxu0 0.0
        %1426 = vmatprep.subr.mxu0 0.0
        %1427 = vmatpush1.msra.mxu0 0.0
        %1428 = vmatprep.subr.mxu0 0.0
        %1429 = vmatpush1.msra.mxu0 0.0
        %1430 = vmatprep.subr.mxu0 0.0
        %1431 = vmatpush1.msra.mxu0 0.0
        %1432 = vmatprep.subr.mxu0 0.0
        %1433 = vmatpush1.msra.mxu0 0.0
        %1434 = vmatprep.subr.mxu0 0.0
        %1435 = vmatpush1.msra.mxu0 0.0
        %1436 = vmatprep.subr.mxu0 0.0
        %1437 = vmatpush1.msra.mxu0 0.0
        %1438 = vmatprep.subr.mxu0 0.0
        %1439 = vmatpush1.msra.mxu0 0.0
        %1440 = vmatprep.subr.mxu0 0.0
        %1441 = vmatpush1.msra.mxu0 0.0
        %1442 = vmatprep.subr.mxu0 0.0
        %1443 = vmatpush1.msra.mxu0 0.0
        %1444 = vmatprep.subr.mxu0 0.0
        %1445 = vmatpush1.msra.mxu0 0.0
        %1446 = vmatprep.subr.mxu0 0.0
        %1447 = vmatpush1.msra.mxu0 0.0
        %1448 = vmatprep.subr.mxu0 0.0
        %1449 = vmatpush1.msra.mxu0 0.0
        %1450 = vmatprep.subr.mxu0 0.0
        %1451 = vmatpush1.msra.mxu0 0.0
        %1452 = vmatprep.subr.mxu0 0.0
        %1453 = vmatpush1.msra.mxu0 0.0
        %1454 = vmatprep.subr.mxu0 0.0
        %1455 = vmatpush1.msra.mxu0 0.0
        %1456 = vmatprep.subr.mxu0 0.0
        %1457 = vmatpush1.msra.mxu0 0.0
        %1458 = vmatprep.subr.mxu0 0.0
        %1459 = vmatpush1.msra.mxu0 0.0
        %1460 = vmatprep.subr.mxu0 0.0
        %1461 = vmatpush1.msra.mxu0 0.0
        %1462 = vmatprep.subr.mxu0 0.0
        %1463 = vmatpush1.msra.mxu0 0.0
        %1464 = vmatprep.subr.mxu0 0.0
        %1465 = vmatpush1.msra.mxu0 0.0
        %1466 = vmatprep.subr.mxu0 0.0
        %1467 = vmatpush1.msra.mxu0 0.0
        %1468 = vmatprep.subr.mxu0 0.0
        %1469 = vmatpush1.msra.mxu0 0.0
        %1470 = vmatprep.subr.mxu0 0.0
        %1471 = vmatpush1.msra.mxu0 0.0
        %1472 = vmatprep.subr.mxu0 0.0
        %1473 = vmatpush1.msra.mxu0 0.0
        %1474 = vmatprep.subr.mxu0 0.0
        %1475 = vmatpush1.msra.mxu0 0.0
        %1476 = vmatprep.subr.mxu0 0.0
        %1477 = vmatpush1.msra.mxu0 0.0
        %1478 = vmatprep.subr.mxu0 0.0
        %1479 = vmatpush1.msra.mxu0 0.0
        %1480 = vmatprep.mubr.f32.mxu0 0.0
        %v1481 = vand.u32 %v1217, 4294901760
        %v1482 = vsub.f32 %v1217, %v1481
        %1483 = vmatmul.mubr.f32.gmra.mrb[0].mxu0 %v1482
        %v1484 = vpop.f32.mrb[0].mxu0
        %v1485 = vadd.f32 %v1399, %v1484
        %v1486 = vpop.f32.mrb[0].mxu0
        %1487 = vmatprep.mubr.f32.mxu0 0.0
        %v1488 = vand.u32 %v1220, 4294901760
        %v1489 = vsub.f32 %v1220, %v1488
        %1490 = vmatmul.mubr.f32.gmra.mrb[0].mxu0 %v1489
        %v1491 = vpop.f32.mrb[0].mxu0
        %v1492 = vadd.f32 %v1405, %v1491
        %v1493 = vpop.f32.mrb[0].mxu0
        %1494 = vdwg.mxu0
        %1495 = vmatprep.subr.mxu0 0.0
        %v1496 = vand.u32 %v1205, 4294901760
        %1497 = vmatpush1.msra.mxu0 %v1496
        %1498 = vmatprep.subr.mxu0 0.0
        %v1499 = vand.u32 %v1206, 4294901760
        %1500 = vmatpush1.msra.mxu0 %v1499
        %1501 = vmatprep.subr.mxu0 0.0
        %v1502 = vand.u32 %v1207, 4294901760
        %1503 = vmatpush1.msra.mxu0 %v1502
        %1504 = vmatprep.subr.mxu0 0.0
        %v1505 = vand.u32 %v1208, 4294901760
        %1506 = vmatpush1.msra.mxu0 %v1505
        %1507 = vmatprep.subr.mxu0 0.0
        %1508 = vmatpush1.msra.mxu0 0.0
        %1509 = vmatprep.subr.mxu0 0.0
        %1510 = vmatpush1.msra.mxu0 0.0
        %1511 = vmatprep.subr.mxu0 0.0
        %1512 = vmatpush1.msra.mxu0 0.0
        %1513 = vmatprep.subr.mxu0 0.0
        %1514 = vmatpush1.msra.mxu0 0.0
        %1515 = vmatprep.subr.mxu0 0.0
        %1516 = vmatpush1.msra.mxu0 0.0
        %1517 = vmatprep.subr.mxu0 0.0
        %1518 = vmatpush1.msra.mxu0 0.0
        %1519 = vmatprep.subr.mxu0 0.0
        %1520 = vmatpush1.msra.mxu0 0.0
        %1521 = vmatprep.subr.mxu0 0.0
        %1522 = vmatpush1.msra.mxu0 0.0
        %1523 = vmatprep.subr.mxu0 0.0
        %1524 = vmatpush1.msra.mxu0 0.0
        %1525 = vmatprep.subr.mxu0 0.0
        %1526 = vmatpush1.msra.mxu0 0.0
        %1527 = vmatprep.subr.mxu0 0.0
        %1528 = vmatpush1.msra.mxu0 0.0
        %1529 = vmatprep.subr.mxu0 0.0
        %1530 = vmatpush1.msra.mxu0 0.0
        %1531 = vmatprep.subr.mxu0 0.0
        %1532 = vmatpush1.msra.mxu0 0.0
        %1533 = vmatprep.subr.mxu0 0.0
        %1534 = vmatpush1.msra.mxu0 0.0
        %1535 = vmatprep.subr.mxu0 0.0
        %1536 = vmatpush1.msra.mxu0 0.0
        %1537 = vmatprep.subr.mxu0 0.0
        %1538 = vmatpush1.msra.mxu0 0.0
        %1539 = vmatprep.subr.mxu0 0.0
        %1540 = vmatpush1.msra.mxu0 0.0
        %1541 = vmatprep.subr.mxu0 0.0
        %1542 = vmatpush1.msra.mxu0 0.0
        %1543 = vmatprep.subr.mxu0 0.0
        %1544 = vmatpush1.msra.mxu0 0.0
        %1545 = vmatprep.subr.mxu0 0.0
        %1546 = vmatpush1.msra.mxu0 0.0
        %1547 = vmatprep.subr.mxu0 0.0
        %1548 = vmatpush1.msra.mxu0 0.0
        %1549 = vmatprep.subr.mxu0 0.0
        %1550 = vmatpush1.msra.mxu0 0.0
        %1551 = vmatprep.subr.mxu0 0.0
        %1552 = vmatpush1.msra.mxu0 0.0
        %1553 = vmatprep.subr.mxu0 0.0
        %1554 = vmatpush1.msra.mxu0 0.0
        %1555 = vmatprep.subr.mxu0 0.0
        %1556 = vmatpush1.msra.mxu0 0.0
        %1557 = vmatprep.subr.mxu0 0.0
        %1558 = vmatpush1.msra.mxu0 0.0
        %1559 = vmatprep.subr.mxu0 0.0
        %1560 = vmatpush1.msra.mxu0 0.0
        %1561 = vmatprep.subr.mxu0 0.0
        %1562 = vmatpush1.msra.mxu0 0.0
        %1563 = vmatprep.mubr.f32.mxu0 0.0
        %v1564 = vand.u32 %v1217, 4294901760
        %v1565 = vsub.f32 %v1217, %v1564
        %v1566 = vand.u32 %v1565, 4294901760
        %1567 = vmatmul.mubr.f32.gmra.mrb[0].mxu0 %v1566
        %v1568 = vpop.f32.mrb[0].mxu0
        %v1569 = vadd.f32 %v1485, %v1568
        %v1570 = vpop.f32.mrb[0].mxu0
        %1571 = vmatprep.mubr.f32.mxu0 0.0
        %v1572 = vand.u32 %v1220, 4294901760
        %v1573 = vsub.f32 %v1220, %v1572
        %v1574 = vand.u32 %v1573, 4294901760
        %1575 = vmatmul.mubr.f32.gmra.mrb[0].mxu0 %v1574
        %v1576 = vpop.f32.mrb[0].mxu0
        %v1577 = vadd.f32 %v1492, %v1576
        %v1578 = vpop.f32.mrb[0].mxu0
        %1579 = vdwg.mxu0
        %1580 = vmatprep.subr.mxu0 0.0
        %v1581 = vand.u32 %v1205, 4294901760
        %v1582 = vsub.f32 %v1205, %v1581
        %v1583 = vand.u32 %v1582, 4294901760
        %1584 = vmatpush1.msra.mxu0 %v1583
        %1585 = vmatprep.subr.mxu0 0.0
        %v1586 = vand.u32 %v1206, 4294901760
        %v1587 = vsub.f32 %v1206, %v1586
        %v1588 = vand.u32 %v1587, 4294901760
        %1589 = vmatpush1.msra.mxu0 %v1588
        %1590 = vmatprep.subr.mxu0 0.0
        %v1591 = vand.u32 %v1207, 4294901760
        %v1592 = vsub.f32 %v1207, %v1591
        %v1593 = vand.u32 %v1592, 4294901760
        %1594 = vmatpush1.msra.mxu0 %v1593
        %1595 = vmatprep.subr.mxu0 0.0
        %v1596 = vand.u32 %v1208, 4294901760
        %v1597 = vsub.f32 %v1208, %v1596
        %v1598 = vand.u32 %v1597, 4294901760
        %1599 = vmatpush1.msra.mxu0 %v1598
        %1600 = vmatprep.subr.mxu0 0.0
        %1601 = vmatpush1.msra.mxu0 0.0
        %1602 = vmatprep.subr.mxu0 0.0
        %1603 = vmatpush1.msra.mxu0 0.0
        %1604 = vmatprep.subr.mxu0 0.0
        %1605 = vmatpush1.msra.mxu0 0.0
        %1606 = vmatprep.subr.mxu0 0.0
        %1607 = vmatpush1.msra.mxu0 0.0
        %1608 = vmatprep.subr.mxu0 0.0
        %1609 = vmatpush1.msra.mxu0 0.0
        %1610 = vmatprep.subr.mxu0 0.0
        %1611 = vmatpush1.msra.mxu0 0.0
        %1612 = vmatprep.subr.mxu0 0.0
        %1613 = vmatpush1.msra.mxu0 0.0
        %1614 = vmatprep.subr.mxu0 0.0
        %1615 = vmatpush1.msra.mxu0 0.0
        %1616 = vmatprep.subr.mxu0 0.0
        %1617 = vmatpush1.msra.mxu0 0.0
        %1618 = vmatprep.subr.mxu0 0.0
        %1619 = vmatpush1.msra.mxu0 0.0
        %1620 = vmatprep.subr.mxu0 0.0
        %1621 = vmatpush1.msra.mxu0 0.0
        %1622 = vmatprep.subr.mxu0 0.0
        %1623 = vmatpush1.msra.mxu0 0.0
        %1624 = vmatprep.subr.mxu0 0.0
        %1625 = vmatpush1.msra.mxu0 0.0
        %1626 = vmatprep.subr.mxu0 0.0
        %1627 = vmatpush1.msra.mxu0 0.0
        %1628 = vmatprep.subr.mxu0 0.0
        %1629 = vmatpush1.msra.mxu0 0.0
        %1630 = vmatprep.subr.mxu0 0.0
        %1631 = vmatpush1.msra.mxu0 0.0
        %1632 = vmatprep.subr.mxu0 0.0
        %1633 = vmatpush1.msra.mxu0 0.0
        %1634 = vmatprep.subr.mxu0 0.0
        %1635 = vmatpush1.msra.mxu0 0.0
        %1636 = vmatprep.subr.mxu0 0.0
        %1637 = vmatpush1.msra.mxu0 0.0
        %1638 = vmatprep.subr.mxu0 0.0
        %1639 = vmatpush1.msra.mxu0 0.0
        %1640 = vmatprep.subr.mxu0 0.0
        %1641 = vmatpush1.msra.mxu0 0.0
        %1642 = vmatprep.subr.mxu0 0.0
        %1643 = vmatpush1.msra.mxu0 0.0
        %1644 = vmatprep.subr.mxu0 0.0
        %1645 = vmatpush1.msra.mxu0 0.0
        %1646 = vmatprep.subr.mxu0 0.0
        %1647 = vmatpush1.msra.mxu0 0.0
        %1648 = vmatprep.subr.mxu0 0.0
        %1649 = vmatpush1.msra.mxu0 0.0
        %1650 = vmatprep.subr.mxu0 0.0
        %1651 = vmatpush1.msra.mxu0 0.0
        %1652 = vmatprep.subr.mxu0 0.0
        %1653 = vmatpush1.msra.mxu0 0.0
        %1654 = vmatprep.subr.mxu0 0.0
        %1655 = vmatpush1.msra.mxu0 0.0
        %1656 = vmatprep.mubr.f32.mxu0 0.0
        %v1657 = vand.u32 %v1217, 4294901760
        %1658 = vmatmul.mubr.f32.gmra.mrb[0].mxu0 %v1657
        %v1659 = vpop.f32.mrb[0].mxu0
        %v1660 = vadd.f32 %v1569, %v1659
        %v1661 = vpop.f32.mrb[0].mxu0
        %1662 = vmatprep.mubr.f32.mxu0 0.0
        %v1663 = vand.u32 %v1220, 4294901760
        %1664 = vmatmul.mubr.f32.gmra.mrb[0].mxu0 %v1663
        %v1665 = vpop.f32.mrb[0].mxu0
        %v1666 = vadd.f32 %v1577, %v1665
        %v1667 = vpop.f32.mrb[0].mxu0
        %1668 = vdwg.mxu0
        %1669 = vmatprep.subr.mxu0 0.0
        %v1670 = vand.u32 %v1205, 4294901760
        %1671 = vmatpush1.msra.mxu0 %v1670
        %1672 = vmatprep.subr.mxu0 0.0
        %v1673 = vand.u32 %v1206, 4294901760
        %1674 = vmatpush1.msra.mxu0 %v1673
        %1675 = vmatprep.subr.mxu0 0.0
        %v1676 = vand.u32 %v1207, 4294901760
        %1677 = vmatpush1.msra.mxu0 %v1676
        %1678 = vmatprep.subr.mxu0 0.0
        %v1679 = vand.u32 %v1208, 4294901760
        %1680 = vmatpush1.msra.mxu0 %v1679
        %1681 = vmatprep.subr.mxu0 0.0
        %1682 = vmatpush1.msra.mxu0 0.0
        %1683 = vmatprep.subr.mxu0 0.0
        %1684 = vmatpush1.msra.mxu0 0.0
        %1685 = vmatprep.subr.mxu0 0.0
        %1686 = vmatpush1.msra.mxu0 0.0
        %1687 = vmatprep.subr.mxu0 0.0
        %1688 = vmatpush1.msra.mxu0 0.0
        %1689 = vmatprep.subr.mxu0 0.0
        %1690 = vmatpush1.msra.mxu0 0.0
        %1691 = vmatprep.subr.mxu0 0.0
        %1692 = vmatpush1.msra.mxu0 0.0
        %1693 = vmatprep.subr.mxu0 0.0
        %1694 = vmatpush1.msra.mxu0 0.0
        %1695 = vmatprep.subr.mxu0 0.0
        %1696 = vmatpush1.msra.mxu0 0.0
        %1697 = vmatprep.subr.mxu0 0.0
        %1698 = vmatpush1.msra.mxu0 0.0
        %1699 = vmatprep.subr.mxu0 0.0
        %1700 = vmatpush1.msra.mxu0 0.0
        %1701 = vmatprep.subr.mxu0 0.0
        %1702 = vmatpush1.msra.mxu0 0.0
        %1703 = vmatprep.subr.mxu0 0.0
        %1704 = vmatpush1.msra.mxu0 0.0
        %1705 = vmatprep.subr.mxu0 0.0
        %1706 = vmatpush1.msra.mxu0 0.0
        %1707 = vmatprep.subr.mxu0 0.0
        %1708 = vmatpush1.msra.mxu0 0.0
        %1709 = vmatprep.subr.mxu0 0.0
        %1710 = vmatpush1.msra.mxu0 0.0
        %1711 = vmatprep.subr.mxu0 0.0
        %1712 = vmatpush1.msra.mxu0 0.0
        %1713 = vmatprep.subr.mxu0 0.0
        %1714 = vmatpush1.msra.mxu0 0.0
        %1715 = vmatprep.subr.mxu0 0.0
        %1716 = vmatpush1.msra.mxu0 0.0
        %1717 = vmatprep.subr.mxu0 0.0
        %1718 = vmatpush1.msra.mxu0 0.0
        %1719 = vmatprep.subr.mxu0 0.0
        %1720 = vmatpush1.msra.mxu0 0.0
        %1721 = vmatprep.subr.mxu0 0.0
        %1722 = vmatpush1.msra.mxu0 0.0
        %1723 = vmatprep.subr.mxu0 0.0
        %1724 = vmatpush1.msra.mxu0 0.0
        %1725 = vmatprep.subr.mxu0 0.0
        %1726 = vmatpush1.msra.mxu0 0.0
        %1727 = vmatprep.subr.mxu0 0.0
        %1728 = vmatpush1.msra.mxu0 0.0
        %1729 = vmatprep.subr.mxu0 0.0
        %1730 = vmatpush1.msra.mxu0 0.0
        %1731 = vmatprep.subr.mxu0 0.0
        %1732 = vmatpush1.msra.mxu0 0.0
        %1733 = vmatprep.subr.mxu0 0.0
        %1734 = vmatpush1.msra.mxu0 0.0
        %1735 = vmatprep.subr.mxu0 0.0
        %1736 = vmatpush1.msra.mxu0 0.0
        %1737 = vmatprep.mubr.f32.mxu0 0.0
        %v1738 = vand.u32 %v1217, 4294901760
        %1739 = vmatmul.mubr.f32.gmra.mrb[0].mxu0 %v1738
        %v1740 = vpop.f32.mrb[0].mxu0
        %v1741 = vadd.f32 %v1660, %v1740
        %v1742 = vpop.f32.mrb[0].mxu0
        %1743 = vmatprep.mubr.f32.mxu0 0.0
        %v1744 = vand.u32 %v1220, 4294901760
        %1745 = vmatmul.mubr.f32.gmra.mrb[0].mxu0 %v1744
        %v1746 = vpop.f32.mrb[0].mxu0
        %v1747 = vadd.f32 %v1666, %v1746
        %v1748 = vpop.f32.mrb[0].mxu0
        %1749 = vdwg.mxu0
        %v1750 = vld [vmem:[#allocation11] sm:$0xff]
        %v1751 = vld [vmem:[#allocation11 + $0x8] sm:$0xff]
        %v1752 = vld [vmem:[#allocation11 + $0x10] sm:$0xff]
        %v1753 = vld [vmem:[#allocation11 + $0x18] sm:$0xff]
        %v1754 = vld [vmem:[#allocation13] sm:$0x1]
        %v1756 = vlaneseq
        %v1757 = vshrl.u32 %v1756, 7
        %v1758 = vsub.s32 0, %v1757
        %v1759 = vrot.slane %v1754, %v1758
        %v1762 = vsel %vm670, %v657, 0
        %v1765 = vsel %vm670, %v658, 0
        %1767 = vmatprep.subr.mxu0 0.0
        %v1768 = vand.u32 %v1750, 4294901760
        %1769 = vmatpush1.msra.mxu0 %v1768
        %1770 = vmatprep.subr.mxu0 0.0
        %v1771 = vand.u32 %v1751, 4294901760
        %1772 = vmatpush1.msra.mxu0 %v1771
        %1773 = vmatprep.subr.mxu0 0.0
        %v1774 = vand.u32 %v1752, 4294901760
        %1775 = vmatpush1.msra.mxu0 %v1774
        %1776 = vmatprep.subr.mxu0 0.0
        %v1777 = vand.u32 %v1753, 4294901760
        %1778 = vmatpush1.msra.mxu0 %v1777
        %1779 = vmatprep.subr.mxu0 0.0
        %1780 = vmatpush1.msra.mxu0 0.0
        %1781 = vmatprep.subr.mxu0 0.0
        %1782 = vmatpush1.msra.mxu0 0.0
        %1783 = vmatprep.subr.mxu0 0.0
        %1784 = vmatpush1.msra.mxu0 0.0
        %1785 = vmatprep.subr.mxu0 0.0
        %1786 = vmatpush1.msra.mxu0 0.0
        %1787 = vmatprep.subr.mxu0 0.0
        %1788 = vmatpush1.msra.mxu0 0.0
        %1789 = vmatprep.subr.mxu0 0.0
        %1790 = vmatpush1.msra.mxu0 0.0
        %1791 = vmatprep.subr.mxu0 0.0
        %1792 = vmatpush1.msra.mxu0 0.0
        %1793 = vmatprep.subr.mxu0 0.0
        %1794 = vmatpush1.msra.mxu0 0.0
        %1795 = vmatprep.subr.mxu0 0.0
        %1796 = vmatpush1.msra.mxu0 0.0
        %1797 = vmatprep.subr.mxu0 0.0
        %1798 = vmatpush1.msra.mxu0 0.0
        %1799 = vmatprep.subr.mxu0 0.0
        %1800 = vmatpush1.msra.mxu0 0.0
        %1801 = vmatprep.subr.mxu0 0.0
        %1802 = vmatpush1.msra.mxu0 0.0
        %1803 = vmatprep.subr.mxu0 0.0
        %1804 = vmatpush1.msra.mxu0 0.0
        %1805 = vmatprep.subr.mxu0 0.0
        %1806 = vmatpush1.msra.mxu0 0.0
        %1807 = vmatprep.subr.mxu0 0.0
        %1808 = vmatpush1.msra.mxu0 0.0
        %1809 = vmatprep.subr.mxu0 0.0
        %1810 = vmatpush1.msra.mxu0 0.0
        %1811 = vmatprep.subr.mxu0 0.0
        %1812 = vmatpush1.msra.mxu0 0.0
        %1813 = vmatprep.subr.mxu0 0.0
        %1814 = vmatpush1.msra.mxu0 0.0
        %1815 = vmatprep.subr.mxu0 0.0
        %1816 = vmatpush1.msra.mxu0 0.0
        %1817 = vmatprep.subr.mxu0 0.0
        %1818 = vmatpush1.msra.mxu0 0.0
        %1819 = vmatprep.subr.mxu0 0.0
        %1820 = vmatpush1.msra.mxu0 0.0
        %1821 = vmatprep.subr.mxu0 0.0
        %1822 = vmatpush1.msra.mxu0 0.0
        %1823 = vmatprep.subr.mxu0 0.0
        %1824 = vmatpush1.msra.mxu0 0.0
        %1825 = vmatprep.subr.mxu0 0.0
        %1826 = vmatpush1.msra.mxu0 0.0
        %1827 = vmatprep.subr.mxu0 0.0
        %1828 = vmatpush1.msra.mxu0 0.0
        %1829 = vmatprep.subr.mxu0 0.0
        %1830 = vmatpush1.msra.mxu0 0.0
        %1831 = vmatprep.subr.mxu0 0.0
        %1832 = vmatpush1.msra.mxu0 0.0
        %1833 = vmatprep.subr.mxu0 0.0
        %1834 = vmatpush1.msra.mxu0 0.0
        %1835 = vmatprep.mubr.f32.mxu0 0.0
        %v1836 = vand.u32 %v1762, 4294901760
        %v1837 = vsub.f32 %v1762, %v1836
        %v1838 = vand.u32 %v1837, 4294901760
        %v1839 = vsub.f32 %v1837, %v1838
        %v1840 = vand.u32 %v1839, 4294901760
        %1841 = vmatmul.mubr.f32.gmra.mrb[0].mxu0 %v1840
        %v1842 = vpop.f32.mrb[0].mxu0
        %v1843 = vadd.f32 %v1759, %v1842
        %v1844 = vpop.f32.mrb[0].mxu0
        %1845 = vmatprep.mubr.f32.mxu0 0.0
        %v1846 = vand.u32 %v1765, 4294901760
        %v1847 = vsub.f32 %v1765, %v1846
        %v1848 = vand.u32 %v1847, 4294901760
        %v1849 = vsub.f32 %v1847, %v1848
        %v1850 = vand.u32 %v1849, 4294901760
        %1851 = vmatmul.mubr.f32.gmra.mrb[0].mxu0 %v1850
        %v1852 = vpop.f32.mrb[0].mxu0
        %v1853 = vadd.f32 %v1759, %v1852
        %v1854 = vpop.f32.mrb[0].mxu0
        %1855 = vdwg.mxu0
        %1856 = vmatprep.subr.mxu0 0.0
        %v1857 = vand.u32 %v1750, 4294901760
        %v1858 = vsub.f32 %v1750, %v1857
        %v1859 = vand.u32 %v1858, 4294901760
        %v1860 = vsub.f32 %v1858, %v1859
        %v1861 = vand.u32 %v1860, 4294901760
        %1862 = vmatpush1.msra.mxu0 %v1861
        %1863 = vmatprep.subr.mxu0 0.0
        %v1864 = vand.u32 %v1751, 4294901760
        %v1865 = vsub.f32 %v1751, %v1864
        %v1866 = vand.u32 %v1865, 4294901760
        %v1867 = vsub.f32 %v1865, %v1866
        %v1868 = vand.u32 %v1867, 4294901760
        %1869 = vmatpush1.msra.mxu0 %v1868
        %1870 = vmatprep.subr.mxu0 0.0
        %v1871 = vand.u32 %v1752, 4294901760
        %v1872 = vsub.f32 %v1752, %v1871
        %v1873 = vand.u32 %v1872, 4294901760
        %v1874 = vsub.f32 %v1872, %v1873
        %v1875 = vand.u32 %v1874, 4294901760
        %1876 = vmatpush1.msra.mxu0 %v1875
        %1877 = vmatprep.subr.mxu0 0.0
        %v1878 = vand.u32 %v1753, 4294901760
        %v1879 = vsub.f32 %v1753, %v1878
        %v1880 = vand.u32 %v1879, 4294901760
        %v1881 = vsub.f32 %v1879, %v1880
        %v1882 = vand.u32 %v1881, 4294901760
        %1883 = vmatpush1.msra.mxu0 %v1882
        %1884 = vmatprep.subr.mxu0 0.0
        %1885 = vmatpush1.msra.mxu0 0.0
        %1886 = vmatprep.subr.mxu0 0.0
        %1887 = vmatpush1.msra.mxu0 0.0
        %1888 = vmatprep.subr.mxu0 0.0
        %1889 = vmatpush1.msra.mxu0 0.0
        %1890 = vmatprep.subr.mxu0 0.0
        %1891 = vmatpush1.msra.mxu0 0.0
        %1892 = vmatprep.subr.mxu0 0.0
        %1893 = vmatpush1.msra.mxu0 0.0
        %1894 = vmatprep.subr.mxu0 0.0
        %1895 = vmatpush1.msra.mxu0 0.0
        %1896 = vmatprep.subr.mxu0 0.0
        %1897 = vmatpush1.msra.mxu0 0.0
        %1898 = vmatprep.subr.mxu0 0.0
        %1899 = vmatpush1.msra.mxu0 0.0
        %1900 = vmatprep.subr.mxu0 0.0
        %1901 = vmatpush1.msra.mxu0 0.0
        %1902 = vmatprep.subr.mxu0 0.0
        %1903 = vmatpush1.msra.mxu0 0.0
        %1904 = vmatprep.subr.mxu0 0.0
        %1905 = vmatpush1.msra.mxu0 0.0
        %1906 = vmatprep.subr.mxu0 0.0
        %1907 = vmatpush1.msra.mxu0 0.0
        %1908 = vmatprep.subr.mxu0 0.0
        %1909 = vmatpush1.msra.mxu0 0.0
        %1910 = vmatprep.subr.mxu0 0.0
        %1911 = vmatpush1.msra.mxu0 0.0
        %1912 = vmatprep.subr.mxu0 0.0
        %1913 = vmatpush1.msra.mxu0 0.0
        %1914 = vmatprep.subr.mxu0 0.0
        %1915 = vmatpush1.msra.mxu0 0.0
        %1916 = vmatprep.subr.mxu0 0.0
        %1917 = vmatpush1.msra.mxu0 0.0
        %1918 = vmatprep.subr.mxu0 0.0
        %1919 = vmatpush1.msra.mxu0 0.0
        %1920 = vmatprep.subr.mxu0 0.0
        %1921 = vmatpush1.msra.mxu0 0.0
        %1922 = vmatprep.subr.mxu0 0.0
        %1923 = vmatpush1.msra.mxu0 0.0
        %1924 = vmatprep.subr.mxu0 0.0
        %1925 = vmatpush1.msra.mxu0 0.0
        %1926 = vmatprep.subr.mxu0 0.0
        %1927 = vmatpush1.msra.mxu0 0.0
        %1928 = vmatprep.subr.mxu0 0.0
        %1929 = vmatpush1.msra.mxu0 0.0
        %1930 = vmatprep.subr.mxu0 0.0
        %1931 = vmatpush1.msra.mxu0 0.0
        %1932 = vmatprep.subr.mxu0 0.0
        %1933 = vmatpush1.msra.mxu0 0.0
        %1934 = vmatprep.subr.mxu0 0.0
        %1935 = vmatpush1.msra.mxu0 0.0
        %1936 = vmatprep.subr.mxu0 0.0
        %1937 = vmatpush1.msra.mxu0 0.0
        %1938 = vmatprep.subr.mxu0 0.0
        %1939 = vmatpush1.msra.mxu0 0.0
        %1940 = vmatprep.mubr.f32.mxu0 0.0
        %v1941 = vand.u32 %v1762, 4294901760
        %1942 = vmatmul.mubr.f32.gmra.mrb[0].mxu0 %v1941
        %v1943 = vpop.f32.mrb[0].mxu0
        %v1944 = vadd.f32 %v1843, %v1943
        %v1945 = vpop.f32.mrb[0].mxu0
        %1946 = vmatprep.mubr.f32.mxu0 0.0
        %v1947 = vand.u32 %v1765, 4294901760
        %1948 = vmatmul.mubr.f32.gmra.mrb[0].mxu0 %v1947
        %v1949 = vpop.f32.mrb[0].mxu0
        %v1950 = vadd.f32 %v1853, %v1949
        %v1951 = vpop.f32.mrb[0].mxu0
        %1952 = vdwg.mxu0
        %1953 = vmatprep.subr.mxu0 0.0
        %v1954 = vand.u32 %v1750, 4294901760
        %v1955 = vsub.f32 %v1750, %v1954
        %1956 = vmatpush1.msra.mxu0 %v1955
        %1957 = vmatprep.subr.mxu0 0.0
        %v1958 = vand.u32 %v1751, 4294901760
        %v1959 = vsub.f32 %v1751, %v1958
        %1960 = vmatpush1.msra.mxu0 %v1959
        %1961 = vmatprep.subr.mxu0 0.0
        %v1962 = vand.u32 %v1752, 4294901760
        %v1963 = vsub.f32 %v1752, %v1962
        %1964 = vmatpush1.msra.mxu0 %v1963
        %1965 = vmatprep.subr.mxu0 0.0
        %v1966 = vand.u32 %v1753, 4294901760
        %v1967 = vsub.f32 %v1753, %v1966
        %1968 = vmatpush1.msra.mxu0 %v1967
        %1969 = vmatprep.subr.mxu0 0.0
        %1970 = vmatpush1.msra.mxu0 0.0
        %1971 = vmatprep.subr.mxu0 0.0
        %1972 = vmatpush1.msra.mxu0 0.0
        %1973 = vmatprep.subr.mxu0 0.0
        %1974 = vmatpush1.msra.mxu0 0.0
        %1975 = vmatprep.subr.mxu0 0.0
        %1976 = vmatpush1.msra.mxu0 0.0
        %1977 = vmatprep.subr.mxu0 0.0
        %1978 = vmatpush1.msra.mxu0 0.0
        %1979 = vmatprep.subr.mxu0 0.0
        %1980 = vmatpush1.msra.mxu0 0.0
        %1981 = vmatprep.subr.mxu0 0.0
        %1982 = vmatpush1.msra.mxu0 0.0
        %1983 = vmatprep.subr.mxu0 0.0
        %1984 = vmatpush1.msra.mxu0 0.0
        %1985 = vmatprep.subr.mxu0 0.0
        %1986 = vmatpush1.msra.mxu0 0.0
        %1987 = vmatprep.subr.mxu0 0.0
        %1988 = vmatpush1.msra.mxu0 0.0
        %1989 = vmatprep.subr.mxu0 0.0
        %1990 = vmatpush1.msra.mxu0 0.0
        %1991 = vmatprep.subr.mxu0 0.0
        %1992 = vmatpush1.msra.mxu0 0.0
        %1993 = vmatprep.subr.mxu0 0.0
        %1994 = vmatpush1.msra.mxu0 0.0
        %1995 = vmatprep.subr.mxu0 0.0
        %1996 = vmatpush1.msra.mxu0 0.0
        %1997 = vmatprep.subr.mxu0 0.0
        %1998 = vmatpush1.msra.mxu0 0.0
        %1999 = vmatprep.subr.mxu0 0.0
        %2000 = vmatpush1.msra.mxu0 0.0
        %2001 = vmatprep.subr.mxu0 0.0
        %2002 = vmatpush1.msra.mxu0 0.0
        %2003 = vmatprep.subr.mxu0 0.0
        %2004 = vmatpush1.msra.mxu0 0.0
        %2005 = vmatprep.subr.mxu0 0.0
        %2006 = vmatpush1.msra.mxu0 0.0
        %2007 = vmatprep.subr.mxu0 0.0
        %2008 = vmatpush1.msra.mxu0 0.0
        %2009 = vmatprep.subr.mxu0 0.0
        %2010 = vmatpush1.msra.mxu0 0.0
        %2011 = vmatprep.subr.mxu0 0.0
        %2012 = vmatpush1.msra.mxu0 0.0
        %2013 = vmatprep.subr.mxu0 0.0
        %2014 = vmatpush1.msra.mxu0 0.0
        %2015 = vmatprep.subr.mxu0 0.0
        %2016 = vmatpush1.msra.mxu0 0.0
        %2017 = vmatprep.subr.mxu0 0.0
        %2018 = vmatpush1.msra.mxu0 0.0
        %2019 = vmatprep.subr.mxu0 0.0
        %2020 = vmatpush1.msra.mxu0 0.0
        %2021 = vmatprep.subr.mxu0 0.0
        %2022 = vmatpush1.msra.mxu0 0.0
        %2023 = vmatprep.subr.mxu0 0.0
        %2024 = vmatpush1.msra.mxu0 0.0
        %2025 = vmatprep.mubr.f32.mxu0 0.0
        %v2026 = vand.u32 %v1762, 4294901760
        %v2027 = vsub.f32 %v1762, %v2026
        %2028 = vmatmul.mubr.f32.gmra.mrb[0].mxu0 %v2027
        %v2029 = vpop.f32.mrb[0].mxu0
        %v2030 = vadd.f32 %v1944, %v2029
        %v2031 = vpop.f32.mrb[0].mxu0
        %2032 = vmatprep.mubr.f32.mxu0 0.0
        %v2033 = vand.u32 %v1765, 4294901760
        %v2034 = vsub.f32 %v1765, %v2033
        %2035 = vmatmul.mubr.f32.gmra.mrb[0].mxu0 %v2034
        %v2036 = vpop.f32.mrb[0].mxu0
        %v2037 = vadd.f32 %v1950, %v2036
        %v2038 = vpop.f32.mrb[0].mxu0
        %2039 = vdwg.mxu0
        %2040 = vmatprep.subr.mxu0 0.0
        %v2041 = vand.u32 %v1750, 4294901760
        %2042 = vmatpush1.msra.mxu0 %v2041
        %2043 = vmatprep.subr.mxu0 0.0
        %v2044 = vand.u32 %v1751, 4294901760
        %2045 = vmatpush1.msra.mxu0 %v2044
        %2046 = vmatprep.subr.mxu0 0.0
        %v2047 = vand.u32 %v1752, 4294901760
        %2048 = vmatpush1.msra.mxu0 %v2047
        %2049 = vmatprep.subr.mxu0 0.0
        %v2050 = vand.u32 %v1753, 4294901760
        %2051 = vmatpush1.msra.mxu0 %v2050
        %2052 = vmatprep.subr.mxu0 0.0
        %2053 = vmatpush1.msra.mxu0 0.0
        %2054 = vmatprep.subr.mxu0 0.0
        %2055 = vmatpush1.msra.mxu0 0.0
        %2056 = vmatprep.subr.mxu0 0.0
        %2057 = vmatpush1.msra.mxu0 0.0
        %2058 = vmatprep.subr.mxu0 0.0
        %2059 = vmatpush1.msra.mxu0 0.0
        %2060 = vmatprep.subr.mxu0 0.0
        %2061 = vmatpush1.msra.mxu0 0.0
        %2062 = vmatprep.subr.mxu0 0.0
        %2063 = vmatpush1.msra.mxu0 0.0
        %2064 = vmatprep.subr.mxu0 0.0
        %2065 = vmatpush1.msra.mxu0 0.0
        %2066 = vmatprep.subr.mxu0 0.0
        %2067 = vmatpush1.msra.mxu0 0.0
        %2068 = vmatprep.subr.mxu0 0.0
        %2069 = vmatpush1.msra.mxu0 0.0
        %2070 = vmatprep.subr.mxu0 0.0
        %2071 = vmatpush1.msra.mxu0 0.0
        %2072 = vmatprep.subr.mxu0 0.0
        %2073 = vmatpush1.msra.mxu0 0.0
        %2074 = vmatprep.subr.mxu0 0.0
        %2075 = vmatpush1.msra.mxu0 0.0
        %2076 = vmatprep.subr.mxu0 0.0
        %2077 = vmatpush1.msra.mxu0 0.0
        %2078 = vmatprep.subr.mxu0 0.0
        %2079 = vmatpush1.msra.mxu0 0.0
        %2080 = vmatprep.subr.mxu0 0.0
        %2081 = vmatpush1.msra.mxu0 0.0
        %2082 = vmatprep.subr.mxu0 0.0
        %2083 = vmatpush1.msra.mxu0 0.0
        %2084 = vmatprep.subr.mxu0 0.0
        %2085 = vmatpush1.msra.mxu0 0.0
        %2086 = vmatprep.subr.mxu0 0.0
        %2087 = vmatpush1.msra.mxu0 0.0
        %2088 = vmatprep.subr.mxu0 0.0
        %2089 = vmatpush1.msra.mxu0 0.0
        %2090 = vmatprep.subr.mxu0 0.0
        %2091 = vmatpush1.msra.mxu0 0.0
        %2092 = vmatprep.subr.mxu0 0.0
        %2093 = vmatpush1.msra.mxu0 0.0
        %2094 = vmatprep.subr.mxu0 0.0
        %2095 = vmatpush1.msra.mxu0 0.0
        %2096 = vmatprep.subr.mxu0 0.0
        %2097 = vmatpush1.msra.mxu0 0.0
        %2098 = vmatprep.subr.mxu0 0.0
        %2099 = vmatpush1.msra.mxu0 0.0
        %2100 = vmatprep.subr.mxu0 0.0
        %2101 = vmatpush1.msra.mxu0 0.0
        %2102 = vmatprep.subr.mxu0 0.0
        %2103 = vmatpush1.msra.mxu0 0.0
        %2104 = vmatprep.subr.mxu0 0.0
        %2105 = vmatpush1.msra.mxu0 0.0
        %2106 = vmatprep.subr.mxu0 0.0
        %2107 = vmatpush1.msra.mxu0 0.0
        %2108 = vmatprep.mubr.f32.mxu0 0.0
        %v2109 = vand.u32 %v1762, 4294901760
        %v2110 = vsub.f32 %v1762, %v2109
        %v2111 = vand.u32 %v2110, 4294901760
        %2112 = vmatmul.mubr.f32.gmra.mrb[0].mxu0 %v2111
        %v2113 = vpop.f32.mrb[0].mxu0
        %v2114 = vadd.f32 %v2030, %v2113
        %v2115 = vpop.f32.mrb[0].mxu0
        %2116 = vmatprep.mubr.f32.mxu0 0.0
        %v2117 = vand.u32 %v1765, 4294901760
        %v2118 = vsub.f32 %v1765, %v2117
        %v2119 = vand.u32 %v2118, 4294901760
        %2120 = vmatmul.mubr.f32.gmra.mrb[0].mxu0 %v2119
        %v2121 = vpop.f32.mrb[0].mxu0
        %v2122 = vadd.f32 %v2037, %v2121
        %v2123 = vpop.f32.mrb[0].mxu0
        %2124 = vdwg.mxu0
        %2125 = vmatprep.subr.mxu0 0.0
        %v2126 = vand.u32 %v1750, 4294901760
        %v2127 = vsub.f32 %v1750, %v2126
        %v2128 = vand.u32 %v2127, 4294901760
        %2129 = vmatpush1.msra.mxu0 %v2128
        %2130 = vmatprep.subr.mxu0 0.0
        %v2131 = vand.u32 %v1751, 4294901760
        %v2132 = vsub.f32 %v1751, %v2131
        %v2133 = vand.u32 %v2132, 4294901760
        %2134 = vmatpush1.msra.mxu0 %v2133
        %2135 = vmatprep.subr.mxu0 0.0
        %v2136 = vand.u32 %v1752, 4294901760
        %v2137 = vsub.f32 %v1752, %v2136
        %v2138 = vand.u32 %v2137, 4294901760
        %2139 = vmatpush1.msra.mxu0 %v2138
        %2140 = vmatprep.subr.mxu0 0.0
        %v2141 = vand.u32 %v1753, 4294901760
        %v2142 = vsub.f32 %v1753, %v2141
        %v2143 = vand.u32 %v2142, 4294901760
        %2144 = vmatpush1.msra.mxu0 %v2143
        %2145 = vmatprep.subr.mxu0 0.0
        %2146 = vmatpush1.msra.mxu0 0.0
        %2147 = vmatprep.subr.mxu0 0.0
        %2148 = vmatpush1.msra.mxu0 0.0
        %2149 = vmatprep.subr.mxu0 0.0
        %2150 = vmatpush1.msra.mxu0 0.0
        %2151 = vmatprep.subr.mxu0 0.0
        %2152 = vmatpush1.msra.mxu0 0.0
        %2153 = vmatprep.subr.mxu0 0.0
        %2154 = vmatpush1.msra.mxu0 0.0
        %2155 = vmatprep.subr.mxu0 0.0
        %2156 = vmatpush1.msra.mxu0 0.0
        %2157 = vmatprep.subr.mxu0 0.0
        %2158 = vmatpush1.msra.mxu0 0.0
        %2159 = vmatprep.subr.mxu0 0.0
        %2160 = vmatpush1.msra.mxu0 0.0
        %2161 = vmatprep.subr.mxu0 0.0
        %2162 = vmatpush1.msra.mxu0 0.0
        %2163 = vmatprep.subr.mxu0 0.0
        %2164 = vmatpush1.msra.mxu0 0.0
        %2165 = vmatprep.subr.mxu0 0.0
        %2166 = vmatpush1.msra.mxu0 0.0
        %2167 = vmatprep.subr.mxu0 0.0
        %2168 = vmatpush1.msra.mxu0 0.0
        %2169 = vmatprep.subr.mxu0 0.0
        %2170 = vmatpush1.msra.mxu0 0.0
        %2171 = vmatprep.subr.mxu0 0.0
        %2172 = vmatpush1.msra.mxu0 0.0
        %2173 = vmatprep.subr.mxu0 0.0
        %2174 = vmatpush1.msra.mxu0 0.0
        %2175 = vmatprep.subr.mxu0 0.0
        %2176 = vmatpush1.msra.mxu0 0.0
        %2177 = vmatprep.subr.mxu0 0.0
        %2178 = vmatpush1.msra.mxu0 0.0
        %2179 = vmatprep.subr.mxu0 0.0
        %2180 = vmatpush1.msra.mxu0 0.0
        %2181 = vmatprep.subr.mxu0 0.0
        %2182 = vmatpush1.msra.mxu0 0.0
        %2183 = vmatprep.subr.mxu0 0.0
        %2184 = vmatpush1.msra.mxu0 0.0
        %2185 = vmatprep.subr.mxu0 0.0
        %2186 = vmatpush1.msra.mxu0 0.0
        %2187 = vmatprep.subr.mxu0 0.0
        %2188 = vmatpush1.msra.mxu0 0.0
        %2189 = vmatprep.subr.mxu0 0.0
        %2190 = vmatpush1.msra.mxu0 0.0
        %2191 = vmatprep.subr.mxu0 0.0
        %2192 = vmatpush1.msra.mxu0 0.0
        %2193 = vmatprep.subr.mxu0 0.0
        %2194 = vmatpush1.msra.mxu0 0.0
        %2195 = vmatprep.subr.mxu0 0.0
        %2196 = vmatpush1.msra.mxu0 0.0
        %2197 = vmatprep.subr.mxu0 0.0
        %2198 = vmatpush1.msra.mxu0 0.0
        %2199 = vmatprep.subr.mxu0 0.0
        %2200 = vmatpush1.msra.mxu0 0.0
        %2201 = vmatprep.mubr.f32.mxu0 0.0
        %v2202 = vand.u32 %v1762, 4294901760
        %2203 = vmatmul.mubr.f32.gmra.mrb[0].mxu0 %v2202
        %v2204 = vpop.f32.mrb[0].mxu0
        %v2205 = vadd.f32 %v2114, %v2204
        %v2206 = vpop.f32.mrb[0].mxu0
        %2207 = vmatprep.mubr.f32.mxu0 0.0
        %v2208 = vand.u32 %v1765, 4294901760
        %2209 = vmatmul.mubr.f32.gmra.mrb[0].mxu0 %v2208
        %v2210 = vpop.f32.mrb[0].mxu0
        %v2211 = vadd.f32 %v2122, %v2210
        %v2212 = vpop.f32.mrb[0].mxu0
        %2213 = vdwg.mxu0
        %2214 = vmatprep.subr.mxu0 0.0
        %v2215 = vand.u32 %v1750, 4294901760
        %2216 = vmatpush1.msra.mxu0 %v2215
        %2217 = vmatprep.subr.mxu0 0.0
        %v2218 = vand.u32 %v1751, 4294901760
        %2219 = vmatpush1.msra.mxu0 %v2218
        %2220 = vmatprep.subr.mxu0 0.0
        %v2221 = vand.u32 %v1752, 4294901760
        %2222 = vmatpush1.msra.mxu0 %v2221
        %2223 = vmatprep.subr.mxu0 0.0
        %v2224 = vand.u32 %v1753, 4294901760
        %2225 = vmatpush1.msra.mxu0 %v2224
        %2226 = vmatprep.subr.mxu0 0.0
        %2227 = vmatpush1.msra.mxu0 0.0
        %2228 = vmatprep.subr.mxu0 0.0
        %2229 = vmatpush1.msra.mxu0 0.0
        %2230 = vmatprep.subr.mxu0 0.0
        %2231 = vmatpush1.msra.mxu0 0.0
        %2232 = vmatprep.subr.mxu0 0.0
        %2233 = vmatpush1.msra.mxu0 0.0
        %2234 = vmatprep.subr.mxu0 0.0
        %2235 = vmatpush1.msra.mxu0 0.0
        %2236 = vmatprep.subr.mxu0 0.0
        %2237 = vmatpush1.msra.mxu0 0.0
        %2238 = vmatprep.subr.mxu0 0.0
        %2239 = vmatpush1.msra.mxu0 0.0
        %2240 = vmatprep.subr.mxu0 0.0
        %2241 = vmatpush1.msra.mxu0 0.0
        %2242 = vmatprep.subr.mxu0 0.0
        %2243 = vmatpush1.msra.mxu0 0.0
        %2244 = vmatprep.subr.mxu0 0.0
        %2245 = vmatpush1.msra.mxu0 0.0
        %2246 = vmatprep.subr.mxu0 0.0
        %2247 = vmatpush1.msra.mxu0 0.0
        %2248 = vmatprep.subr.mxu0 0.0
        %2249 = vmatpush1.msra.mxu0 0.0
        %2250 = vmatprep.subr.mxu0 0.0
        %2251 = vmatpush1.msra.mxu0 0.0
        %2252 = vmatprep.subr.mxu0 0.0
        %2253 = vmatpush1.msra.mxu0 0.0
        %2254 = vmatprep.subr.mxu0 0.0
        %2255 = vmatpush1.msra.mxu0 0.0
        %2256 = vmatprep.subr.mxu0 0.0
        %2257 = vmatpush1.msra.mxu0 0.0
        %2258 = vmatprep.subr.mxu0 0.0
        %2259 = vmatpush1.msra.mxu0 0.0
        %2260 = vmatprep.subr.mxu0 0.0
        %2261 = vmatpush1.msra.mxu0 0.0
        %2262 = vmatprep.subr.mxu0 0.0
        %2263 = vmatpush1.msra.mxu0 0.0
        %2264 = vmatprep.subr.mxu0 0.0
        %2265 = vmatpush1.msra.mxu0 0.0
        %2266 = vmatprep.subr.mxu0 0.0
        %2267 = vmatpush1.msra.mxu0 0.0
        %2268 = vmatprep.subr.mxu0 0.0
        %2269 = vmatpush1.msra.mxu0 0.0
        %2270 = vmatprep.subr.mxu0 0.0
        %2271 = vmatpush1.msra.mxu0 0.0
        %2272 = vmatprep.subr.mxu0 0.0
        %2273 = vmatpush1.msra.mxu0 0.0
        %2274 = vmatprep.subr.mxu0 0.0
        %2275 = vmatpush1.msra.mxu0 0.0
        %2276 = vmatprep.subr.mxu0 0.0
        %2277 = vmatpush1.msra.mxu0 0.0
        %2278 = vmatprep.subr.mxu0 0.0
        %2279 = vmatpush1.msra.mxu0 0.0
        %2280 = vmatprep.subr.mxu0 0.0
        %2281 = vmatpush1.msra.mxu0 0.0
        %2282 = vmatprep.mubr.f32.mxu0 0.0
        %v2283 = vand.u32 %v1762, 4294901760
        %2284 = vmatmul.mubr.f32.gmra.mrb[0].mxu0 %v2283
        %v2285 = vpop.f32.mrb[0].mxu0
        %v2286 = vadd.f32 %v2205, %v2285
        %v2287 = vpop.f32.mrb[0].mxu0
        %2288 = vmatprep.mubr.f32.mxu0 0.0
        %v2289 = vand.u32 %v1765, 4294901760
        %2290 = vmatmul.mubr.f32.gmra.mrb[0].mxu0 %v2289
        %v2291 = vpop.f32.mrb[0].mxu0
        %v2292 = vadd.f32 %v2211, %v2291
        %v2293 = vpop.f32.mrb[0].mxu0
        %2294 = vdwg.mxu0
        %vm2295 = vcmask 130048
        %v2297 = vsel %vm2295, %v1196, 0
        %v2300 = vsel %vm2295, %v1202, 0
        %v2303 = vsel %vm2295, %v1741, 0
        %v2306 = vsel %vm2295, %v1747, 0
        %2308 = vmatprep.subr.mxu0 0.0
        %v2309 = vand.u32 %v2303, 4294901760
        %2310 = vmatpush1.xpose.msra.mxu0 %v2309
        %2311 = vmatprep.subr.mxu0 0.0
        %v2312 = vand.u32 %v2306, 4294901760
        %2313 = vmatpush1.xpose.msra.mxu0 %v2312
        %2314 = vmatprep.subr.mxu0 0.0
        %2315 = vmatpush1.xpose.msra.mxu0 0.0
        %2316 = vmatprep.subr.mxu0 0.0
        %2317 = vmatpush1.xpose.msra.mxu0 0.0
        %2318 = vmatprep.subr.mxu0 0.0
        %2319 = vmatpush1.xpose.msra.mxu0 0.0
        %2320 = vmatprep.subr.mxu0 0.0
        %2321 = vmatpush1.xpose.msra.mxu0 0.0
        %2322 = vmatprep.subr.mxu0 0.0
        %2323 = vmatpush1.xpose.msra.mxu0 0.0
        %2324 = vmatprep.subr.mxu0 0.0
        %2325 = vmatpush1.xpose.msra.mxu0 0.0
        %2326 = vmatprep.subr.mxu0 0.0
        %2327 = vmatpush1.xpose.msra.mxu0 0.0
        %2328 = vmatprep.subr.mxu0 0.0
        %2329 = vmatpush1.xpose.msra.mxu0 0.0
        %2330 = vmatprep.subr.mxu0 0.0
        %2331 = vmatpush1.xpose.msra.mxu0 0.0
        %2332 = vmatprep.subr.mxu0 0.0
        %2333 = vmatpush1.xpose.msra.mxu0 0.0
        %2334 = vmatprep.subr.mxu0 0.0
        %2335 = vmatpush1.xpose.msra.mxu0 0.0
        %2336 = vmatprep.subr.mxu0 0.0
        %2337 = vmatpush1.xpose.msra.mxu0 0.0
        %2338 = vmatprep.subr.mxu0 0.0
        %2339 = vmatpush1.xpose.msra.mxu0 0.0
        %2340 = vmatprep.subr.mxu0 0.0
        %2341 = vmatpush1.xpose.msra.mxu0 0.0
        %2342 = vmatprep.subr.mxu0 0.0
        %2343 = vmatpush1.xpose.msra.mxu0 0.0
        %2344 = vmatprep.subr.mxu0 0.0
        %2345 = vmatpush1.xpose.msra.mxu0 0.0
        %2346 = vmatprep.subr.mxu0 0.0
        %2347 = vmatpush1.xpose.msra.mxu0 0.0
        %2348 = vmatprep.subr.mxu0 0.0
        %2349 = vmatpush1.xpose.msra.mxu0 0.0
        %2350 = vmatprep.subr.mxu0 0.0
        %2351 = vmatpush1.xpose.msra.mxu0 0.0
        %2352 = vmatprep.subr.mxu0 0.0
        %2353 = vmatpush1.xpose.msra.mxu0 0.0
        %2354 = vmatprep.subr.mxu0 0.0
        %2355 = vmatpush1.xpose.msra.mxu0 0.0
        %2356 = vmatprep.subr.mxu0 0.0
        %2357 = vmatpush1.xpose.msra.mxu0 0.0
        %2358 = vmatprep.subr.mxu0 0.0
        %2359 = vmatpush1.xpose.msra.mxu0 0.0
        %2360 = vmatprep.subr.mxu0 0.0
        %2361 = vmatpush1.xpose.msra.mxu0 0.0
        %2362 = vmatprep.subr.mxu0 0.0
        %2363 = vmatpush1.xpose.msra.mxu0 0.0
        %2364 = vmatprep.subr.mxu0 0.0
        %2365 = vmatpush1.xpose.msra.mxu0 0.0
        %2366 = vmatprep.subr.mxu0 0.0
        %2367 = vmatpush1.xpose.msra.mxu0 0.0
        %2368 = vmatprep.subr.mxu0 0.0
        %2369 = vmatpush1.xpose.msra.mxu0 0.0
        %2370 = vmatprep.subr.mxu0 0.0
        %2371 = vmatpush1.xpose.msra.mxu0 0.0
        %2372 = vmatprep.subr.mxu0 0.0
        %2373 = vmatpush1.xpose.msra.mxu0 0.0
        %2374 = vmatprep.mubr.f32.mxu0 0.0
        %v2375 = vand.u32 %v2297, 4294901760
        %v2376 = vsub.f32 %v2297, %v2375
        %v2377 = vand.u32 %v2376, 4294901760
        %v2378 = vsub.f32 %v2376, %v2377
        %v2379 = vand.u32 %v2378, 4294901760
        %2380 = vmatmul.mubr.f32.gmra.mrb[0].mxu0 %v2379
        %v2381 = vpop.f32.mrb[0].mxu0
        %v2382 = vadd.f32 0.0, %v2381
        %v2383 = vpop.f32.mrb[0].mxu0
        %2384 = vmatprep.mubr.f32.mxu0 0.0
        %v2385 = vand.u32 %v2300, 4294901760
        %v2386 = vsub.f32 %v2300, %v2385
        %v2387 = vand.u32 %v2386, 4294901760
        %v2388 = vsub.f32 %v2386, %v2387
        %v2389 = vand.u32 %v2388, 4294901760
        %2390 = vmatmul.mubr.f32.gmra.mrb[0].mxu0 %v2389
        %v2391 = vpop.f32.mrb[0].mxu0
        %v2392 = vadd.f32 0.0, %v2391
        %v2393 = vpop.f32.mrb[0].mxu0
        %2394 = vdwg.mxu0
        %2395 = vmatprep.subr.mxu0 0.0
        %v2396 = vand.u32 %v2303, 4294901760
        %v2397 = vsub.f32 %v2303, %v2396
        %v2398 = vand.u32 %v2397, 4294901760
        %v2399 = vsub.f32 %v2397, %v2398
        %v2400 = vand.u32 %v2399, 4294901760
        %2401 = vmatpush1.xpose.msra.mxu0 %v2400
        %2402 = vmatprep.subr.mxu0 0.0
        %v2403 = vand.u32 %v2306, 4294901760
        %v2404 = vsub.f32 %v2306, %v2403
        %v2405 = vand.u32 %v2404, 4294901760
        %v2406 = vsub.f32 %v2404, %v2405
        %v2407 = vand.u32 %v2406, 4294901760
        %2408 = vmatpush1.xpose.msra.mxu0 %v2407
        %2409 = vmatprep.subr.mxu0 0.0
        %2410 = vmatpush1.xpose.msra.mxu0 0.0
        %2411 = vmatprep.subr.mxu0 0.0
        %2412 = vmatpush1.xpose.msra.mxu0 0.0
        %2413 = vmatprep.subr.mxu0 0.0
        %2414 = vmatpush1.xpose.msra.mxu0 0.0
        %2415 = vmatprep.subr.mxu0 0.0
        %2416 = vmatpush1.xpose.msra.mxu0 0.0
        %2417 = vmatprep.subr.mxu0 0.0
        %2418 = vmatpush1.xpose.msra.mxu0 0.0
        %2419 = vmatprep.subr.mxu0 0.0
        %2420 = vmatpush1.xpose.msra.mxu0 0.0
        %2421 = vmatprep.subr.mxu0 0.0
        %2422 = vmatpush1.xpose.msra.mxu0 0.0
        %2423 = vmatprep.subr.mxu0 0.0
        %2424 = vmatpush1.xpose.msra.mxu0 0.0
        %2425 = vmatprep.subr.mxu0 0.0
        %2426 = vmatpush1.xpose.msra.mxu0 0.0
        %2427 = vmatprep.subr.mxu0 0.0
        %2428 = vmatpush1.xpose.msra.mxu0 0.0
        %2429 = vmatprep.subr.mxu0 0.0
        %2430 = vmatpush1.xpose.msra.mxu0 0.0
        %2431 = vmatprep.subr.mxu0 0.0
        %2432 = vmatpush1.xpose.msra.mxu0 0.0
        %2433 = vmatprep.subr.mxu0 0.0
        %2434 = vmatpush1.xpose.msra.mxu0 0.0
        %2435 = vmatprep.subr.mxu0 0.0
        %2436 = vmatpush1.xpose.msra.mxu0 0.0
        %2437 = vmatprep.subr.mxu0 0.0
        %2438 = vmatpush1.xpose.msra.mxu0 0.0
        %2439 = vmatprep.subr.mxu0 0.0
        %2440 = vmatpush1.xpose.msra.mxu0 0.0
        %2441 = vmatprep.subr.mxu0 0.0
        %2442 = vmatpush1.xpose.msra.mxu0 0.0
        %2443 = vmatprep.subr.mxu0 0.0
        %2444 = vmatpush1.xpose.msra.mxu0 0.0
        %2445 = vmatprep.subr.mxu0 0.0
        %2446 = vmatpush1.xpose.msra.mxu0 0.0
        %2447 = vmatprep.subr.mxu0 0.0
        %2448 = vmatpush1.xpose.msra.mxu0 0.0
        %2449 = vmatprep.subr.mxu0 0.0
        %2450 = vmatpush1.xpose.msra.mxu0 0.0
        %2451 = vmatprep.subr.mxu0 0.0
        %2452 = vmatpush1.xpose.msra.mxu0 0.0
        %2453 = vmatprep.subr.mxu0 0.0
        %2454 = vmatpush1.xpose.msra.mxu0 0.0
        %2455 = vmatprep.subr.mxu0 0.0
        %2456 = vmatpush1.xpose.msra.mxu0 0.0
        %2457 = vmatprep.subr.mxu0 0.0
        %2458 = vmatpush1.xpose.msra.mxu0 0.0
        %2459 = vmatprep.subr.mxu0 0.0
        %2460 = vmatpush1.xpose.msra.mxu0 0.0
        %2461 = vmatprep.subr.mxu0 0.0
        %2462 = vmatpush1.xpose.msra.mxu0 0.0
        %2463 = vmatprep.subr.mxu0 0.0
        %2464 = vmatpush1.xpose.msra.mxu0 0.0
        %2465 = vmatprep.subr.mxu0 0.0
        %2466 = vmatpush1.xpose.msra.mxu0 0.0
        %2467 = vmatprep.subr.mxu0 0.0
        %2468 = vmatpush1.xpose.msra.mxu0 0.0
        %2469 = vmatprep.mubr.f32.mxu0 0.0
        %v2470 = vand.u32 %v2297, 4294901760
        %2471 = vmatmul.mubr.f32.gmra.mrb[0].mxu0 %v2470
        %v2472 = vpop.f32.mrb[0].mxu0
        %v2473 = vadd.f32 %v2382, %v2472
        %v2474 = vpop.f32.mrb[0].mxu0
        %2475 = vmatprep.mubr.f32.mxu0 0.0
        %v2476 = vand.u32 %v2300, 4294901760
        %2477 = vmatmul.mubr.f32.gmra.mrb[0].mxu0 %v2476
        %v2478 = vpop.f32.mrb[0].mxu0
        %v2479 = vadd.f32 %v2392, %v2478
        %v2480 = vpop.f32.mrb[0].mxu0
        %2481 = vdwg.mxu0
        %2482 = vmatprep.subr.mxu0 0.0
        %v2483 = vand.u32 %v2303, 4294901760
        %v2484 = vsub.f32 %v2303, %v2483
        %2485 = vmatpush1.xpose.msra.mxu0 %v2484
        %2486 = vmatprep.subr.mxu0 0.0
        %v2487 = vand.u32 %v2306, 4294901760
        %v2488 = vsub.f32 %v2306, %v2487
        %2489 = vmatpush1.xpose.msra.mxu0 %v2488
        %2490 = vmatprep.subr.mxu0 0.0
        %2491 = vmatpush1.xpose.msra.mxu0 0.0
        %2492 = vmatprep.subr.mxu0 0.0
        %2493 = vmatpush1.xpose.msra.mxu0 0.0
        %2494 = vmatprep.subr.mxu0 0.0
        %2495 = vmatpush1.xpose.msra.mxu0 0.0
        %2496 = vmatprep.subr.mxu0 0.0
        %2497 = vmatpush1.xpose.msra.mxu0 0.0
        %2498 = vmatprep.subr.mxu0 0.0
        %2499 = vmatpush1.xpose.msra.mxu0 0.0
        %2500 = vmatprep.subr.mxu0 0.0
        %2501 = vmatpush1.xpose.msra.mxu0 0.0
        %2502 = vmatprep.subr.mxu0 0.0
        %2503 = vmatpush1.xpose.msra.mxu0 0.0
        %2504 = vmatprep.subr.mxu0 0.0
        %2505 = vmatpush1.xpose.msra.mxu0 0.0
        %2506 = vmatprep.subr.mxu0 0.0
        %2507 = vmatpush1.xpose.msra.mxu0 0.0
        %2508 = vmatprep.subr.mxu0 0.0
        %2509 = vmatpush1.xpose.msra.mxu0 0.0
        %2510 = vmatprep.subr.mxu0 0.0
        %2511 = vmatpush1.xpose.msra.mxu0 0.0
        %2512 = vmatprep.subr.mxu0 0.0
        %2513 = vmatpush1.xpose.msra.mxu0 0.0
        %2514 = vmatprep.subr.mxu0 0.0
        %2515 = vmatpush1.xpose.msra.mxu0 0.0
        %2516 = vmatprep.subr.mxu0 0.0
        %2517 = vmatpush1.xpose.msra.mxu0 0.0
        %2518 = vmatprep.subr.mxu0 0.0
        %2519 = vmatpush1.xpose.msra.mxu0 0.0
        %2520 = vmatprep.subr.mxu0 0.0
        %2521 = vmatpush1.xpose.msra.mxu0 0.0
        %2522 = vmatprep.subr.mxu0 0.0
        %2523 = vmatpush1.xpose.msra.mxu0 0.0
        %2524 = vmatprep.subr.mxu0 0.0
        %2525 = vmatpush1.xpose.msra.mxu0 0.0
        %2526 = vmatprep.subr.mxu0 0.0
        %2527 = vmatpush1.xpose.msra.mxu0 0.0
        %2528 = vmatprep.subr.mxu0 0.0
        %2529 = vmatpush1.xpose.msra.mxu0 0.0
        %2530 = vmatprep.subr.mxu0 0.0
        %2531 = vmatpush1.xpose.msra.mxu0 0.0
        %2532 = vmatprep.subr.mxu0 0.0
        %2533 = vmatpush1.xpose.msra.mxu0 0.0
        %2534 = vmatprep.subr.mxu0 0.0
        %2535 = vmatpush1.xpose.msra.mxu0 0.0
        %2536 = vmatprep.subr.mxu0 0.0
        %2537 = vmatpush1.xpose.msra.mxu0 0.0
        %2538 = vmatprep.subr.mxu0 0.0
        %2539 = vmatpush1.xpose.msra.mxu0 0.0
        %2540 = vmatprep.subr.mxu0 0.0
        %2541 = vmatpush1.xpose.msra.mxu0 0.0
        %2542 = vmatprep.subr.mxu0 0.0
        %2543 = vmatpush1.xpose.msra.mxu0 0.0
        %2544 = vmatprep.subr.mxu0 0.0
        %2545 = vmatpush1.xpose.msra.mxu0 0.0
        %2546 = vmatprep.subr.mxu0 0.0
        %2547 = vmatpush1.xpose.msra.mxu0 0.0
        %2548 = vmatprep.subr.mxu0 0.0
        %2549 = vmatpush1.xpose.msra.mxu0 0.0
        %2550 = vmatprep.mubr.f32.mxu0 0.0
        %v2551 = vand.u32 %v2297, 4294901760
        %v2552 = vsub.f32 %v2297, %v2551
        %2553 = vmatmul.mubr.f32.gmra.mrb[0].mxu0 %v2552
        %v2554 = vpop.f32.mrb[0].mxu0
        %v2555 = vadd.f32 %v2473, %v2554
        %v2556 = vpop.f32.mrb[0].mxu0
        %2557 = vmatprep.mubr.f32.mxu0 0.0
        %v2558 = vand.u32 %v2300, 4294901760
        %v2559 = vsub.f32 %v2300, %v2558
        %2560 = vmatmul.mubr.f32.gmra.mrb[0].mxu0 %v2559
        %v2561 = vpop.f32.mrb[0].mxu0
        %v2562 = vadd.f32 %v2479, %v2561
        %v2563 = vpop.f32.mrb[0].mxu0
        %2564 = vdwg.mxu0
        %2565 = vmatprep.subr.mxu0 0.0
        %v2566 = vand.u32 %v2303, 4294901760
        %2567 = vmatpush1.xpose.msra.mxu0 %v2566
        %2568 = vmatprep.subr.mxu0 0.0
        %v2569 = vand.u32 %v2306, 4294901760
        %2570 = vmatpush1.xpose.msra.mxu0 %v2569
        %2571 = vmatprep.subr.mxu0 0.0
        %2572 = vmatpush1.xpose.msra.mxu0 0.0
        %2573 = vmatprep.subr.mxu0 0.0
        %2574 = vmatpush1.xpose.msra.mxu0 0.0
        %2575 = vmatprep.subr.mxu0 0.0
        %2576 = vmatpush1.xpose.msra.mxu0 0.0
        %2577 = vmatprep.subr.mxu0 0.0
        %2578 = vmatpush1.xpose.msra.mxu0 0.0
        %2579 = vmatprep.subr.mxu0 0.0
        %2580 = vmatpush1.xpose.msra.mxu0 0.0
        %2581 = vmatprep.subr.mxu0 0.0
        %2582 = vmatpush1.xpose.msra.mxu0 0.0
        %2583 = vmatprep.subr.mxu0 0.0
        %2584 = vmatpush1.xpose.msra.mxu0 0.0
        %2585 = vmatprep.subr.mxu0 0.0
        %2586 = vmatpush1.xpose.msra.mxu0 0.0
        %2587 = vmatprep.subr.mxu0 0.0
        %2588 = vmatpush1.xpose.msra.mxu0 0.0
        %2589 = vmatprep.subr.mxu0 0.0
        %2590 = vmatpush1.xpose.msra.mxu0 0.0
        %2591 = vmatprep.subr.mxu0 0.0
        %2592 = vmatpush1.xpose.msra.mxu0 0.0
        %2593 = vmatprep.subr.mxu0 0.0
        %2594 = vmatpush1.xpose.msra.mxu0 0.0
        %2595 = vmatprep.subr.mxu0 0.0
        %2596 = vmatpush1.xpose.msra.mxu0 0.0
        %2597 = vmatprep.subr.mxu0 0.0
        %2598 = vmatpush1.xpose.msra.mxu0 0.0
        %2599 = vmatprep.subr.mxu0 0.0
        %2600 = vmatpush1.xpose.msra.mxu0 0.0
        %2601 = vmatprep.subr.mxu0 0.0
        %2602 = vmatpush1.xpose.msra.mxu0 0.0
        %2603 = vmatprep.subr.mxu0 0.0
        %2604 = vmatpush1.xpose.msra.mxu0 0.0
        %2605 = vmatprep.subr.mxu0 0.0
        %2606 = vmatpush1.xpose.msra.mxu0 0.0
        %2607 = vmatprep.subr.mxu0 0.0
        %2608 = vmatpush1.xpose.msra.mxu0 0.0
        %2609 = vmatprep.subr.mxu0 0.0
        %2610 = vmatpush1.xpose.msra.mxu0 0.0
        %2611 = vmatprep.subr.mxu0 0.0
        %2612 = vmatpush1.xpose.msra.mxu0 0.0
        %2613 = vmatprep.subr.mxu0 0.0
        %2614 = vmatpush1.xpose.msra.mxu0 0.0
        %2615 = vmatprep.subr.mxu0 0.0
        %2616 = vmatpush1.xpose.msra.mxu0 0.0
        %2617 = vmatprep.subr.mxu0 0.0
        %2618 = vmatpush1.xpose.msra.mxu0 0.0
        %2619 = vmatprep.subr.mxu0 0.0
        %2620 = vmatpush1.xpose.msra.mxu0 0.0
        %2621 = vmatprep.subr.mxu0 0.0
        %2622 = vmatpush1.xpose.msra.mxu0 0.0
        %2623 = vmatprep.subr.mxu0 0.0
        %2624 = vmatpush1.xpose.msra.mxu0 0.0
        %2625 = vmatprep.subr.mxu0 0.0
        %2626 = vmatpush1.xpose.msra.mxu0 0.0
        %2627 = vmatprep.subr.mxu0 0.0
        %2628 = vmatpush1.xpose.msra.mxu0 0.0
        %2629 = vmatprep.subr.mxu0 0.0
        %2630 = vmatpush1.xpose.msra.mxu0 0.0
        %2631 = vmatprep.mubr.f32.mxu0 0.0
        %v2632 = vand.u32 %v2297, 4294901760
        %v2633 = vsub.f32 %v2297, %v2632
        %v2634 = vand.u32 %v2633, 4294901760
        %2635 = vmatmul.mubr.f32.gmra.mrb[0].mxu0 %v2634
        %v2636 = vpop.f32.mrb[0].mxu0
        %v2637 = vadd.f32 %v2555, %v2636
        %v2638 = vpop.f32.mrb[0].mxu0
        %2639 = vmatprep.mubr.f32.mxu0 0.0
        %v2640 = vand.u32 %v2300, 4294901760
        %v2641 = vsub.f32 %v2300, %v2640
        %v2642 = vand.u32 %v2641, 4294901760
        %2643 = vmatmul.mubr.f32.gmra.mrb[0].mxu0 %v2642
        %v2644 = vpop.f32.mrb[0].mxu0
        %v2645 = vadd.f32 %v2562, %v2644
        %v2646 = vpop.f32.mrb[0].mxu0
        %2647 = vdwg.mxu0
        %2648 = vmatprep.subr.mxu0 0.0
        %v2649 = vand.u32 %v2303, 4294901760
        %v2650 = vsub.f32 %v2303, %v2649
        %v2651 = vand.u32 %v2650, 4294901760
        %2652 = vmatpush1.xpose.msra.mxu0 %v2651
        %2653 = vmatprep.subr.mxu0 0.0
        %v2654 = vand.u32 %v2306, 4294901760
        %v2655 = vsub.f32 %v2306, %v2654
        %v2656 = vand.u32 %v2655, 4294901760
        %2657 = vmatpush1.xpose.msra.mxu0 %v2656
        %2658 = vmatprep.subr.mxu0 0.0
        %2659 = vmatpush1.xpose.msra.mxu0 0.0
        %2660 = vmatprep.subr.mxu0 0.0
        %2661 = vmatpush1.xpose.msra.mxu0 0.0
        %2662 = vmatprep.subr.mxu0 0.0
        %2663 = vmatpush1.xpose.msra.mxu0 0.0
        %2664 = vmatprep.subr.mxu0 0.0
        %2665 = vmatpush1.xpose.msra.mxu0 0.0
        %2666 = vmatprep.subr.mxu0 0.0
        %2667 = vmatpush1.xpose.msra.mxu0 0.0
        %2668 = vmatprep.subr.mxu0 0.0
        %2669 = vmatpush1.xpose.msra.mxu0 0.0
        %2670 = vmatprep.subr.mxu0 0.0
        %2671 = vmatpush1.xpose.msra.mxu0 0.0
        %2672 = vmatprep.subr.mxu0 0.0
        %2673 = vmatpush1.xpose.msra.mxu0 0.0
        %2674 = vmatprep.subr.mxu0 0.0
        %2675 = vmatpush1.xpose.msra.mxu0 0.0
        %2676 = vmatprep.subr.mxu0 0.0
        %2677 = vmatpush1.xpose.msra.mxu0 0.0
        %2678 = vmatprep.subr.mxu0 0.0
        %2679 = vmatpush1.xpose.msra.mxu0 0.0
        %2680 = vmatprep.subr.mxu0 0.0
        %2681 = vmatpush1.xpose.msra.mxu0 0.0
        %2682 = vmatprep.subr.mxu0 0.0
        %2683 = vmatpush1.xpose.msra.mxu0 0.0
        %2684 = vmatprep.subr.mxu0 0.0
        %2685 = vmatpush1.xpose.msra.mxu0 0.0
        %2686 = vmatprep.subr.mxu0 0.0
        %2687 = vmatpush1.xpose.msra.mxu0 0.0
        %2688 = vmatprep.subr.mxu0 0.0
        %2689 = vmatpush1.xpose.msra.mxu0 0.0
        %2690 = vmatprep.subr.mxu0 0.0
        %2691 = vmatpush1.xpose.msra.mxu0 0.0
        %2692 = vmatprep.subr.mxu0 0.0
        %2693 = vmatpush1.xpose.msra.mxu0 0.0
        %2694 = vmatprep.subr.mxu0 0.0
        %2695 = vmatpush1.xpose.msra.mxu0 0.0
        %2696 = vmatprep.subr.mxu0 0.0
        %2697 = vmatpush1.xpose.msra.mxu0 0.0
        %2698 = vmatprep.subr.mxu0 0.0
        %2699 = vmatpush1.xpose.msra.mxu0 0.0
        %2700 = vmatprep.subr.mxu0 0.0
        %2701 = vmatpush1.xpose.msra.mxu0 0.0
        %2702 = vmatprep.subr.mxu0 0.0
        %2703 = vmatpush1.xpose.msra.mxu0 0.0
        %2704 = vmatprep.subr.mxu0 0.0
        %2705 = vmatpush1.xpose.msra.mxu0 0.0
        %2706 = vmatprep.subr.mxu0 0.0
        %2707 = vmatpush1.xpose.msra.mxu0 0.0
        %2708 = vmatprep.subr.mxu0 0.0
        %2709 = vmatpush1.xpose.msra.mxu0 0.0
        %2710 = vmatprep.subr.mxu0 0.0
        %2711 = vmatpush1.xpose.msra.mxu0 0.0
        %2712 = vmatprep.subr.mxu0 0.0
        %2713 = vmatpush1.xpose.msra.mxu0 0.0
        %2714 = vmatprep.subr.mxu0 0.0
        %2715 = vmatpush1.xpose.msra.mxu0 0.0
        %2716 = vmatprep.subr.mxu0 0.0
        %2717 = vmatpush1.xpose.msra.mxu0 0.0
        %2718 = vmatprep.mubr.f32.mxu0 0.0
        %v2719 = vand.u32 %v2297, 4294901760
        %2720 = vmatmul.mubr.f32.gmra.mrb[0].mxu0 %v2719
        %v2721 = vpop.f32.mrb[0].mxu0
        %v2722 = vadd.f32 %v2637, %v2721
        %v2723 = vpop.f32.mrb[0].mxu0
        %2724 = vmatprep.mubr.f32.mxu0 0.0
        %v2725 = vand.u32 %v2300, 4294901760
        %2726 = vmatmul.mubr.f32.gmra.mrb[0].mxu0 %v2725
        %v2727 = vpop.f32.mrb[0].mxu0
        %v2728 = vadd.f32 %v2645, %v2727
        %v2729 = vpop.f32.mrb[0].mxu0
        %2730 = vdwg.mxu0
        %2731 = vmatprep.subr.mxu0 0.0
        %v2732 = vand.u32 %v2303, 4294901760
        %2733 = vmatpush1.xpose.msra.mxu0 %v2732
        %2734 = vmatprep.subr.mxu0 0.0
        %v2735 = vand.u32 %v2306, 4294901760
        %2736 = vmatpush1.xpose.msra.mxu0 %v2735
        %2737 = vmatprep.subr.mxu0 0.0
        %2738 = vmatpush1.xpose.msra.mxu0 0.0
        %2739 = vmatprep.subr.mxu0 0.0
        %2740 = vmatpush1.xpose.msra.mxu0 0.0
        %2741 = vmatprep.subr.mxu0 0.0
        %2742 = vmatpush1.xpose.msra.mxu0 0.0
        %2743 = vmatprep.subr.mxu0 0.0
        %2744 = vmatpush1.xpose.msra.mxu0 0.0
        %2745 = vmatprep.subr.mxu0 0.0
        %2746 = vmatpush1.xpose.msra.mxu0 0.0
        %2747 = vmatprep.subr.mxu0 0.0
        %2748 = vmatpush1.xpose.msra.mxu0 0.0
        %2749 = vmatprep.subr.mxu0 0.0
        %2750 = vmatpush1.xpose.msra.mxu0 0.0
        %2751 = vmatprep.subr.mxu0 0.0
        %2752 = vmatpush1.xpose.msra.mxu0 0.0
        %2753 = vmatprep.subr.mxu0 0.0
        %2754 = vmatpush1.xpose.msra.mxu0 0.0
        %2755 = vmatprep.subr.mxu0 0.0
        %2756 = vmatpush1.xpose.msra.mxu0 0.0
        %2757 = vmatprep.subr.mxu0 0.0
        %2758 = vmatpush1.xpose.msra.mxu0 0.0
        %2759 = vmatprep.subr.mxu0 0.0
        %2760 = vmatpush1.xpose.msra.mxu0 0.0
        %2761 = vmatprep.subr.mxu0 0.0
        %2762 = vmatpush1.xpose.msra.mxu0 0.0
        %2763 = vmatprep.subr.mxu0 0.0
        %2764 = vmatpush1.xpose.msra.mxu0 0.0
        %2765 = vmatprep.subr.mxu0 0.0
        %2766 = vmatpush1.xpose.msra.mxu0 0.0
        %2767 = vmatprep.subr.mxu0 0.0
        %2768 = vmatpush1.xpose.msra.mxu0 0.0
        %2769 = vmatprep.subr.mxu0 0.0
        %2770 = vmatpush1.xpose.msra.mxu0 0.0
        %2771 = vmatprep.subr.mxu0 0.0
        %2772 = vmatpush1.xpose.msra.mxu0 0.0
        %2773 = vmatprep.subr.mxu0 0.0
        %2774 = vmatpush1.xpose.msra.mxu0 0.0
        %2775 = vmatprep.subr.mxu0 0.0
        %2776 = vmatpush1.xpose.msra.mxu0 0.0
        %2777 = vmatprep.subr.mxu0 0.0
        %2778 = vmatpush1.xpose.msra.mxu0 0.0
        %2779 = vmatprep.subr.mxu0 0.0
        %2780 = vmatpush1.xpose.msra.mxu0 0.0
        %2781 = vmatprep.subr.mxu0 0.0
        %2782 = vmatpush1.xpose.msra.mxu0 0.0
        %2783 = vmatprep.subr.mxu0 0.0
        %2784 = vmatpush1.xpose.msra.mxu0 0.0
        %2785 = vmatprep.subr.mxu0 0.0
        %2786 = vmatpush1.xpose.msra.mxu0 0.0
        %2787 = vmatprep.subr.mxu0 0.0
        %2788 = vmatpush1.xpose.msra.mxu0 0.0
        %2789 = vmatprep.subr.mxu0 0.0
        %2790 = vmatpush1.xpose.msra.mxu0 0.0
        %2791 = vmatprep.subr.mxu0 0.0
        %2792 = vmatpush1.xpose.msra.mxu0 0.0
        %2793 = vmatprep.subr.mxu0 0.0
        %2794 = vmatpush1.xpose.msra.mxu0 0.0
        %2795 = vmatprep.subr.mxu0 0.0
        %2796 = vmatpush1.xpose.msra.mxu0 0.0
        %2797 = vmatprep.mubr.f32.mxu0 0.0
        %v2798 = vand.u32 %v2297, 4294901760
        %2799 = vmatmul.mubr.f32.gmra.mrb[0].mxu0 %v2798
        %v2800 = vpop.f32.mrb[0].mxu0
        %v2801 = vadd.f32 %v2722, %v2800
        %v2802 = vpop.f32.mrb[0].mxu0
        %2803 = vmatprep.mubr.f32.mxu0 0.0
        %v2804 = vand.u32 %v2300, 4294901760
        %2805 = vmatmul.mubr.f32.gmra.mrb[0].mxu0 %v2804
        %v2806 = vpop.f32.mrb[0].mxu0
        %v2807 = vadd.f32 %v2728, %v2806
        %v2808 = vpop.f32.mrb[0].mxu0
        %2809 = vdwg.mxu0
        %v2810 = vsel %vm2295, %v2801, -inf
        %2811 = vmax.xlane.f32.xlu0 %v2810
        %v2812 = vpop.xlane.xlu0 %2811
        %v2813 = vsel %vm2295, %v2807, -inf
        %2814 = vmax.xlane.f32.xlu0 %v2813
        %v2815 = vpop.xlane.xlu0 %2814
        %v2816 = vsub.f32 %v2801, %v2812
        %v2817 = vsub.f32 %v2807, %v2815
        %v2818 = vmul.f32 %v2816, 1.442695
        %v2819 = vpow.pop %v2818
        %v2820 = vmul.f32 %v2817, 1.442695
        %v2821 = vpow.pop %v2820
        %v2822 = vsel %vm2295, %v2819, 0.0
        %2823 = vadd.xlane.f32.xlu0 %v2822
        %v2824 = vpop.xlane.xlu0 %2823
        %v2825 = vsel %vm2295, %v2821, 0.0
        %2826 = vadd.xlane.f32.xlu0 %v2825
        %v2827 = vpop.xlane.xlu0 %2826
        %v2828 = vrcp.pop %v2824
        %v2829 = vmul.f32 %v2819, %v2828
        %v2830 = vrcp.pop %v2827
        %v2831 = vmul.f32 %v2821, %v2830
        %2832 = vst.msk [vmem:[%s649] sm:$0xff] %vm2295, %v2829
        %2833 = vst.msk [vmem:[%s649 + $0x8] sm:$0xff] %vm2295, %v2831
        %v2835 = vsel %vm2295, %v2829, 0
        %v2838 = vsel %vm2295, %v2831, 0
        %2840 = vmatprep.subr.mxu0 0.0
        %v2841 = vand.u32 %v2286, 4294901760
        %2842 = vmatpush1.msra.mxu0 %v2841
        %2843 = vmatprep.subr.mxu0 0.0
        %v2844 = vand.u32 %v2292, 4294901760
        %2845 = vmatpush1.msra.mxu0 %v2844
        %2846 = vmatprep.subr.mxu0 0.0
        %2847 = vmatpush1.msra.mxu0 0.0
        %2848 = vmatprep.subr.mxu0 0.0
        %2849 = vmatpush1.msra.mxu0 0.0
        %2850 = vmatprep.subr.mxu0 0.0
        %2851 = vmatpush1.msra.mxu0 0.0
        %2852 = vmatprep.subr.mxu0 0.0
        %2853 = vmatpush1.msra.mxu0 0.0
        %2854 = vmatprep.subr.mxu0 0.0
        %2855 = vmatpush1.msra.mxu0 0.0
        %2856 = vmatprep.subr.mxu0 0.0
        %2857 = vmatpush1.msra.mxu0 0.0
        %2858 = vmatprep.subr.mxu0 0.0
        %2859 = vmatpush1.msra.mxu0 0.0
        %2860 = vmatprep.subr.mxu0 0.0
        %2861 = vmatpush1.msra.mxu0 0.0
        %2862 = vmatprep.subr.mxu0 0.0
        %2863 = vmatpush1.msra.mxu0 0.0
        %2864 = vmatprep.subr.mxu0 0.0
        %2865 = vmatpush1.msra.mxu0 0.0
        %2866 = vmatprep.subr.mxu0 0.0
        %2867 = vmatpush1.msra.mxu0 0.0
        %2868 = vmatprep.subr.mxu0 0.0
        %2869 = vmatpush1.msra.mxu0 0.0
        %2870 = vmatprep.subr.mxu0 0.0
        %2871 = vmatpush1.msra.mxu0 0.0
        %2872 = vmatprep.subr.mxu0 0.0
        %2873 = vmatpush1.msra.mxu0 0.0
        %2874 = vmatprep.subr.mxu0 0.0
        %2875 = vmatpush1.msra.mxu0 0.0
        %2876 = vmatprep.subr.mxu0 0.0
        %2877 = vmatpush1.msra.mxu0 0.0
        %2878 = vmatprep.subr.mxu0 0.0
        %2879 = vmatpush1.msra.mxu0 0.0
        %2880 = vmatprep.subr.mxu0 0.0
        %2881 = vmatpush1.msra.mxu0 0.0
        %2882 = vmatprep.subr.mxu0 0.0
        %2883 = vmatpush1.msra.mxu0 0.0
        %2884 = vmatprep.subr.mxu0 0.0
        %2885 = vmatpush1.msra.mxu0 0.0
        %2886 = vmatprep.subr.mxu0 0.0
        %2887 = vmatpush1.msra.mxu0 0.0
        %2888 = vmatprep.subr.mxu0 0.0
        %2889 = vmatpush1.msra.mxu0 0.0
        %2890 = vmatprep.subr.mxu0 0.0
        %2891 = vmatpush1.msra.mxu0 0.0
        %2892 = vmatprep.subr.mxu0 0.0
        %2893 = vmatpush1.msra.mxu0 0.0
        %2894 = vmatprep.subr.mxu0 0.0
        %2895 = vmatpush1.msra.mxu0 0.0
        %2896 = vmatprep.subr.mxu0 0.0
        %2897 = vmatpush1.msra.mxu0 0.0
        %2898 = vmatprep.subr.mxu0 0.0
        %2899 = vmatpush1.msra.mxu0 0.0
        %2900 = vmatprep.subr.mxu0 0.0
        %2901 = vmatpush1.msra.mxu0 0.0
        %2902 = vmatprep.subr.mxu0 0.0
        %2903 = vmatpush1.msra.mxu0 0.0
        %2904 = vmatprep.subr.mxu0 0.0
        %2905 = vmatpush1.msra.mxu0 0.0
        %2906 = vmatprep.mubr.f32.mxu0 0.0
        %v2907 = vand.u32 %v2835, 4294901760
        %v2908 = vsub.f32 %v2835, %v2907
        %v2909 = vand.u32 %v2908, 4294901760
        %v2910 = vsub.f32 %v2908, %v2909
        %v2911 = vand.u32 %v2910, 4294901760
        %2912 = vmatmul.mubr.f32.gmra.mrb[0].mxu0 %v2911
        %v2913 = vpop.f32.mrb[0].mxu0
        %v2914 = vadd.f32 0.0, %v2913
        %v2915 = vpop.f32.mrb[0].mxu0
        %2916 = vmatprep.mubr.f32.mxu0 0.0
        %v2917 = vand.u32 %v2838, 4294901760
        %v2918 = vsub.f32 %v2838, %v2917
        %v2919 = vand.u32 %v2918, 4294901760
        %v2920 = vsub.f32 %v2918, %v2919
        %v2921 = vand.u32 %v2920, 4294901760
        %2922 = vmatmul.mubr.f32.gmra.mrb[0].mxu0 %v2921
        %v2923 = vpop.f32.mrb[0].mxu0
        %v2924 = vadd.f32 0.0, %v2923
        %v2925 = vpop.f32.mrb[0].mxu0
        %2926 = vdwg.mxu0
        %2927 = vmatprep.subr.mxu0 0.0
        %v2928 = vand.u32 %v2286, 4294901760
        %v2929 = vsub.f32 %v2286, %v2928
        %v2930 = vand.u32 %v2929, 4294901760
        %v2931 = vsub.f32 %v2929, %v2930
        %v2932 = vand.u32 %v2931, 4294901760
        %2933 = vmatpush1.msra.mxu0 %v2932
        %2934 = vmatprep.subr.mxu0 0.0
        %v2935 = vand.u32 %v2292, 4294901760
        %v2936 = vsub.f32 %v2292, %v2935
        %v2937 = vand.u32 %v2936, 4294901760
        %v2938 = vsub.f32 %v2936, %v2937
        %v2939 = vand.u32 %v2938, 4294901760
        %2940 = vmatpush1.msra.mxu0 %v2939
        %2941 = vmatprep.subr.mxu0 0.0
        %2942 = vmatpush1.msra.mxu0 0.0
        %2943 = vmatprep.subr.mxu0 0.0
        %2944 = vmatpush1.msra.mxu0 0.0
        %2945 = vmatprep.subr.mxu0 0.0
        %2946 = vmatpush1.msra.mxu0 0.0
        %2947 = vmatprep.subr.mxu0 0.0
        %2948 = vmatpush1.msra.mxu0 0.0
        %2949 = vmatprep.subr.mxu0 0.0
        %2950 = vmatpush1.msra.mxu0 0.0
        %2951 = vmatprep.subr.mxu0 0.0
        %2952 = vmatpush1.msra.mxu0 0.0
        %2953 = vmatprep.subr.mxu0 0.0
        %2954 = vmatpush1.msra.mxu0 0.0
        %2955 = vmatprep.subr.mxu0 0.0
        %2956 = vmatpush1.msra.mxu0 0.0
        %2957 = vmatprep.subr.mxu0 0.0
        %2958 = vmatpush1.msra.mxu0 0.0
        %2959 = vmatprep.subr.mxu0 0.0
        %2960 = vmatpush1.msra.mxu0 0.0
        %2961 = vmatprep.subr.mxu0 0.0
        %2962 = vmatpush1.msra.mxu0 0.0
        %2963 = vmatprep.subr.mxu0 0.0
        %2964 = vmatpush1.msra.mxu0 0.0
        %2965 = vmatprep.subr.mxu0 0.0
        %2966 = vmatpush1.msra.mxu0 0.0
        %2967 = vmatprep.subr.mxu0 0.0
        %2968 = vmatpush1.msra.mxu0 0.0
        %2969 = vmatprep.subr.mxu0 0.0
        %2970 = vmatpush1.msra.mxu0 0.0
        %2971 = vmatprep.subr.mxu0 0.0
        %2972 = vmatpush1.msra.mxu0 0.0
        %2973 = vmatprep.subr.mxu0 0.0
        %2974 = vmatpush1.msra.mxu0 0.0
        %2975 = vmatprep.subr.mxu0 0.0
        %2976 = vmatpush1.msra.mxu0 0.0
        %2977 = vmatprep.subr.mxu0 0.0
        %2978 = vmatpush1.msra.mxu0 0.0
        %2979 = vmatprep.subr.mxu0 0.0
        %2980 = vmatpush1.msra.mxu0 0.0
        %2981 = vmatprep.subr.mxu0 0.0
        %2982 = vmatpush1.msra.mxu0 0.0
        %2983 = vmatprep.subr.mxu0 0.0
        %2984 = vmatpush1.msra.mxu0 0.0
        %2985 = vmatprep.subr.mxu0 0.0
        %2986 = vmatpush1.msra.mxu0 0.0
        %2987 = vmatprep.subr.mxu0 0.0
        %2988 = vmatpush1.msra.mxu0 0.0
        %2989 = vmatprep.subr.mxu0 0.0
        %2990 = vmatpush1.msra.mxu0 0.0
        %2991 = vmatprep.subr.mxu0 0.0
        %2992 = vmatpush1.msra.mxu0 0.0
        %2993 = vmatprep.subr.mxu0 0.0
        %2994 = vmatpush1.msra.mxu0 0.0
        %2995 = vmatprep.subr.mxu0 0.0
        %2996 = vmatpush1.msra.mxu0 0.0
        %2997 = vmatprep.subr.mxu0 0.0
        %2998 = vmatpush1.msra.mxu0 0.0
        %2999 = vmatprep.subr.mxu0 0.0
        %3000 = vmatpush1.msra.mxu0 0.0
        %3001 = vmatprep.mubr.f32.mxu0 0.0
        %v3002 = vand.u32 %v2835, 4294901760
        %3003 = vmatmul.mubr.f32.gmra.mrb[0].mxu0 %v3002
        %v3004 = vpop.f32.mrb[0].mxu0
        %v3005 = vadd.f32 %v2914, %v3004
        %v3006 = vpop.f32.mrb[0].mxu0
        %3007 = vmatprep.mubr.f32.mxu0 0.0
        %v3008 = vand.u32 %v2838, 4294901760
        %3009 = vmatmul.mubr.f32.gmra.mrb[0].mxu0 %v3008
        %v3010 = vpop.f32.mrb[0].mxu0
        %v3011 = vadd.f32 %v2924, %v3010
        %v3012 = vpop.f32.mrb[0].mxu0
        %3013 = vdwg.mxu0
        %3014 = vmatprep.subr.mxu0 0.0
        %v3015 = vand.u32 %v2286, 4294901760
        %v3016 = vsub.f32 %v2286, %v3015
        %3017 = vmatpush1.msra.mxu0 %v3016
        %3018 = vmatprep.subr.mxu0 0.0
        %v3019 = vand.u32 %v2292, 4294901760
        %v3020 = vsub.f32 %v2292, %v3019
        %3021 = vmatpush1.msra.mxu0 %v3020
        %3022 = vmatprep.subr.mxu0 0.0
        %3023 = vmatpush1.msra.mxu0 0.0
        %3024 = vmatprep.subr.mxu0 0.0
        %3025 = vmatpush1.msra.mxu0 0.0
        %3026 = vmatprep.subr.mxu0 0.0
        %3027 = vmatpush1.msra.mxu0 0.0
        %3028 = vmatprep.subr.mxu0 0.0
        %3029 = vmatpush1.msra.mxu0 0.0
        %3030 = vmatprep.subr.mxu0 0.0
        %3031 = vmatpush1.msra.mxu0 0.0
        %3032 = vmatprep.subr.mxu0 0.0
        %3033 = vmatpush1.msra.mxu0 0.0
        %3034 = vmatprep.subr.mxu0 0.0
        %3035 = vmatpush1.msra.mxu0 0.0
        %3036 = vmatprep.subr.mxu0 0.0
        %3037 = vmatpush1.msra.mxu0 0.0
        %3038 = vmatprep.subr.mxu0 0.0
        %3039 = vmatpush1.msra.mxu0 0.0
        %3040 = vmatprep.subr.mxu0 0.0
        %3041 = vmatpush1.msra.mxu0 0.0
        %3042 = vmatprep.subr.mxu0 0.0
        %3043 = vmatpush1.msra.mxu0 0.0
        %3044 = vmatprep.subr.mxu0 0.0
        %3045 = vmatpush1.msra.mxu0 0.0
        %3046 = vmatprep.subr.mxu0 0.0
        %3047 = vmatpush1.msra.mxu0 0.0
        %3048 = vmatprep.subr.mxu0 0.0
        %3049 = vmatpush1.msra.mxu0 0.0
        %3050 = vmatprep.subr.mxu0 0.0
        %3051 = vmatpush1.msra.mxu0 0.0
        %3052 = vmatprep.subr.mxu0 0.0
        %3053 = vmatpush1.msra.mxu0 0.0
        %3054 = vmatprep.subr.mxu0 0.0
        %3055 = vmatpush1.msra.mxu0 0.0
        %3056 = vmatprep.subr.mxu0 0.0
        %3057 = vmatpush1.msra.mxu0 0.0
        %3058 = vmatprep.subr.mxu0 0.0
        %3059 = vmatpush1.msra.mxu0 0.0
        %3060 = vmatprep.subr.mxu0 0.0
        %3061 = vmatpush1.msra.mxu0 0.0
        %3062 = vmatprep.subr.mxu0 0.0
        %3063 = vmatpush1.msra.mxu0 0.0
        %3064 = vmatprep.subr.mxu0 0.0
        %3065 = vmatpush1.msra.mxu0 0.0
        %3066 = vmatprep.subr.mxu0 0.0
        %3067 = vmatpush1.msra.mxu0 0.0
        %3068 = vmatprep.subr.mxu0 0.0
        %3069 = vmatpush1.msra.mxu0 0.0
        %3070 = vmatprep.subr.mxu0 0.0
        %3071 = vmatpush1.msra.mxu0 0.0
        %3072 = vmatprep.subr.mxu0 0.0
        %3073 = vmatpush1.msra.mxu0 0.0
        %3074 = vmatprep.subr.mxu0 0.0
        %3075 = vmatpush1.msra.mxu0 0.0
        %3076 = vmatprep.subr.mxu0 0.0
        %3077 = vmatpush1.msra.mxu0 0.0
        %3078 = vmatprep.subr.mxu0 0.0
        %3079 = vmatpush1.msra.mxu0 0.0
        %3080 = vmatprep.subr.mxu0 0.0
        %3081 = vmatpush1.msra.mxu0 0.0
        %3082 = vmatprep.mubr.f32.mxu0 0.0
        %v3083 = vand.u32 %v2835, 4294901760
        %v3084 = vsub.f32 %v2835, %v3083
        %3085 = vmatmul.mubr.f32.gmra.mrb[0].mxu0 %v3084
        %v3086 = vpop.f32.mrb[0].mxu0
        %v3087 = vadd.f32 %v3005, %v3086
        %v3088 = vpop.f32.mrb[0].mxu0
        %3089 = vmatprep.mubr.f32.mxu0 0.0
        %v3090 = vand.u32 %v2838, 4294901760
        %v3091 = vsub.f32 %v2838, %v3090
        %3092 = vmatmul.mubr.f32.gmra.mrb[0].mxu0 %v3091
        %v3093 = vpop.f32.mrb[0].mxu0
        %v3094 = vadd.f32 %v3011, %v3093
        %v3095 = vpop.f32.mrb[0].mxu0
        %3096 = vdwg.mxu0
        %3097 = vmatprep.subr.mxu0 0.0
        %v3098 = vand.u32 %v2286, 4294901760
        %3099 = vmatpush1.msra.mxu0 %v3098
        %3100 = vmatprep.subr.mxu0 0.0
        %v3101 = vand.u32 %v2292, 4294901760
        %3102 = vmatpush1.msra.mxu0 %v3101
        %3103 = vmatprep.subr.mxu0 0.0
        %3104 = vmatpush1.msra.mxu0 0.0
        %3105 = vmatprep.subr.mxu0 0.0
        %3106 = vmatpush1.msra.mxu0 0.0
        %3107 = vmatprep.subr.mxu0 0.0
        %3108 = vmatpush1.msra.mxu0 0.0
        %3109 = vmatprep.subr.mxu0 0.0
        %3110 = vmatpush1.msra.mxu0 0.0
        %3111 = vmatprep.subr.mxu0 0.0
        %3112 = vmatpush1.msra.mxu0 0.0
        %3113 = vmatprep.subr.mxu0 0.0
        %3114 = vmatpush1.msra.mxu0 0.0
        %3115 = vmatprep.subr.mxu0 0.0
        %3116 = vmatpush1.msra.mxu0 0.0
        %3117 = vmatprep.subr.mxu0 0.0
        %3118 = vmatpush1.msra.mxu0 0.0
        %3119 = vmatprep.subr.mxu0 0.0
        %3120 = vmatpush1.msra.mxu0 0.0
        %3121 = vmatprep.subr.mxu0 0.0
        %3122 = vmatpush1.msra.mxu0 0.0
        %3123 = vmatprep.subr.mxu0 0.0
        %3124 = vmatpush1.msra.mxu0 0.0
        %3125 = vmatprep.subr.mxu0 0.0
        %3126 = vmatpush1.msra.mxu0 0.0
        %3127 = vmatprep.subr.mxu0 0.0
        %3128 = vmatpush1.msra.mxu0 0.0
        %3129 = vmatprep.subr.mxu0 0.0
        %3130 = vmatpush1.msra.mxu0 0.0
        %3131 = vmatprep.subr.mxu0 0.0
        %3132 = vmatpush1.msra.mxu0 0.0
        %3133 = vmatprep.subr.mxu0 0.0
        %3134 = vmatpush1.msra.mxu0 0.0
        %3135 = vmatprep.subr.mxu0 0.0
        %3136 = vmatpush1.msra.mxu0 0.0
        %3137 = vmatprep.subr.mxu0 0.0
        %3138 = vmatpush1.msra.mxu0 0.0
        %3139 = vmatprep.subr.mxu0 0.0
        %3140 = vmatpush1.msra.mxu0 0.0
        %3141 = vmatprep.subr.mxu0 0.0
        %3142 = vmatpush1.msra.mxu0 0.0
        %3143 = vmatprep.subr.mxu0 0.0
        %3144 = vmatpush1.msra.mxu0 0.0
        %3145 = vmatprep.subr.mxu0 0.0
        %3146 = vmatpush1.msra.mxu0 0.0
        %3147 = vmatprep.subr.mxu0 0.0
        %3148 = vmatpush1.msra.mxu0 0.0
        %3149 = vmatprep.subr.mxu0 0.0
        %3150 = vmatpush1.msra.mxu0 0.0
        %3151 = vmatprep.subr.mxu0 0.0
        %3152 = vmatpush1.msra.mxu0 0.0
        %3153 = vmatprep.subr.mxu0 0.0
        %3154 = vmatpush1.msra.mxu0 0.0
        %3155 = vmatprep.subr.mxu0 0.0
        %3156 = vmatpush1.msra.mxu0 0.0
        %3157 = vmatprep.subr.mxu0 0.0
        %3158 = vmatpush1.msra.mxu0 0.0
        %3159 = vmatprep.subr.mxu0 0.0
        %3160 = vmatpush1.msra.mxu0 0.0
        %3161 = vmatprep.subr.mxu0 0.0
        %3162 = vmatpush1.msra.mxu0 0.0
        %3163 = vmatprep.mubr.f32.mxu0 0.0
        %v3164 = vand.u32 %v2835, 4294901760
        %v3165 = vsub.f32 %v2835, %v3164
        %v3166 = vand.u32 %v3165, 4294901760
        %3167 = vmatmul.mubr.f32.gmra.mrb[0].mxu0 %v3166
        %v3168 = vpop.f32.mrb[0].mxu0
        %v3169 = vadd.f32 %v3087, %v3168
        %v3170 = vpop.f32.mrb[0].mxu0
        %3171 = vmatprep.mubr.f32.mxu0 0.0
        %v3172 = vand.u32 %v2838, 4294901760
        %v3173 = vsub.f32 %v2838, %v3172
        %v3174 = vand.u32 %v3173, 4294901760
        %3175 = vmatmul.mubr.f32.gmra.mrb[0].mxu0 %v3174
        %v3176 = vpop.f32.mrb[0].mxu0
        %v3177 = vadd.f32 %v3094, %v3176
        %v3178 = vpop.f32.mrb[0].mxu0
        %3179 = vdwg.mxu0
        %3180 = vmatprep.subr.mxu0 0.0
        %v3181 = vand.u32 %v2286, 4294901760
        %v3182 = vsub.f32 %v2286, %v3181
        %v3183 = vand.u32 %v3182, 4294901760
        %3184 = vmatpush1.msra.mxu0 %v3183
        %3185 = vmatprep.subr.mxu0 0.0
        %v3186 = vand.u32 %v2292, 4294901760
        %v3187 = vsub.f32 %v2292, %v3186
        %v3188 = vand.u32 %v3187, 4294901760
        %3189 = vmatpush1.msra.mxu0 %v3188
        %3190 = vmatprep.subr.mxu0 0.0
        %3191 = vmatpush1.msra.mxu0 0.0
        %3192 = vmatprep.subr.mxu0 0.0
        %3193 = vmatpush1.msra.mxu0 0.0
        %3194 = vmatprep.subr.mxu0 0.0
        %3195 = vmatpush1.msra.mxu0 0.0
        %3196 = vmatprep.subr.mxu0 0.0
        %3197 = vmatpush1.msra.mxu0 0.0
        %3198 = vmatprep.subr.mxu0 0.0
        %3199 = vmatpush1.msra.mxu0 0.0
        %3200 = vmatprep.subr.mxu0 0.0
        %3201 = vmatpush1.msra.mxu0 0.0
        %3202 = vmatprep.subr.mxu0 0.0
        %3203 = vmatpush1.msra.mxu0 0.0
        %3204 = vmatprep.subr.mxu0 0.0
        %3205 = vmatpush1.msra.mxu0 0.0
        %3206 = vmatprep.subr.mxu0 0.0
        %3207 = vmatpush1.msra.mxu0 0.0
        %3208 = vmatprep.subr.mxu0 0.0
        %3209 = vmatpush1.msra.mxu0 0.0
        %3210 = vmatprep.subr.mxu0 0.0
        %3211 = vmatpush1.msra.mxu0 0.0
        %3212 = vmatprep.subr.mxu0 0.0
        %3213 = vmatpush1.msra.mxu0 0.0
        %3214 = vmatprep.subr.mxu0 0.0
        %3215 = vmatpush1.msra.mxu0 0.0
        %3216 = vmatprep.subr.mxu0 0.0
        %3217 = vmatpush1.msra.mxu0 0.0
        %3218 = vmatprep.subr.mxu0 0.0
        %3219 = vmatpush1.msra.mxu0 0.0
        %3220 = vmatprep.subr.mxu0 0.0
        %3221 = vmatpush1.msra.mxu0 0.0
        %3222 = vmatprep.subr.mxu0 0.0
        %3223 = vmatpush1.msra.mxu0 0.0
        %3224 = vmatprep.subr.mxu0 0.0
        %3225 = vmatpush1.msra.mxu0 0.0
        %3226 = vmatprep.subr.mxu0 0.0
        %3227 = vmatpush1.msra.mxu0 0.0
        %3228 = vmatprep.subr.mxu0 0.0
        %3229 = vmatpush1.msra.mxu0 0.0
        %3230 = vmatprep.subr.mxu0 0.0
        %3231 = vmatpush1.msra.mxu0 0.0
        %3232 = vmatprep.subr.mxu0 0.0
        %3233 = vmatpush1.msra.mxu0 0.0
        %3234 = vmatprep.subr.mxu0 0.0
        %3235 = vmatpush1.msra.mxu0 0.0
        %3236 = vmatprep.subr.mxu0 0.0
        %3237 = vmatpush1.msra.mxu0 0.0
        %3238 = vmatprep.subr.mxu0 0.0
        %3239 = vmatpush1.msra.mxu0 0.0
        %3240 = vmatprep.subr.mxu0 0.0
        %3241 = vmatpush1.msra.mxu0 0.0
        %3242 = vmatprep.subr.mxu0 0.0
        %3243 = vmatpush1.msra.mxu0 0.0
        %3244 = vmatprep.subr.mxu0 0.0
        %3245 = vmatpush1.msra.mxu0 0.0
        %3246 = vmatprep.subr.mxu0 0.0
        %3247 = vmatpush1.msra.mxu0 0.0
        %3248 = vmatprep.subr.mxu0 0.0
        %3249 = vmatpush1.msra.mxu0 0.0
        %3250 = vmatprep.mubr.f32.mxu0 0.0
        %v3251 = vand.u32 %v2835, 4294901760
        %3252 = vmatmul.mubr.f32.gmra.mrb[0].mxu0 %v3251
        %v3253 = vpop.f32.mrb[0].mxu0
        %v3254 = vadd.f32 %v3169, %v3253
        %v3255 = vpop.f32.mrb[0].mxu0
        %3256 = vmatprep.mubr.f32.mxu0 0.0
        %v3257 = vand.u32 %v2838, 4294901760
        %3258 = vmatmul.mubr.f32.gmra.mrb[0].mxu0 %v3257
        %v3259 = vpop.f32.mrb[0].mxu0
        %v3260 = vadd.f32 %v3177, %v3259
        %v3261 = vpop.f32.mrb[0].mxu0
        %3262 = vdwg.mxu0
        %3263 = vmatprep.subr.mxu0 0.0
        %v3264 = vand.u32 %v2286, 4294901760
        %3265 = vmatpush1.msra.mxu0 %v3264
        %3266 = vmatprep.subr.mxu0 0.0
        %v3267 = vand.u32 %v2292, 4294901760
        %3268 = vmatpush1.msra.mxu0 %v3267
        %3269 = vmatprep.subr.mxu0 0.0
        %3270 = vmatpush1.msra.mxu0 0.0
        %3271 = vmatprep.subr.mxu0 0.0
        %3272 = vmatpush1.msra.mxu0 0.0
        %3273 = vmatprep.subr.mxu0 0.0
        %3274 = vmatpush1.msra.mxu0 0.0
        %3275 = vmatprep.subr.mxu0 0.0
        %3276 = vmatpush1.msra.mxu0 0.0
        %3277 = vmatprep.subr.mxu0 0.0
        %3278 = vmatpush1.msra.mxu0 0.0
        %3279 = vmatprep.subr.mxu0 0.0
        %3280 = vmatpush1.msra.mxu0 0.0
        %3281 = vmatprep.subr.mxu0 0.0
        %3282 = vmatpush1.msra.mxu0 0.0
        %3283 = vmatprep.subr.mxu0 0.0
        %3284 = vmatpush1.msra.mxu0 0.0
        %3285 = vmatprep.subr.mxu0 0.0
        %3286 = vmatpush1.msra.mxu0 0.0
        %3287 = vmatprep.subr.mxu0 0.0
        %3288 = vmatpush1.msra.mxu0 0.0
        %3289 = vmatprep.subr.mxu0 0.0
        %3290 = vmatpush1.msra.mxu0 0.0
        %3291 = vmatprep.subr.mxu0 0.0
        %3292 = vmatpush1.msra.mxu0 0.0
        %3293 = vmatprep.subr.mxu0 0.0
        %3294 = vmatpush1.msra.mxu0 0.0
        %3295 = vmatprep.subr.mxu0 0.0
        %3296 = vmatpush1.msra.mxu0 0.0
        %3297 = vmatprep.subr.mxu0 0.0
        %3298 = vmatpush1.msra.mxu0 0.0
        %3299 = vmatprep.subr.mxu0 0.0
        %3300 = vmatpush1.msra.mxu0 0.0
        %3301 = vmatprep.subr.mxu0 0.0
        %3302 = vmatpush1.msra.mxu0 0.0
        %3303 = vmatprep.subr.mxu0 0.0
        %3304 = vmatpush1.msra.mxu0 0.0
        %3305 = vmatprep.subr.mxu0 0.0
        %3306 = vmatpush1.msra.mxu0 0.0
        %3307 = vmatprep.subr.mxu0 0.0
        %3308 = vmatpush1.msra.mxu0 0.0
        %3309 = vmatprep.subr.mxu0 0.0
        %3310 = vmatpush1.msra.mxu0 0.0
        %3311 = vmatprep.subr.mxu0 0.0
        %3312 = vmatpush1.msra.mxu0 0.0
        %3313 = vmatprep.subr.mxu0 0.0
        %3314 = vmatpush1.msra.mxu0 0.0
        %3315 = vmatprep.subr.mxu0 0.0
        %3316 = vmatpush1.msra.mxu0 0.0
        %3317 = vmatprep.subr.mxu0 0.0
        %3318 = vmatpush1.msra.mxu0 0.0
        %3319 = vmatprep.subr.mxu0 0.0
        %3320 = vmatpush1.msra.mxu0 0.0
        %3321 = vmatprep.subr.mxu0 0.0
        %3322 = vmatpush1.msra.mxu0 0.0
        %3323 = vmatprep.subr.mxu0 0.0
        %3324 = vmatpush1.msra.mxu0 0.0
        %3325 = vmatprep.subr.mxu0 0.0
        %3326 = vmatpush1.msra.mxu0 0.0
        %3327 = vmatprep.subr.mxu0 0.0
        %3328 = vmatpush1.msra.mxu0 0.0
        %3329 = vmatprep.mubr.f32.mxu0 0.0
        %v3330 = vand.u32 %v2835, 4294901760
        %3331 = vmatmul.mubr.f32.gmra.mrb[0].mxu0 %v3330
        %v3332 = vpop.f32.mrb[0].mxu0
        %v3333 = vadd.f32 %v3254, %v3332
        %v3334 = vpop.f32.mrb[0].mxu0
        %3335 = vmatprep.mubr.f32.mxu0 0.0
        %v3336 = vand.u32 %v2838, 4294901760
        %3337 = vmatmul.mubr.f32.gmra.mrb[0].mxu0 %v3336
        %v3338 = vpop.f32.mrb[0].mxu0
        %v3339 = vadd.f32 %v3260, %v3338
        %v3340 = vpop.f32.mrb[0].mxu0
        %3341 = vdwg.mxu0
        %3342 = vrot.lane.b32.xlu0 %v1196, 112
        %v3343 = vpop.permute.xlu0 %3342
        %3344 = vrot.lane.b32.xlu0 %v1202, 112
        %v3345 = vpop.permute.xlu0 %3344
        %3346 = vrot.lane.b32.xlu0 %v1741, 112
        %v3347 = vpop.permute.xlu0 %3346
        %3348 = vrot.lane.b32.xlu0 %v1747, 112
        %v3349 = vpop.permute.xlu0 %3348
        %v3350 = vsel %vm2295, %v3343, 0
        %v3352 = vsel %vm2295, %v3345, 0
        %v3354 = vsel %vm2295, %v3347, 0
        %v3356 = vsel %vm2295, %v3349, 0
        %3358 = vmatprep.subr.mxu0 0.0
        %v3359 = vand.u32 %v3354, 4294901760
        %3360 = vmatpush1.xpose.msra.mxu0 %v3359
        %3361 = vmatprep.subr.mxu0 0.0
        %v3362 = vand.u32 %v3356, 4294901760
        %3363 = vmatpush1.xpose.msra.mxu0 %v3362
        %3364 = vmatprep.subr.mxu0 0.0
        %3365 = vmatpush1.xpose.msra.mxu0 0.0
        %3366 = vmatprep.subr.mxu0 0.0
        %3367 = vmatpush1.xpose.msra.mxu0 0.0
        %3368 = vmatprep.subr.mxu0 0.0
        %3369 = vmatpush1.xpose.msra.mxu0 0.0
        %3370 = vmatprep.subr.mxu0 0.0
        %3371 = vmatpush1.xpose.msra.mxu0 0.0
        %3372 = vmatprep.subr.mxu0 0.0
        %3373 = vmatpush1.xpose.msra.mxu0 0.0
        %3374 = vmatprep.subr.mxu0 0.0
        %3375 = vmatpush1.xpose.msra.mxu0 0.0
        %3376 = vmatprep.subr.mxu0 0.0
        %3377 = vmatpush1.xpose.msra.mxu0 0.0
        %3378 = vmatprep.subr.mxu0 0.0
        %3379 = vmatpush1.xpose.msra.mxu0 0.0
        %3380 = vmatprep.subr.mxu0 0.0
        %3381 = vmatpush1.xpose.msra.mxu0 0.0
        %3382 = vmatprep.subr.mxu0 0.0
        %3383 = vmatpush1.xpose.msra.mxu0 0.0
        %3384 = vmatprep.subr.mxu0 0.0
        %3385 = vmatpush1.xpose.msra.mxu0 0.0
        %3386 = vmatprep.subr.mxu0 0.0
        %3387 = vmatpush1.xpose.msra.mxu0 0.0
        %3388 = vmatprep.subr.mxu0 0.0
        %3389 = vmatpush1.xpose.msra.mxu0 0.0
        %3390 = vmatprep.subr.mxu0 0.0
        %3391 = vmatpush1.xpose.msra.mxu0 0.0
        %3392 = vmatprep.subr.mxu0 0.0
        %3393 = vmatpush1.xpose.msra.mxu0 0.0
        %3394 = vmatprep.subr.mxu0 0.0
        %3395 = vmatpush1.xpose.msra.mxu0 0.0
        %3396 = vmatprep.subr.mxu0 0.0
        %3397 = vmatpush1.xpose.msra.mxu0 0.0
        %3398 = vmatprep.subr.mxu0 0.0
        %3399 = vmatpush1.xpose.msra.mxu0 0.0
        %3400 = vmatprep.subr.mxu0 0.0
        %3401 = vmatpush1.xpose.msra.mxu0 0.0
        %3402 = vmatprep.subr.mxu0 0.0
        %3403 = vmatpush1.xpose.msra.mxu0 0.0
        %3404 = vmatprep.subr.mxu0 0.0
        %3405 = vmatpush1.xpose.msra.mxu0 0.0
        %3406 = vmatprep.subr.mxu0 0.0
        %3407 = vmatpush1.xpose.msra.mxu0 0.0
        %3408 = vmatprep.subr.mxu0 0.0
        %3409 = vmatpush1.xpose.msra.mxu0 0.0
        %3410 = vmatprep.subr.mxu0 0.0
        %3411 = vmatpush1.xpose.msra.mxu0 0.0
        %3412 = vmatprep.subr.mxu0 0.0
        %3413 = vmatpush1.xpose.msra.mxu0 0.0
        %3414 = vmatprep.subr.mxu0 0.0
        %3415 = vmatpush1.xpose.msra.mxu0 0.0
        %3416 = vmatprep.subr.mxu0 0.0
        %3417 = vmatpush1.xpose.msra.mxu0 0.0
        %3418 = vmatprep.subr.mxu0 0.0
        %3419 = vmatpush1.xpose.msra.mxu0 0.0
        %3420 = vmatprep.subr.mxu0 0.0
        %3421 = vmatpush1.xpose.msra.mxu0 0.0
        %3422 = vmatprep.subr.mxu0 0.0
        %3423 = vmatpush1.xpose.msra.mxu0 0.0
        %3424 = vmatprep.mubr.f32.mxu0 0.0
        %v3425 = vand.u32 %v3350, 4294901760
        %v3426 = vsub.f32 %v3350, %v3425
        %v3427 = vand.u32 %v3426, 4294901760
        %v3428 = vsub.f32 %v3426, %v3427
        %v3429 = vand.u32 %v3428, 4294901760
        %3430 = vmatmul.mubr.f32.gmra.mrb[0].mxu0 %v3429
        %v3431 = vpop.f32.mrb[0].mxu0
        %v3432 = vadd.f32 0.0, %v3431
        %v3433 = vpop.f32.mrb[0].mxu0
        %3434 = vmatprep.mubr.f32.mxu0 0.0
        %v3435 = vand.u32 %v3352, 4294901760
        %v3436 = vsub.f32 %v3352, %v3435
        %v3437 = vand.u32 %v3436, 4294901760
        %v3438 = vsub.f32 %v3436, %v3437
        %v3439 = vand.u32 %v3438, 4294901760
        %3440 = vmatmul.mubr.f32.gmra.mrb[0].mxu0 %v3439
        %v3441 = vpop.f32.mrb[0].mxu0
        %v3442 = vadd.f32 0.0, %v3441
        %v3443 = vpop.f32.mrb[0].mxu0
        %3444 = vdwg.mxu0
        %3445 = vmatprep.subr.mxu0 0.0
        %v3446 = vand.u32 %v3354, 4294901760
        %v3447 = vsub.f32 %v3354, %v3446
        %v3448 = vand.u32 %v3447, 4294901760
        %v3449 = vsub.f32 %v3447, %v3448
        %v3450 = vand.u32 %v3449, 4294901760
        %3451 = vmatpush1.xpose.msra.mxu0 %v3450
        %3452 = vmatprep.subr.mxu0 0.0
        %v3453 = vand.u32 %v3356, 4294901760
        %v3454 = vsub.f32 %v3356, %v3453
        %v3455 = vand.u32 %v3454, 4294901760
        %v3456 = vsub.f32 %v3454, %v3455
        %v3457 = vand.u32 %v3456, 4294901760
        %3458 = vmatpush1.xpose.msra.mxu0 %v3457
        %3459 = vmatprep.subr.mxu0 0.0
        %3460 = vmatpush1.xpose.msra.mxu0 0.0
        %3461 = vmatprep.subr.mxu0 0.0
        %3462 = vmatpush1.xpose.msra.mxu0 0.0
        %3463 = vmatprep.subr.mxu0 0.0
        %3464 = vmatpush1.xpose.msra.mxu0 0.0
        %3465 = vmatprep.subr.mxu0 0.0
        %3466 = vmatpush1.xpose.msra.mxu0 0.0
        %3467 = vmatprep.subr.mxu0 0.0
        %3468 = vmatpush1.xpose.msra.mxu0 0.0
        %3469 = vmatprep.subr.mxu0 0.0
        %3470 = vmatpush1.xpose.msra.mxu0 0.0
        %3471 = vmatprep.subr.mxu0 0.0
        %3472 = vmatpush1.xpose.msra.mxu0 0.0
        %3473 = vmatprep.subr.mxu0 0.0
        %3474 = vmatpush1.xpose.msra.mxu0 0.0
        %3475 = vmatprep.subr.mxu0 0.0
        %3476 = vmatpush1.xpose.msra.mxu0 0.0
        %3477 = vmatprep.subr.mxu0 0.0
        %3478 = vmatpush1.xpose.msra.mxu0 0.0
        %3479 = vmatprep.subr.mxu0 0.0
        %3480 = vmatpush1.xpose.msra.mxu0 0.0
        %3481 = vmatprep.subr.mxu0 0.0
        %3482 = vmatpush1.xpose.msra.mxu0 0.0
        %3483 = vmatprep.subr.mxu0 0.0
        %3484 = vmatpush1.xpose.msra.mxu0 0.0
        %3485 = vmatprep.subr.mxu0 0.0
        %3486 = vmatpush1.xpose.msra.mxu0 0.0
        %3487 = vmatprep.subr.mxu0 0.0
        %3488 = vmatpush1.xpose.msra.mxu0 0.0
        %3489 = vmatprep.subr.mxu0 0.0
        %3490 = vmatpush1.xpose.msra.mxu0 0.0
        %3491 = vmatprep.subr.mxu0 0.0
        %3492 = vmatpush1.xpose.msra.mxu0 0.0
        %3493 = vmatprep.subr.mxu0 0.0
        %3494 = vmatpush1.xpose.msra.mxu0 0.0
        %3495 = vmatprep.subr.mxu0 0.0
        %3496 = vmatpush1.xpose.msra.mxu0 0.0
        %3497 = vmatprep.subr.mxu0 0.0
        %3498 = vmatpush1.xpose.msra.mxu0 0.0
        %3499 = vmatprep.subr.mxu0 0.0
        %3500 = vmatpush1.xpose.msra.mxu0 0.0
        %3501 = vmatprep.subr.mxu0 0.0
        %3502 = vmatpush1.xpose.msra.mxu0 0.0
        %3503 = vmatprep.subr.mxu0 0.0
        %3504 = vmatpush1.xpose.msra.mxu0 0.0
        %3505 = vmatprep.subr.mxu0 0.0
        %3506 = vmatpush1.xpose.msra.mxu0 0.0
        %3507 = vmatprep.subr.mxu0 0.0
        %3508 = vmatpush1.xpose.msra.mxu0 0.0
        %3509 = vmatprep.subr.mxu0 0.0
        %3510 = vmatpush1.xpose.msra.mxu0 0.0
        %3511 = vmatprep.subr.mxu0 0.0
        %3512 = vmatpush1.xpose.msra.mxu0 0.0
        %3513 = vmatprep.subr.mxu0 0.0
        %3514 = vmatpush1.xpose.msra.mxu0 0.0
        %3515 = vmatprep.subr.mxu0 0.0
        %3516 = vmatpush1.xpose.msra.mxu0 0.0
        %3517 = vmatprep.subr.mxu0 0.0
        %3518 = vmatpush1.xpose.msra.mxu0 0.0
        %3519 = vmatprep.mubr.f32.mxu0 0.0
        %v3520 = vand.u32 %v3350, 4294901760
        %3521 = vmatmul.mubr.f32.gmra.mrb[0].mxu0 %v3520
        %v3522 = vpop.f32.mrb[0].mxu0
        %v3523 = vadd.f32 %v3432, %v3522
        %v3524 = vpop.f32.mrb[0].mxu0
        %3525 = vmatprep.mubr.f32.mxu0 0.0
        %v3526 = vand.u32 %v3352, 4294901760
        %3527 = vmatmul.mubr.f32.gmra.mrb[0].mxu0 %v3526
        %v3528 = vpop.f32.mrb[0].mxu0
        %v3529 = vadd.f32 %v3442, %v3528
        %v3530 = vpop.f32.mrb[0].mxu0
        %3531 = vdwg.mxu0
        %3532 = vmatprep.subr.mxu0 0.0
        %v3533 = vand.u32 %v3354, 4294901760
        %v3534 = vsub.f32 %v3354, %v3533
        %3535 = vmatpush1.xpose.msra.mxu0 %v3534
        %3536 = vmatprep.subr.mxu0 0.0
        %v3537 = vand.u32 %v3356, 4294901760
        %v3538 = vsub.f32 %v3356, %v3537
        %3539 = vmatpush1.xpose.msra.mxu0 %v3538
        %3540 = vmatprep.subr.mxu0 0.0
        %3541 = vmatpush1.xpose.msra.mxu0 0.0
        %3542 = vmatprep.subr.mxu0 0.0
        %3543 = vmatpush1.xpose.msra.mxu0 0.0
        %3544 = vmatprep.subr.mxu0 0.0
        %3545 = vmatpush1.xpose.msra.mxu0 0.0
        %3546 = vmatprep.subr.mxu0 0.0
        %3547 = vmatpush1.xpose.msra.mxu0 0.0
        %3548 = vmatprep.subr.mxu0 0.0
        %3549 = vmatpush1.xpose.msra.mxu0 0.0
        %3550 = vmatprep.subr.mxu0 0.0
        %3551 = vmatpush1.xpose.msra.mxu0 0.0
        %3552 = vmatprep.subr.mxu0 0.0
        %3553 = vmatpush1.xpose.msra.mxu0 0.0
        %3554 = vmatprep.subr.mxu0 0.0
        %3555 = vmatpush1.xpose.msra.mxu0 0.0
        %3556 = vmatprep.subr.mxu0 0.0
        %3557 = vmatpush1.xpose.msra.mxu0 0.0
        %3558 = vmatprep.subr.mxu0 0.0
        %3559 = vmatpush1.xpose.msra.mxu0 0.0
        %3560 = vmatprep.subr.mxu0 0.0
        %3561 = vmatpush1.xpose.msra.mxu0 0.0
        %3562 = vmatprep.subr.mxu0 0.0
        %3563 = vmatpush1.xpose.msra.mxu0 0.0
        %3564 = vmatprep.subr.mxu0 0.0
        %3565 = vmatpush1.xpose.msra.mxu0 0.0
        %3566 = vmatprep.subr.mxu0 0.0
        %3567 = vmatpush1.xpose.msra.mxu0 0.0
        %3568 = vmatprep.subr.mxu0 0.0
        %3569 = vmatpush1.xpose.msra.mxu0 0.0
        %3570 = vmatprep.subr.mxu0 0.0
        %3571 = vmatpush1.xpose.msra.mxu0 0.0
        %3572 = vmatprep.subr.mxu0 0.0
        %3573 = vmatpush1.xpose.msra.mxu0 0.0
        %3574 = vmatprep.subr.mxu0 0.0
        %3575 = vmatpush1.xpose.msra.mxu0 0.0
        %3576 = vmatprep.subr.mxu0 0.0
        %3577 = vmatpush1.xpose.msra.mxu0 0.0
        %3578 = vmatprep.subr.mxu0 0.0
        %3579 = vmatpush1.xpose.msra.mxu0 0.0
        %3580 = vmatprep.subr.mxu0 0.0
        %3581 = vmatpush1.xpose.msra.mxu0 0.0
        %3582 = vmatprep.subr.mxu0 0.0
        %3583 = vmatpush1.xpose.msra.mxu0 0.0
        %3584 = vmatprep.subr.mxu0 0.0
        %3585 = vmatpush1.xpose.msra.mxu0 0.0
        %3586 = vmatprep.subr.mxu0 0.0
        %3587 = vmatpush1.xpose.msra.mxu0 0.0
        %3588 = vmatprep.subr.mxu0 0.0
        %3589 = vmatpush1.xpose.msra.mxu0 0.0
        %3590 = vmatprep.subr.mxu0 0.0
        %3591 = vmatpush1.xpose.msra.mxu0 0.0
        %3592 = vmatprep.subr.mxu0 0.0
        %3593 = vmatpush1.xpose.msra.mxu0 0.0
        %3594 = vmatprep.subr.mxu0 0.0
        %3595 = vmatpush1.xpose.msra.mxu0 0.0
        %3596 = vmatprep.subr.mxu0 0.0
        %3597 = vmatpush1.xpose.msra.mxu0 0.0
        %3598 = vmatprep.subr.mxu0 0.0
        %3599 = vmatpush1.xpose.msra.mxu0 0.0
        %3600 = vmatprep.mubr.f32.mxu0 0.0
        %v3601 = vand.u32 %v3350, 4294901760
        %v3602 = vsub.f32 %v3350, %v3601
        %3603 = vmatmul.mubr.f32.gmra.mrb[0].mxu0 %v3602
        %v3604 = vpop.f32.mrb[0].mxu0
        %v3605 = vadd.f32 %v3523, %v3604
        %v3606 = vpop.f32.mrb[0].mxu0
        %3607 = vmatprep.mubr.f32.mxu0 0.0
        %v3608 = vand.u32 %v3352, 4294901760
        %v3609 = vsub.f32 %v3352, %v3608
        %3610 = vmatmul.mubr.f32.gmra.mrb[0].mxu0 %v3609
        %v3611 = vpop.f32.mrb[0].mxu0
        %v3612 = vadd.f32 %v3529, %v3611
        %v3613 = vpop.f32.mrb[0].mxu0
        %3614 = vdwg.mxu0
        %3615 = vmatprep.subr.mxu0 0.0
        %v3616 = vand.u32 %v3354, 4294901760
        %3617 = vmatpush1.xpose.msra.mxu0 %v3616
        %3618 = vmatprep.subr.mxu0 0.0
        %v3619 = vand.u32 %v3356, 4294901760
        %3620 = vmatpush1.xpose.msra.mxu0 %v3619
        %3621 = vmatprep.subr.mxu0 0.0
        %3622 = vmatpush1.xpose.msra.mxu0 0.0
        %3623 = vmatprep.subr.mxu0 0.0
        %3624 = vmatpush1.xpose.msra.mxu0 0.0
        %3625 = vmatprep.subr.mxu0 0.0
        %3626 = vmatpush1.xpose.msra.mxu0 0.0
        %3627 = vmatprep.subr.mxu0 0.0
        %3628 = vmatpush1.xpose.msra.mxu0 0.0
        %3629 = vmatprep.subr.mxu0 0.0
        %3630 = vmatpush1.xpose.msra.mxu0 0.0
        %3631 = vmatprep.subr.mxu0 0.0
        %3632 = vmatpush1.xpose.msra.mxu0 0.0
        %3633 = vmatprep.subr.mxu0 0.0
        %3634 = vmatpush1.xpose.msra.mxu0 0.0
        %3635 = vmatprep.subr.mxu0 0.0
        %3636 = vmatpush1.xpose.msra.mxu0 0.0
        %3637 = vmatprep.subr.mxu0 0.0
        %3638 = vmatpush1.xpose.msra.mxu0 0.0
        %3639 = vmatprep.subr.mxu0 0.0
        %3640 = vmatpush1.xpose.msra.mxu0 0.0
        %3641 = vmatprep.subr.mxu0 0.0
        %3642 = vmatpush1.xpose.msra.mxu0 0.0
        %3643 = vmatprep.subr.mxu0 0.0
        %3644 = vmatpush1.xpose.msra.mxu0 0.0
        %3645 = vmatprep.subr.mxu0 0.0
        %3646 = vmatpush1.xpose.msra.mxu0 0.0
        %3647 = vmatprep.subr.mxu0 0.0
        %3648 = vmatpush1.xpose.msra.mxu0 0.0
        %3649 = vmatprep.subr.mxu0 0.0
        %3650 = vmatpush1.xpose.msra.mxu0 0.0
        %3651 = vmatprep.subr.mxu0 0.0
        %3652 = vmatpush1.xpose.msra.mxu0 0.0
        %3653 = vmatprep.subr.mxu0 0.0
        %3654 = vmatpush1.xpose.msra.mxu0 0.0
        %3655 = vmatprep.subr.mxu0 0.0
        %3656 = vmatpush1.xpose.msra.mxu0 0.0
        %3657 = vmatprep.subr.mxu0 0.0
        %3658 = vmatpush1.xpose.msra.mxu0 0.0
        %3659 = vmatprep.subr.mxu0 0.0
        %3660 = vmatpush1.xpose.msra.mxu0 0.0
        %3661 = vmatprep.subr.mxu0 0.0
        %3662 = vmatpush1.xpose.msra.mxu0 0.0
        %3663 = vmatprep.subr.mxu0 0.0
        %3664 = vmatpush1.xpose.msra.mxu0 0.0
        %3665 = vmatprep.subr.mxu0 0.0
        %3666 = vmatpush1.xpose.msra.mxu0 0.0
        %3667 = vmatprep.subr.mxu0 0.0
        %3668 = vmatpush1.xpose.msra.mxu0 0.0
        %3669 = vmatprep.subr.mxu0 0.0
        %3670 = vmatpush1.xpose.msra.mxu0 0.0
        %3671 = vmatprep.subr.mxu0 0.0
        %3672 = vmatpush1.xpose.msra.mxu0 0.0
        %3673 = vmatprep.subr.mxu0 0.0
        %3674 = vmatpush1.xpose.msra.mxu0 0.0
        %3675 = vmatprep.subr.mxu0 0.0
        %3676 = vmatpush1.xpose.msra.mxu0 0.0
        %3677 = vmatprep.subr.mxu0 0.0
        %3678 = vmatpush1.xpose.msra.mxu0 0.0
        %3679 = vmatprep.subr.mxu0 0.0
        %3680 = vmatpush1.xpose.msra.mxu0 0.0
        %3681 = vmatprep.mubr.f32.mxu0 0.0
        %v3682 = vand.u32 %v3350, 4294901760
        %v3683 = vsub.f32 %v3350, %v3682
        %v3684 = vand.u32 %v3683, 4294901760
        %3685 = vmatmul.mubr.f32.gmra.mrb[0].mxu0 %v3684
        %v3686 = vpop.f32.mrb[0].mxu0
        %v3687 = vadd.f32 %v3605, %v3686
        %v3688 = vpop.f32.mrb[0].mxu0
        %3689 = vmatprep.mubr.f32.mxu0 0.0
        %v3690 = vand.u32 %v3352, 4294901760
        %v3691 = vsub.f32 %v3352, %v3690
        %v3692 = vand.u32 %v3691, 4294901760
        %3693 = vmatmul.mubr.f32.gmra.mrb[0].mxu0 %v3692
        %v3694 = vpop.f32.mrb[0].mxu0
        %v3695 = vadd.f32 %v3612, %v3694
        %v3696 = vpop.f32.mrb[0].mxu0
        %3697 = vdwg.mxu0
        %3698 = vmatprep.subr.mxu0 0.0
        %v3699 = vand.u32 %v3354, 4294901760
        %v3700 = vsub.f32 %v3354, %v3699
        %v3701 = vand.u32 %v3700, 4294901760
        %3702 = vmatpush1.xpose.msra.mxu0 %v3701
        %3703 = vmatprep.subr.mxu0 0.0
        %v3704 = vand.u32 %v3356, 4294901760
        %v3705 = vsub.f32 %v3356, %v3704
        %v3706 = vand.u32 %v3705, 4294901760
        %3707 = vmatpush1.xpose.msra.mxu0 %v3706
        %3708 = vmatprep.subr.mxu0 0.0
        %3709 = vmatpush1.xpose.msra.mxu0 0.0
        %3710 = vmatprep.subr.mxu0 0.0
        %3711 = vmatpush1.xpose.msra.mxu0 0.0
        %3712 = vmatprep.subr.mxu0 0.0
        %3713 = vmatpush1.xpose.msra.mxu0 0.0
        %3714 = vmatprep.subr.mxu0 0.0
        %3715 = vmatpush1.xpose.msra.mxu0 0.0
        %3716 = vmatprep.subr.mxu0 0.0
        %3717 = vmatpush1.xpose.msra.mxu0 0.0
        %3718 = vmatprep.subr.mxu0 0.0
        %3719 = vmatpush1.xpose.msra.mxu0 0.0
        %3720 = vmatprep.subr.mxu0 0.0
        %3721 = vmatpush1.xpose.msra.mxu0 0.0
        %3722 = vmatprep.subr.mxu0 0.0
        %3723 = vmatpush1.xpose.msra.mxu0 0.0
        %3724 = vmatprep.subr.mxu0 0.0
        %3725 = vmatpush1.xpose.msra.mxu0 0.0
        %3726 = vmatprep.subr.mxu0 0.0
        %3727 = vmatpush1.xpose.msra.mxu0 0.0
        %3728 = vmatprep.subr.mxu0 0.0
        %3729 = vmatpush1.xpose.msra.mxu0 0.0
        %3730 = vmatprep.subr.mxu0 0.0
        %3731 = vmatpush1.xpose.msra.mxu0 0.0
        %3732 = vmatprep.subr.mxu0 0.0
        %3733 = vmatpush1.xpose.msra.mxu0 0.0
        %3734 = vmatprep.subr.mxu0 0.0
        %3735 = vmatpush1.xpose.msra.mxu0 0.0
        %3736 = vmatprep.subr.mxu0 0.0
        %3737 = vmatpush1.xpose.msra.mxu0 0.0
        %3738 = vmatprep.subr.mxu0 0.0
        %3739 = vmatpush1.xpose.msra.mxu0 0.0
        %3740 = vmatprep.subr.mxu0 0.0
        %3741 = vmatpush1.xpose.msra.mxu0 0.0
        %3742 = vmatprep.subr.mxu0 0.0
        %3743 = vmatpush1.xpose.msra.mxu0 0.0
        %3744 = vmatprep.subr.mxu0 0.0
        %3745 = vmatpush1.xpose.msra.mxu0 0.0
        %3746 = vmatprep.subr.mxu0 0.0
        %3747 = vmatpush1.xpose.msra.mxu0 0.0
        %3748 = vmatprep.subr.mxu0 0.0
        %3749 = vmatpush1.xpose.msra.mxu0 0.0
        %3750 = vmatprep.subr.mxu0 0.0
        %3751 = vmatpush1.xpose.msra.mxu0 0.0
        %3752 = vmatprep.subr.mxu0 0.0
        %3753 = vmatpush1.xpose.msra.mxu0 0.0
        %3754 = vmatprep.subr.mxu0 0.0
        %3755 = vmatpush1.xpose.msra.mxu0 0.0
        %3756 = vmatprep.subr.mxu0 0.0
        %3757 = vmatpush1.xpose.msra.mxu0 0.0
        %3758 = vmatprep.subr.mxu0 0.0
        %3759 = vmatpush1.xpose.msra.mxu0 0.0
        %3760 = vmatprep.subr.mxu0 0.0
        %3761 = vmatpush1.xpose.msra.mxu0 0.0
        %3762 = vmatprep.subr.mxu0 0.0
        %3763 = vmatpush1.xpose.msra.mxu0 0.0
        %3764 = vmatprep.subr.mxu0 0.0
        %3765 = vmatpush1.xpose.msra.mxu0 0.0
        %3766 = vmatprep.subr.mxu0 0.0
        %3767 = vmatpush1.xpose.msra.mxu0 0.0
        %3768 = vmatprep.mubr.f32.mxu0 0.0
        %v3769 = vand.u32 %v3350, 4294901760
        %3770 = vmatmul.mubr.f32.gmra.mrb[0].mxu0 %v3769
        %v3771 = vpop.f32.mrb[0].mxu0
        %v3772 = vadd.f32 %v3687, %v3771
        %v3773 = vpop.f32.mrb[0].mxu0
        %3774 = vmatprep.mubr.f32.mxu0 0.0
        %v3775 = vand.u32 %v3352, 4294901760
        %3776 = vmatmul.mubr.f32.gmra.mrb[0].mxu0 %v3775
        %v3777 = vpop.f32.mrb[0].mxu0
        %v3778 = vadd.f32 %v3695, %v3777
        %v3779 = vpop.f32.mrb[0].mxu0
        %3780 = vdwg.mxu0
        %3781 = vmatprep.subr.mxu0 0.0
        %v3782 = vand.u32 %v3354, 4294901760
        %3783 = vmatpush1.xpose.msra.mxu0 %v3782
        %3784 = vmatprep.subr.mxu0 0.0
        %v3785 = vand.u32 %v3356, 4294901760
        %3786 = vmatpush1.xpose.msra.mxu0 %v3785
        %3787 = vmatprep.subr.mxu0 0.0
        %3788 = vmatpush1.xpose.msra.mxu0 0.0
        %3789 = vmatprep.subr.mxu0 0.0
        %3790 = vmatpush1.xpose.msra.mxu0 0.0
        %3791 = vmatprep.subr.mxu0 0.0
        %3792 = vmatpush1.xpose.msra.mxu0 0.0
        %3793 = vmatprep.subr.mxu0 0.0
        %3794 = vmatpush1.xpose.msra.mxu0 0.0
        %3795 = vmatprep.subr.mxu0 0.0
        %3796 = vmatpush1.xpose.msra.mxu0 0.0
        %3797 = vmatprep.subr.mxu0 0.0
        %3798 = vmatpush1.xpose.msra.mxu0 0.0
        %3799 = vmatprep.subr.mxu0 0.0
        %3800 = vmatpush1.xpose.msra.mxu0 0.0
        %3801 = vmatprep.subr.mxu0 0.0
        %3802 = vmatpush1.xpose.msra.mxu0 0.0
        %3803 = vmatprep.subr.mxu0 0.0
        %3804 = vmatpush1.xpose.msra.mxu0 0.0
        %3805 = vmatprep.subr.mxu0 0.0
        %3806 = vmatpush1.xpose.msra.mxu0 0.0
        %3807 = vmatprep.subr.mxu0 0.0
        %3808 = vmatpush1.xpose.msra.mxu0 0.0
        %3809 = vmatprep.subr.mxu0 0.0
        %3810 = vmatpush1.xpose.msra.mxu0 0.0
        %3811 = vmatprep.subr.mxu0 0.0
        %3812 = vmatpush1.xpose.msra.mxu0 0.0
        %3813 = vmatprep.subr.mxu0 0.0
        %3814 = vmatpush1.xpose.msra.mxu0 0.0
        %3815 = vmatprep.subr.mxu0 0.0
        %3816 = vmatpush1.xpose.msra.mxu0 0.0
        %3817 = vmatprep.subr.mxu0 0.0
        %3818 = vmatpush1.xpose.msra.mxu0 0.0
        %3819 = vmatprep.subr.mxu0 0.0
        %3820 = vmatpush1.xpose.msra.mxu0 0.0
        %3821 = vmatprep.subr.mxu0 0.0
        %3822 = vmatpush1.xpose.msra.mxu0 0.0
        %3823 = vmatprep.subr.mxu0 0.0
        %3824 = vmatpush1.xpose.msra.mxu0 0.0
        %3825 = vmatprep.subr.mxu0 0.0
        %3826 = vmatpush1.xpose.msra.mxu0 0.0
        %3827 = vmatprep.subr.mxu0 0.0
        %3828 = vmatpush1.xpose.msra.mxu0 0.0
        %3829 = vmatprep.subr.mxu0 0.0
        %3830 = vmatpush1.xpose.msra.mxu0 0.0
        %3831 = vmatprep.subr.mxu0 0.0
        %3832 = vmatpush1.xpose.msra.mxu0 0.0
        %3833 = vmatprep.subr.mxu0 0.0
        %3834 = vmatpush1.xpose.msra.mxu0 0.0
        %3835 = vmatprep.subr.mxu0 0.0
        %3836 = vmatpush1.xpose.msra.mxu0 0.0
        %3837 = vmatprep.subr.mxu0 0.0
        %3838 = vmatpush1.xpose.msra.mxu0 0.0
        %3839 = vmatprep.subr.mxu0 0.0
        %3840 = vmatpush1.xpose.msra.mxu0 0.0
        %3841 = vmatprep.subr.mxu0 0.0
        %3842 = vmatpush1.xpose.msra.mxu0 0.0
        %3843 = vmatprep.subr.mxu0 0.0
        %3844 = vmatpush1.xpose.msra.mxu0 0.0
        %3845 = vmatprep.subr.mxu0 0.0
        %3846 = vmatpush1.xpose.msra.mxu0 0.0
        %3847 = vmatprep.mubr.f32.mxu0 0.0
        %v3848 = vand.u32 %v3350, 4294901760
        %3849 = vmatmul.mubr.f32.gmra.mrb[0].mxu0 %v3848
        %v3850 = vpop.f32.mrb[0].mxu0
        %v3851 = vadd.f32 %v3772, %v3850
        %v3852 = vpop.f32.mrb[0].mxu0
        %3853 = vmatprep.mubr.f32.mxu0 0.0
        %v3854 = vand.u32 %v3352, 4294901760
        %3855 = vmatmul.mubr.f32.gmra.mrb[0].mxu0 %v3854
        %v3856 = vpop.f32.mrb[0].mxu0
        %v3857 = vadd.f32 %v3778, %v3856
        %v3858 = vpop.f32.mrb[0].mxu0
        %3859 = vdwg.mxu0
        %v3860 = vsel %vm2295, %v3851, -inf
        %3861 = vmax.xlane.f32.xlu0 %v3860
        %v3862 = vpop.xlane.xlu0 %3861
        %v3863 = vsel %vm2295, %v3857, -inf
        %3864 = vmax.xlane.f32.xlu0 %v3863
        %v3865 = vpop.xlane.xlu0 %3864
        %v3866 = vsub.f32 %v3851, %v3862
        %v3867 = vsub.f32 %v3857, %v3865
        %v3868 = vmul.f32 %v3866, 1.442695
        %v3869 = vpow.pop %v3868
        %v3870 = vmul.f32 %v3867, 1.442695
        %v3871 = vpow.pop %v3870
        %v3872 = vsel %vm2295, %v3869, 0.0
        %3873 = vadd.xlane.f32.xlu0 %v3872
        %v3874 = vpop.xlane.xlu0 %3873
        %v3875 = vsel %vm2295, %v3871, 0.0
        %3876 = vadd.xlane.f32.xlu0 %v3875
        %v3877 = vpop.xlane.xlu0 %3876
        %v3878 = vrcp.pop %v3874
        %v3879 = vmul.f32 %v3869, %v3878
        %v3880 = vrcp.pop %v3877
        %v3881 = vmul.f32 %v3871, %v3880
        %s3882 = scalar_lea.vmem %s649, 16 [#allocation15]
        %3883 = vst.msk [vmem:[%s3882] sm:$0xff] %vm2295, %v3879
        %3884 = vst.msk [vmem:[%s3882 + $0x8] sm:$0xff] %vm2295, %v3881
        %3887 = vrot.lane.b32.xlu0 %v2286, 112
        %v3888 = vpop.permute.xlu0 %3887
        %3889 = vrot.lane.b32.xlu0 %v2292, 112
        %v3890 = vpop.permute.xlu0 %3889
        %v3894 = vsel %vm2295, %v3879, 0
        %v3897 = vsel %vm2295, %v3881, 0
        %3899 = vmatprep.subr.mxu0 0.0
        %v3900 = vand.u32 %v3888, 4294901760
        %3901 = vmatpush1.msra.mxu0 %v3900
        %3902 = vmatprep.subr.mxu0 0.0
        %v3903 = vand.u32 %v3890, 4294901760
        %3904 = vmatpush1.msra.mxu0 %v3903
        %3905 = vmatprep.subr.mxu0 0.0
        %3906 = vmatpush1.msra.mxu0 0.0
        %3907 = vmatprep.subr.mxu0 0.0
        %3908 = vmatpush1.msra.mxu0 0.0
        %3909 = vmatprep.subr.mxu0 0.0
        %3910 = vmatpush1.msra.mxu0 0.0
        %3911 = vmatprep.subr.mxu0 0.0
        %3912 = vmatpush1.msra.mxu0 0.0
        %3913 = vmatprep.subr.mxu0 0.0
        %3914 = vmatpush1.msra.mxu0 0.0
        %3915 = vmatprep.subr.mxu0 0.0
        %3916 = vmatpush1.msra.mxu0 0.0
        %3917 = vmatprep.subr.mxu0 0.0
        %3918 = vmatpush1.msra.mxu0 0.0
        %3919 = vmatprep.subr.mxu0 0.0
        %3920 = vmatpush1.msra.mxu0 0.0
        %3921 = vmatprep.subr.mxu0 0.0
        %3922 = vmatpush1.msra.mxu0 0.0
        %3923 = vmatprep.subr.mxu0 0.0
        %3924 = vmatpush1.msra.mxu0 0.0
        %3925 = vmatprep.subr.mxu0 0.0
        %3926 = vmatpush1.msra.mxu0 0.0
        %3927 = vmatprep.subr.mxu0 0.0
        %3928 = vmatpush1.msra.mxu0 0.0
        %3929 = vmatprep.subr.mxu0 0.0
        %3930 = vmatpush1.msra.mxu0 0.0
        %3931 = vmatprep.subr.mxu0 0.0
        %3932 = vmatpush1.msra.mxu0 0.0
        %3933 = vmatprep.subr.mxu0 0.0
        %3934 = vmatpush1.msra.mxu0 0.0
        %3935 = vmatprep.subr.mxu0 0.0
        %3936 = vmatpush1.msra.mxu0 0.0
        %3937 = vmatprep.subr.mxu0 0.0
        %3938 = vmatpush1.msra.mxu0 0.0
        %3939 = vmatprep.subr.mxu0 0.0
        %3940 = vmatpush1.msra.mxu0 0.0
        %3941 = vmatprep.subr.mxu0 0.0
        %3942 = vmatpush1.msra.mxu0 0.0
        %3943 = vmatprep.subr.mxu0 0.0
        %3944 = vmatpush1.msra.mxu0 0.0
        %3945 = vmatprep.subr.mxu0 0.0
        %3946 = vmatpush1.msra.mxu0 0.0
        %3947 = vmatprep.subr.mxu0 0.0
        %3948 = vmatpush1.msra.mxu0 0.0
        %3949 = vmatprep.subr.mxu0 0.0
        %3950 = vmatpush1.msra.mxu0 0.0
        %3951 = vmatprep.subr.mxu0 0.0
        %3952 = vmatpush1.msra.mxu0 0.0
        %3953 = vmatprep.subr.mxu0 0.0
        %3954 = vmatpush1.msra.mxu0 0.0
        %3955 = vmatprep.subr.mxu0 0.0
        %3956 = vmatpush1.msra.mxu0 0.0
        %3957 = vmatprep.subr.mxu0 0.0
        %3958 = vmatpush1.msra.mxu0 0.0
        %3959 = vmatprep.subr.mxu0 0.0
        %3960 = vmatpush1.msra.mxu0 0.0
        %3961 = vmatprep.subr.mxu0 0.0
        %3962 = vmatpush1.msra.mxu0 0.0
        %3963 = vmatprep.subr.mxu0 0.0
        %3964 = vmatpush1.msra.mxu0 0.0
        %3965 = vmatprep.mubr.f32.mxu0 0.0
        %v3966 = vand.u32 %v3894, 4294901760
        %v3967 = vsub.f32 %v3894, %v3966
        %v3968 = vand.u32 %v3967, 4294901760
        %v3969 = vsub.f32 %v3967, %v3968
        %v3970 = vand.u32 %v3969, 4294901760
        %3971 = vmatmul.mubr.f32.gmra.mrb[0].mxu0 %v3970
        %v3972 = vpop.f32.mrb[0].mxu0
        %v3973 = vadd.f32 0.0, %v3972
        %v3974 = vpop.f32.mrb[0].mxu0
        %3975 = vmatprep.mubr.f32.mxu0 0.0
        %v3976 = vand.u32 %v3897, 4294901760
        %v3977 = vsub.f32 %v3897, %v3976
        %v3978 = vand.u32 %v3977, 4294901760
        %v3979 = vsub.f32 %v3977, %v3978
        %v3980 = vand.u32 %v3979, 4294901760
        %3981 = vmatmul.mubr.f32.gmra.mrb[0].mxu0 %v3980
        %v3982 = vpop.f32.mrb[0].mxu0
        %v3983 = vadd.f32 0.0, %v3982
        %v3984 = vpop.f32.mrb[0].mxu0
        %3985 = vdwg.mxu0
        %3986 = vmatprep.subr.mxu0 0.0
        %v3987 = vand.u32 %v3888, 4294901760
        %v3988 = vsub.f32 %v3888, %v3987
        %v3989 = vand.u32 %v3988, 4294901760
        %v3990 = vsub.f32 %v3988, %v3989
        %v3991 = vand.u32 %v3990, 4294901760
        %3992 = vmatpush1.msra.mxu0 %v3991
        %3993 = vmatprep.subr.mxu0 0.0
        %v3994 = vand.u32 %v3890, 4294901760
        %v3995 = vsub.f32 %v3890, %v3994
        %v3996 = vand.u32 %v3995, 4294901760
        %v3997 = vsub.f32 %v3995, %v3996
        %v3998 = vand.u32 %v3997, 4294901760
        %3999 = vmatpush1.msra.mxu0 %v3998
        %4000 = vmatprep.subr.mxu0 0.0
        %4001 = vmatpush1.msra.mxu0 0.0
        %4002 = vmatprep.subr.mxu0 0.0
        %4003 = vmatpush1.msra.mxu0 0.0
        %4004 = vmatprep.subr.mxu0 0.0
        %4005 = vmatpush1.msra.mxu0 0.0
        %4006 = vmatprep.subr.mxu0 0.0
        %4007 = vmatpush1.msra.mxu0 0.0
        %4008 = vmatprep.subr.mxu0 0.0
        %4009 = vmatpush1.msra.mxu0 0.0
        %4010 = vmatprep.subr.mxu0 0.0
        %4011 = vmatpush1.msra.mxu0 0.0
        %4012 = vmatprep.subr.mxu0 0.0
        %4013 = vmatpush1.msra.mxu0 0.0
        %4014 = vmatprep.subr.mxu0 0.0
        %4015 = vmatpush1.msra.mxu0 0.0
        %4016 = vmatprep.subr.mxu0 0.0
        %4017 = vmatpush1.msra.mxu0 0.0
        %4018 = vmatprep.subr.mxu0 0.0
        %4019 = vmatpush1.msra.mxu0 0.0
        %4020 = vmatprep.subr.mxu0 0.0
        %4021 = vmatpush1.msra.mxu0 0.0
        %4022 = vmatprep.subr.mxu0 0.0
        %4023 = vmatpush1.msra.mxu0 0.0
        %4024 = vmatprep.subr.mxu0 0.0
        %4025 = vmatpush1.msra.mxu0 0.0
        %4026 = vmatprep.subr.mxu0 0.0
        %4027 = vmatpush1.msra.mxu0 0.0
        %4028 = vmatprep.subr.mxu0 0.0
        %4029 = vmatpush1.msra.mxu0 0.0
        %4030 = vmatprep.subr.mxu0 0.0
        %4031 = vmatpush1.msra.mxu0 0.0
        %4032 = vmatprep.subr.mxu0 0.0
        %4033 = vmatpush1.msra.mxu0 0.0
        %4034 = vmatprep.subr.mxu0 0.0
        %4035 = vmatpush1.msra.mxu0 0.0
        %4036 = vmatprep.subr.mxu0 0.0
        %4037 = vmatpush1.msra.mxu0 0.0
        %4038 = vmatprep.subr.mxu0 0.0
        %4039 = vmatpush1.msra.mxu0 0.0
        %4040 = vmatprep.subr.mxu0 0.0
        %4041 = vmatpush1.msra.mxu0 0.0
        %4042 = vmatprep.subr.mxu0 0.0
        %4043 = vmatpush1.msra.mxu0 0.0
        %4044 = vmatprep.subr.mxu0 0.0
        %4045 = vmatpush1.msra.mxu0 0.0
        %4046 = vmatprep.subr.mxu0 0.0
        %4047 = vmatpush1.msra.mxu0 0.0
        %4048 = vmatprep.subr.mxu0 0.0
        %4049 = vmatpush1.msra.mxu0 0.0
        %4050 = vmatprep.subr.mxu0 0.0
        %4051 = vmatpush1.msra.mxu0 0.0
        %4052 = vmatprep.subr.mxu0 0.0
        %4053 = vmatpush1.msra.mxu0 0.0
        %4054 = vmatprep.subr.mxu0 0.0
        %4055 = vmatpush1.msra.mxu0 0.0
        %4056 = vmatprep.subr.mxu0 0.0
        %4057 = vmatpush1.msra.mxu0 0.0
        %4058 = vmatprep.subr.mxu0 0.0
        %4059 = vmatpush1.msra.mxu0 0.0
        %4060 = vmatprep.mubr.f32.mxu0 0.0
        %v4061 = vand.u32 %v3894, 4294901760
        %4062 = vmatmul.mubr.f32.gmra.mrb[0].mxu0 %v4061
        %v4063 = vpop.f32.mrb[0].mxu0
        %v4064 = vadd.f32 %v3973, %v4063
        %v4065 = vpop.f32.mrb[0].mxu0
        %4066 = vmatprep.mubr.f32.mxu0 0.0
        %v4067 = vand.u32 %v3897, 4294901760
        %4068 = vmatmul.mubr.f32.gmra.mrb[0].mxu0 %v4067
        %v4069 = vpop.f32.mrb[0].mxu0
        %v4070 = vadd.f32 %v3983, %v4069
        %v4071 = vpop.f32.mrb[0].mxu0
        %4072 = vdwg.mxu0
        %4073 = vmatprep.subr.mxu0 0.0
        %v4074 = vand.u32 %v3888, 4294901760
        %v4075 = vsub.f32 %v3888, %v4074
        %4076 = vmatpush1.msra.mxu0 %v4075
        %4077 = vmatprep.subr.mxu0 0.0
        %v4078 = vand.u32 %v3890, 4294901760
        %v4079 = vsub.f32 %v3890, %v4078
        %4080 = vmatpush1.msra.mxu0 %v4079
        %4081 = vmatprep.subr.mxu0 0.0
        %4082 = vmatpush1.msra.mxu0 0.0
        %4083 = vmatprep.subr.mxu0 0.0
        %4084 = vmatpush1.msra.mxu0 0.0
        %4085 = vmatprep.subr.mxu0 0.0
        %4086 = vmatpush1.msra.mxu0 0.0
        %4087 = vmatprep.subr.mxu0 0.0
        %4088 = vmatpush1.msra.mxu0 0.0
        %4089 = vmatprep.subr.mxu0 0.0
        %4090 = vmatpush1.msra.mxu0 0.0
        %4091 = vmatprep.subr.mxu0 0.0
        %4092 = vmatpush1.msra.mxu0 0.0
        %4093 = vmatprep.subr.mxu0 0.0
        %4094 = vmatpush1.msra.mxu0 0.0
        %4095 = vmatprep.subr.mxu0 0.0
        %4096 = vmatpush1.msra.mxu0 0.0
        %4097 = vmatprep.subr.mxu0 0.0
        %4098 = vmatpush1.msra.mxu0 0.0
        %4099 = vmatprep.subr.mxu0 0.0
        %4100 = vmatpush1.msra.mxu0 0.0
        %4101 = vmatprep.subr.mxu0 0.0
        %4102 = vmatpush1.msra.mxu0 0.0
        %4103 = vmatprep.subr.mxu0 0.0
        %4104 = vmatpush1.msra.mxu0 0.0
        %4105 = vmatprep.subr.mxu0 0.0
        %4106 = vmatpush1.msra.mxu0 0.0
        %4107 = vmatprep.subr.mxu0 0.0
        %4108 = vmatpush1.msra.mxu0 0.0
        %4109 = vmatprep.subr.mxu0 0.0
        %4110 = vmatpush1.msra.mxu0 0.0
        %4111 = vmatprep.subr.mxu0 0.0
        %4112 = vmatpush1.msra.mxu0 0.0
        %4113 = vmatprep.subr.mxu0 0.0
        %4114 = vmatpush1.msra.mxu0 0.0
        %4115 = vmatprep.subr.mxu0 0.0
        %4116 = vmatpush1.msra.mxu0 0.0
        %4117 = vmatprep.subr.mxu0 0.0
        %4118 = vmatpush1.msra.mxu0 0.0
        %4119 = vmatprep.subr.mxu0 0.0
        %4120 = vmatpush1.msra.mxu0 0.0
        %4121 = vmatprep.subr.mxu0 0.0
        %4122 = vmatpush1.msra.mxu0 0.0
        %4123 = vmatprep.subr.mxu0 0.0
        %4124 = vmatpush1.msra.mxu0 0.0
        %4125 = vmatprep.subr.mxu0 0.0
        %4126 = vmatpush1.msra.mxu0 0.0
        %4127 = vmatprep.subr.mxu0 0.0
        %4128 = vmatpush1.msra.mxu0 0.0
        %4129 = vmatprep.subr.mxu0 0.0
        %4130 = vmatpush1.msra.mxu0 0.0
        %4131 = vmatprep.subr.mxu0 0.0
        %4132 = vmatpush1.msra.mxu0 0.0
        %4133 = vmatprep.subr.mxu0 0.0
        %4134 = vmatpush1.msra.mxu0 0.0
        %4135 = vmatprep.subr.mxu0 0.0
        %4136 = vmatpush1.msra.mxu0 0.0
        %4137 = vmatprep.subr.mxu0 0.0
        %4138 = vmatpush1.msra.mxu0 0.0
        %4139 = vmatprep.subr.mxu0 0.0
        %4140 = vmatpush1.msra.mxu0 0.0
        %4141 = vmatprep.mubr.f32.mxu0 0.0
        %v4142 = vand.u32 %v3894, 4294901760
        %v4143 = vsub.f32 %v3894, %v4142
        %4144 = vmatmul.mubr.f32.gmra.mrb[0].mxu0 %v4143
        %v4145 = vpop.f32.mrb[0].mxu0
        %v4146 = vadd.f32 %v4064, %v4145
        %v4147 = vpop.f32.mrb[0].mxu0
        %4148 = vmatprep.mubr.f32.mxu0 0.0
        %v4149 = vand.u32 %v3897, 4294901760
        %v4150 = vsub.f32 %v3897, %v4149
        %4151 = vmatmul.mubr.f32.gmra.mrb[0].mxu0 %v4150
        %v4152 = vpop.f32.mrb[0].mxu0
        %v4153 = vadd.f32 %v4070, %v4152
        %v4154 = vpop.f32.mrb[0].mxu0
        %4155 = vdwg.mxu0
        %4156 = vmatprep.subr.mxu0 0.0
        %v4157 = vand.u32 %v3888, 4294901760
        %4158 = vmatpush1.msra.mxu0 %v4157
        %4159 = vmatprep.subr.mxu0 0.0
        %v4160 = vand.u32 %v3890, 4294901760
        %4161 = vmatpush1.msra.mxu0 %v4160
        %4162 = vmatprep.subr.mxu0 0.0
        %4163 = vmatpush1.msra.mxu0 0.0
        %4164 = vmatprep.subr.mxu0 0.0
        %4165 = vmatpush1.msra.mxu0 0.0
        %4166 = vmatprep.subr.mxu0 0.0
        %4167 = vmatpush1.msra.mxu0 0.0
        %4168 = vmatprep.subr.mxu0 0.0
        %4169 = vmatpush1.msra.mxu0 0.0
        %4170 = vmatprep.subr.mxu0 0.0
        %4171 = vmatpush1.msra.mxu0 0.0
        %4172 = vmatprep.subr.mxu0 0.0
        %4173 = vmatpush1.msra.mxu0 0.0
        %4174 = vmatprep.subr.mxu0 0.0
        %4175 = vmatpush1.msra.mxu0 0.0
        %4176 = vmatprep.subr.mxu0 0.0
        %4177 = vmatpush1.msra.mxu0 0.0
        %4178 = vmatprep.subr.mxu0 0.0
        %4179 = vmatpush1.msra.mxu0 0.0
        %4180 = vmatprep.subr.mxu0 0.0
        %4181 = vmatpush1.msra.mxu0 0.0
        %4182 = vmatprep.subr.mxu0 0.0
        %4183 = vmatpush1.msra.mxu0 0.0
        %4184 = vmatprep.subr.mxu0 0.0
        %4185 = vmatpush1.msra.mxu0 0.0
        %4186 = vmatprep.subr.mxu0 0.0
        %4187 = vmatpush1.msra.mxu0 0.0
        %4188 = vmatprep.subr.mxu0 0.0
        %4189 = vmatpush1.msra.mxu0 0.0
        %4190 = vmatprep.subr.mxu0 0.0
        %4191 = vmatpush1.msra.mxu0 0.0
        %4192 = vmatprep.subr.mxu0 0.0
        %4193 = vmatpush1.msra.mxu0 0.0
        %4194 = vmatprep.subr.mxu0 0.0
        %4195 = vmatpush1.msra.mxu0 0.0
        %4196 = vmatprep.subr.mxu0 0.0
        %4197 = vmatpush1.msra.mxu0 0.0
        %4198 = vmatprep.subr.mxu0 0.0
        %4199 = vmatpush1.msra.mxu0 0.0
        %4200 = vmatprep.subr.mxu0 0.0
        %4201 = vmatpush1.msra.mxu0 0.0
        %4202 = vmatprep.subr.mxu0 0.0
        %4203 = vmatpush1.msra.mxu0 0.0
        %4204 = vmatprep.subr.mxu0 0.0
        %4205 = vmatpush1.msra.mxu0 0.0
        %4206 = vmatprep.subr.mxu0 0.0
        %4207 = vmatpush1.msra.mxu0 0.0
        %4208 = vmatprep.subr.mxu0 0.0
        %4209 = vmatpush1.msra.mxu0 0.0
        %4210 = vmatprep.subr.mxu0 0.0
        %4211 = vmatpush1.msra.mxu0 0.0
        %4212 = vmatprep.subr.mxu0 0.0
        %4213 = vmatpush1.msra.mxu0 0.0
        %4214 = vmatprep.subr.mxu0 0.0
        %4215 = vmatpush1.msra.mxu0 0.0
        %4216 = vmatprep.subr.mxu0 0.0
        %4217 = vmatpush1.msra.mxu0 0.0
        %4218 = vmatprep.subr.mxu0 0.0
        %4219 = vmatpush1.msra.mxu0 0.0
        %4220 = vmatprep.subr.mxu0 0.0
        %4221 = vmatpush1.msra.mxu0 0.0
        %4222 = vmatprep.mubr.f32.mxu0 0.0
        %v4223 = vand.u32 %v3894, 4294901760
        %v4224 = vsub.f32 %v3894, %v4223
        %v4225 = vand.u32 %v4224, 4294901760
        %4226 = vmatmul.mubr.f32.gmra.mrb[0].mxu0 %v4225
        %v4227 = vpop.f32.mrb[0].mxu0
        %v4228 = vadd.f32 %v4146, %v4227
        %v4229 = vpop.f32.mrb[0].mxu0
        %4230 = vmatprep.mubr.f32.mxu0 0.0
        %v4231 = vand.u32 %v3897, 4294901760
        %v4232 = vsub.f32 %v3897, %v4231
        %v4233 = vand.u32 %v4232, 4294901760
        %4234 = vmatmul.mubr.f32.gmra.mrb[0].mxu0 %v4233
        %v4235 = vpop.f32.mrb[0].mxu0
        %v4236 = vadd.f32 %v4153, %v4235
        %v4237 = vpop.f32.mrb[0].mxu0
        %4238 = vdwg.mxu0
        %4239 = vmatprep.subr.mxu0 0.0
        %v4240 = vand.u32 %v3888, 4294901760
        %v4241 = vsub.f32 %v3888, %v4240
        %v4242 = vand.u32 %v4241, 4294901760
        %4243 = vmatpush1.msra.mxu0 %v4242
        %4244 = vmatprep.subr.mxu0 0.0
        %v4245 = vand.u32 %v3890, 4294901760
        %v4246 = vsub.f32 %v3890, %v4245
        %v4247 = vand.u32 %v4246, 4294901760
        %4248 = vmatpush1.msra.mxu0 %v4247
        %4249 = vmatprep.subr.mxu0 0.0
        %4250 = vmatpush1.msra.mxu0 0.0
        %4251 = vmatprep.subr.mxu0 0.0
        %4252 = vmatpush1.msra.mxu0 0.0
        %4253 = vmatprep.subr.mxu0 0.0
        %4254 = vmatpush1.msra.mxu0 0.0
        %4255 = vmatprep.subr.mxu0 0.0
        %4256 = vmatpush1.msra.mxu0 0.0
        %4257 = vmatprep.subr.mxu0 0.0
        %4258 = vmatpush1.msra.mxu0 0.0
        %4259 = vmatprep.subr.mxu0 0.0
        %4260 = vmatpush1.msra.mxu0 0.0
        %4261 = vmatprep.subr.mxu0 0.0
        %4262 = vmatpush1.msra.mxu0 0.0
        %4263 = vmatprep.subr.mxu0 0.0
        %4264 = vmatpush1.msra.mxu0 0.0
        %4265 = vmatprep.subr.mxu0 0.0
        %4266 = vmatpush1.msra.mxu0 0.0
        %4267 = vmatprep.subr.mxu0 0.0
        %4268 = vmatpush1.msra.mxu0 0.0
        %4269 = vmatprep.subr.mxu0 0.0
        %4270 = vmatpush1.msra.mxu0 0.0
        %4271 = vmatprep.subr.mxu0 0.0
        %4272 = vmatpush1.msra.mxu0 0.0
        %4273 = vmatprep.subr.mxu0 0.0
        %4274 = vmatpush1.msra.mxu0 0.0
        %4275 = vmatprep.subr.mxu0 0.0
        %4276 = vmatpush1.msra.mxu0 0.0
        %4277 = vmatprep.subr.mxu0 0.0
        %4278 = vmatpush1.msra.mxu0 0.0
        %4279 = vmatprep.subr.mxu0 0.0
        %4280 = vmatpush1.msra.mxu0 0.0
        %4281 = vmatprep.subr.mxu0 0.0
        %4282 = vmatpush1.msra.mxu0 0.0
        %4283 = vmatprep.subr.mxu0 0.0
        %4284 = vmatpush1.msra.mxu0 0.0
        %4285 = vmatprep.subr.mxu0 0.0
        %4286 = vmatpush1.msra.mxu0 0.0
        %4287 = vmatprep.subr.mxu0 0.0
        %4288 = vmatpush1.msra.mxu0 0.0
        %4289 = vmatprep.subr.mxu0 0.0
        %4290 = vmatpush1.msra.mxu0 0.0
        %4291 = vmatprep.subr.mxu0 0.0
        %4292 = vmatpush1.msra.mxu0 0.0
        %4293 = vmatprep.subr.mxu0 0.0
        %4294 = vmatpush1.msra.mxu0 0.0
        %4295 = vmatprep.subr.mxu0 0.0
        %4296 = vmatpush1.msra.mxu0 0.0
        %4297 = vmatprep.subr.mxu0 0.0
        %4298 = vmatpush1.msra.mxu0 0.0
        %4299 = vmatprep.subr.mxu0 0.0
        %4300 = vmatpush1.msra.mxu0 0.0
        %4301 = vmatprep.subr.mxu0 0.0
        %4302 = vmatpush1.msra.mxu0 0.0
        %4303 = vmatprep.subr.mxu0 0.0
        %4304 = vmatpush1.msra.mxu0 0.0
        %4305 = vmatprep.subr.mxu0 0.0
        %4306 = vmatpush1.msra.mxu0 0.0
        %4307 = vmatprep.subr.mxu0 0.0
        %4308 = vmatpush1.msra.mxu0 0.0
        %4309 = vmatprep.mubr.f32.mxu0 0.0
        %v4310 = vand.u32 %v3894, 4294901760
        %4311 = vmatmul.mubr.f32.gmra.mrb[0].mxu0 %v4310
        %v4312 = vpop.f32.mrb[0].mxu0
        %v4313 = vadd.f32 %v4228, %v4312
        %v4314 = vpop.f32.mrb[0].mxu0
        %4315 = vmatprep.mubr.f32.mxu0 0.0
        %v4316 = vand.u32 %v3897, 4294901760
        %4317 = vmatmul.mubr.f32.gmra.mrb[0].mxu0 %v4316
        %v4318 = vpop.f32.mrb[0].mxu0
        %v4319 = vadd.f32 %v4236, %v4318
        %v4320 = vpop.f32.mrb[0].mxu0
        %4321 = vdwg.mxu0
        %4322 = vmatprep.subr.mxu0 0.0
        %v4323 = vand.u32 %v3888, 4294901760
        %4324 = vmatpush1.msra.mxu0 %v4323
        %4325 = vmatprep.subr.mxu0 0.0
        %v4326 = vand.u32 %v3890, 4294901760
        %4327 = vmatpush1.msra.mxu0 %v4326
        %4328 = vmatprep.subr.mxu0 0.0
        %4329 = vmatpush1.msra.mxu0 0.0
        %4330 = vmatprep.subr.mxu0 0.0
        %4331 = vmatpush1.msra.mxu0 0.0
        %4332 = vmatprep.subr.mxu0 0.0
        %4333 = vmatpush1.msra.mxu0 0.0
        %4334 = vmatprep.subr.mxu0 0.0
        %4335 = vmatpush1.msra.mxu0 0.0
        %4336 = vmatprep.subr.mxu0 0.0
        %4337 = vmatpush1.msra.mxu0 0.0
        %4338 = vmatprep.subr.mxu0 0.0
        %4339 = vmatpush1.msra.mxu0 0.0
        %4340 = vmatprep.subr.mxu0 0.0
        %4341 = vmatpush1.msra.mxu0 0.0
        %4342 = vmatprep.subr.mxu0 0.0
        %4343 = vmatpush1.msra.mxu0 0.0
        %4344 = vmatprep.subr.mxu0 0.0
        %4345 = vmatpush1.msra.mxu0 0.0
        %4346 = vmatprep.subr.mxu0 0.0
        %4347 = vmatpush1.msra.mxu0 0.0
        %4348 = vmatprep.subr.mxu0 0.0
        %4349 = vmatpush1.msra.mxu0 0.0
        %4350 = vmatprep.subr.mxu0 0.0
        %4351 = vmatpush1.msra.mxu0 0.0
        %4352 = vmatprep.subr.mxu0 0.0
        %4353 = vmatpush1.msra.mxu0 0.0
        %4354 = vmatprep.subr.mxu0 0.0
        %4355 = vmatpush1.msra.mxu0 0.0
        %4356 = vmatprep.subr.mxu0 0.0
        %4357 = vmatpush1.msra.mxu0 0.0
        %4358 = vmatprep.subr.mxu0 0.0
        %4359 = vmatpush1.msra.mxu0 0.0
        %4360 = vmatprep.subr.mxu0 0.0
        %4361 = vmatpush1.msra.mxu0 0.0
        %4362 = vmatprep.subr.mxu0 0.0
        %4363 = vmatpush1.msra.mxu0 0.0
        %4364 = vmatprep.subr.mxu0 0.0
        %4365 = vmatpush1.msra.mxu0 0.0
        %4366 = vmatprep.subr.mxu0 0.0
        %4367 = vmatpush1.msra.mxu0 0.0
        %4368 = vmatprep.subr.mxu0 0.0
        %4369 = vmatpush1.msra.mxu0 0.0
        %4370 = vmatprep.subr.mxu0 0.0
        %4371 = vmatpush1.msra.mxu0 0.0
        %4372 = vmatprep.subr.mxu0 0.0
        %4373 = vmatpush1.msra.mxu0 0.0
        %4374 = vmatprep.subr.mxu0 0.0
        %4375 = vmatpush1.msra.mxu0 0.0
        %4376 = vmatprep.subr.mxu0 0.0
        %4377 = vmatpush1.msra.mxu0 0.0
        %4378 = vmatprep.subr.mxu0 0.0
        %4379 = vmatpush1.msra.mxu0 0.0
        %4380 = vmatprep.subr.mxu0 0.0
        %4381 = vmatpush1.msra.mxu0 0.0
        %4382 = vmatprep.subr.mxu0 0.0
        %4383 = vmatpush1.msra.mxu0 0.0
        %4384 = vmatprep.subr.mxu0 0.0
        %4385 = vmatpush1.msra.mxu0 0.0
        %4386 = vmatprep.subr.mxu0 0.0
        %4387 = vmatpush1.msra.mxu0 0.0
        %4388 = vmatprep.mubr.f32.mxu0 0.0
        %v4389 = vand.u32 %v3894, 4294901760
        %4390 = vmatmul.mubr.f32.gmra.mrb[0].mxu0 %v4389
        %v4391 = vpop.f32.mrb[0].mxu0
        %v4392 = vadd.f32 %v4313, %v4391
        %v4393 = vpop.f32.mrb[0].mxu0
        %4394 = vmatprep.mubr.f32.mxu0 0.0
        %v4395 = vand.u32 %v3897, 4294901760
        %4396 = vmatmul.mubr.f32.gmra.mrb[0].mxu0 %v4395
        %v4397 = vpop.f32.mrb[0].mxu0
        %v4398 = vadd.f32 %v4319, %v4397
        %v4399 = vpop.f32.mrb[0].mxu0
        %4400 = vdwg.mxu0
        %4403 = vrot.lane.b32.xlu0 %v4392, 16
        %v4404 = vpop.permute.xlu0 %4403
        %4405 = vrot.lane.b32.xlu0 %v4398, 16
        %v4406 = vpop.permute.xlu0 %4405
        %v4409 = vsel %vm2295, %v3333, %v4404
        %v4410 = vsel %vm2295, %v3339, %v4406
        %v4411 = vld [vmem:[%s9] sm:$0xff]
        %v4412 = vld [vmem:[%s9 + $0x8] sm:$0xff]
        %v4413 = vld [vmem:[%s9 + $0x10] sm:$0xff]
        %v4414 = vld [vmem:[%s9 + $0x18] sm:$0xff]
        %v4415 = vld [vmem:[%s10] sm:$0x1]
        %v4417 = vlaneseq
        %v4418 = vshrl.u32 %v4417, 7
        %v4419 = vsub.s32 0, %v4418
        %v4420 = vrot.slane %v4415, %v4419
        %v4423 = vsel %vm670, %v4409, 0
        %v4426 = vsel %vm670, %v4410, 0
        %4428 = vmatprep.subr.mxu0 0.0
        %v4429 = vand.u32 %v4411, 4294901760
        %4430 = vmatpush1.msra.mxu0 %v4429
        %4431 = vmatprep.subr.mxu0 0.0
        %v4432 = vand.u32 %v4412, 4294901760
        %4433 = vmatpush1.msra.mxu0 %v4432
        %4434 = vmatprep.subr.mxu0 0.0
        %v4435 = vand.u32 %v4413, 4294901760
        %4436 = vmatpush1.msra.mxu0 %v4435
        %4437 = vmatprep.subr.mxu0 0.0
        %v4438 = vand.u32 %v4414, 4294901760
        %4439 = vmatpush1.msra.mxu0 %v4438
        %4440 = vmatprep.subr.mxu0 0.0
        %4441 = vmatpush1.msra.mxu0 0.0
        %4442 = vmatprep.subr.mxu0 0.0
        %4443 = vmatpush1.msra.mxu0 0.0
        %4444 = vmatprep.subr.mxu0 0.0
        %4445 = vmatpush1.msra.mxu0 0.0
        %4446 = vmatprep.subr.mxu0 0.0
        %4447 = vmatpush1.msra.mxu0 0.0
        %4448 = vmatprep.subr.mxu0 0.0
        %4449 = vmatpush1.msra.mxu0 0.0
        %4450 = vmatprep.subr.mxu0 0.0
        %4451 = vmatpush1.msra.mxu0 0.0
        %4452 = vmatprep.subr.mxu0 0.0
        %4453 = vmatpush1.msra.mxu0 0.0
        %4454 = vmatprep.subr.mxu0 0.0
        %4455 = vmatpush1.msra.mxu0 0.0
        %4456 = vmatprep.subr.mxu0 0.0
        %4457 = vmatpush1.msra.mxu0 0.0
        %4458 = vmatprep.subr.mxu0 0.0
        %4459 = vmatpush1.msra.mxu0 0.0
        %4460 = vmatprep.subr.mxu0 0.0
        %4461 = vmatpush1.msra.mxu0 0.0
        %4462 = vmatprep.subr.mxu0 0.0
        %4463 = vmatpush1.msra.mxu0 0.0
        %4464 = vmatprep.subr.mxu0 0.0
        %4465 = vmatpush1.msra.mxu0 0.0
        %4466 = vmatprep.subr.mxu0 0.0
        %4467 = vmatpush1.msra.mxu0 0.0
        %4468 = vmatprep.subr.mxu0 0.0
        %4469 = vmatpush1.msra.mxu0 0.0
        %4470 = vmatprep.subr.mxu0 0.0
        %4471 = vmatpush1.msra.mxu0 0.0
        %4472 = vmatprep.subr.mxu0 0.0
        %4473 = vmatpush1.msra.mxu0 0.0
        %4474 = vmatprep.subr.mxu0 0.0
        %4475 = vmatpush1.msra.mxu0 0.0
        %4476 = vmatprep.subr.mxu0 0.0
        %4477 = vmatpush1.msra.mxu0 0.0
        %4478 = vmatprep.subr.mxu0 0.0
        %4479 = vmatpush1.msra.mxu0 0.0
        %4480 = vmatprep.subr.mxu0 0.0
        %4481 = vmatpush1.msra.mxu0 0.0
        %4482 = vmatprep.subr.mxu0 0.0
        %4483 = vmatpush1.msra.mxu0 0.0
        %4484 = vmatprep.subr.mxu0 0.0
        %4485 = vmatpush1.msra.mxu0 0.0
        %4486 = vmatprep.subr.mxu0 0.0
        %4487 = vmatpush1.msra.mxu0 0.0
        %4488 = vmatprep.subr.mxu0 0.0
        %4489 = vmatpush1.msra.mxu0 0.0
        %4490 = vmatprep.subr.mxu0 0.0
        %4491 = vmatpush1.msra.mxu0 0.0
        %4492 = vmatprep.subr.mxu0 0.0
        %4493 = vmatpush1.msra.mxu0 0.0
        %4494 = vmatprep.subr.mxu0 0.0
        %4495 = vmatpush1.msra.mxu0 0.0
        %4496 = vmatprep.mubr.f32.mxu0 0.0
        %v4497 = vand.u32 %v4423, 4294901760
        %v4498 = vsub.f32 %v4423, %v4497
        %v4499 = vand.u32 %v4498, 4294901760
        %v4500 = vsub.f32 %v4498, %v4499
        %v4501 = vand.u32 %v4500, 4294901760
        %4502 = vmatmul.mubr.f32.gmra.mrb[0].mxu0 %v4501
        %v4503 = vpop.f32.mrb[0].mxu0
        %v4504 = vadd.f32 %v4420, %v4503
        %v4505 = vpop.f32.mrb[0].mxu0
        %4506 = vmatprep.mubr.f32.mxu0 0.0
        %v4507 = vand.u32 %v4426, 4294901760
        %v4508 = vsub.f32 %v4426, %v4507
        %v4509 = vand.u32 %v4508, 4294901760
        %v4510 = vsub.f32 %v4508, %v4509
        %v4511 = vand.u32 %v4510, 4294901760
        %4512 = vmatmul.mubr.f32.gmra.mrb[0].mxu0 %v4511
        %v4513 = vpop.f32.mrb[0].mxu0
        %v4514 = vadd.f32 %v4420, %v4513
        %v4515 = vpop.f32.mrb[0].mxu0
        %4516 = vdwg.mxu0
        %4517 = vmatprep.subr.mxu0 0.0
        %v4518 = vand.u32 %v4411, 4294901760
        %v4519 = vsub.f32 %v4411, %v4518
        %v4520 = vand.u32 %v4519, 4294901760
        %v4521 = vsub.f32 %v4519, %v4520
        %v4522 = vand.u32 %v4521, 4294901760
        %4523 = vmatpush1.msra.mxu0 %v4522
        %4524 = vmatprep.subr.mxu0 0.0
        %v4525 = vand.u32 %v4412, 4294901760
        %v4526 = vsub.f32 %v4412, %v4525
        %v4527 = vand.u32 %v4526, 4294901760
        %v4528 = vsub.f32 %v4526, %v4527
        %v4529 = vand.u32 %v4528, 4294901760
        %4530 = vmatpush1.msra.mxu0 %v4529
        %4531 = vmatprep.subr.mxu0 0.0
        %v4532 = vand.u32 %v4413, 4294901760
        %v4533 = vsub.f32 %v4413, %v4532
        %v4534 = vand.u32 %v4533, 4294901760
        %v4535 = vsub.f32 %v4533, %v4534
        %v4536 = vand.u32 %v4535, 4294901760
        %4537 = vmatpush1.msra.mxu0 %v4536
        %4538 = vmatprep.subr.mxu0 0.0
        %v4539 = vand.u32 %v4414, 4294901760
        %v4540 = vsub.f32 %v4414, %v4539
        %v4541 = vand.u32 %v4540, 4294901760
        %v4542 = vsub.f32 %v4540, %v4541
        %v4543 = vand.u32 %v4542, 4294901760
        %4544 = vmatpush1.msra.mxu0 %v4543
        %4545 = vmatprep.subr.mxu0 0.0
        %4546 = vmatpush1.msra.mxu0 0.0
        %4547 = vmatprep.subr.mxu0 0.0
        %4548 = vmatpush1.msra.mxu0 0.0
        %4549 = vmatprep.subr.mxu0 0.0
        %4550 = vmatpush1.msra.mxu0 0.0
        %4551 = vmatprep.subr.mxu0 0.0
        %4552 = vmatpush1.msra.mxu0 0.0
        %4553 = vmatprep.subr.mxu0 0.0
        %4554 = vmatpush1.msra.mxu0 0.0
        %4555 = vmatprep.subr.mxu0 0.0
        %4556 = vmatpush1.msra.mxu0 0.0
        %4557 = vmatprep.subr.mxu0 0.0
        %4558 = vmatpush1.msra.mxu0 0.0
        %4559 = vmatprep.subr.mxu0 0.0
        %4560 = vmatpush1.msra.mxu0 0.0
        %4561 = vmatprep.subr.mxu0 0.0
        %4562 = vmatpush1.msra.mxu0 0.0
        %4563 = vmatprep.subr.mxu0 0.0
        %4564 = vmatpush1.msra.mxu0 0.0
        %4565 = vmatprep.subr.mxu0 0.0
        %4566 = vmatpush1.msra.mxu0 0.0
        %4567 = vmatprep.subr.mxu0 0.0
        %4568 = vmatpush1.msra.mxu0 0.0
        %4569 = vmatprep.subr.mxu0 0.0
        %4570 = vmatpush1.msra.mxu0 0.0
        %4571 = vmatprep.subr.mxu0 0.0
        %4572 = vmatpush1.msra.mxu0 0.0
        %4573 = vmatprep.subr.mxu0 0.0
        %4574 = vmatpush1.msra.mxu0 0.0
        %4575 = vmatprep.subr.mxu0 0.0
        %4576 = vmatpush1.msra.mxu0 0.0
        %4577 = vmatprep.subr.mxu0 0.0
        %4578 = vmatpush1.msra.mxu0 0.0
        %4579 = vmatprep.subr.mxu0 0.0
        %4580 = vmatpush1.msra.mxu0 0.0
        %4581 = vmatprep.subr.mxu0 0.0
        %4582 = vmatpush1.msra.mxu0 0.0
        %4583 = vmatprep.subr.mxu0 0.0
        %4584 = vmatpush1.msra.mxu0 0.0
        %4585 = vmatprep.subr.mxu0 0.0
        %4586 = vmatpush1.msra.mxu0 0.0
        %4587 = vmatprep.subr.mxu0 0.0
        %4588 = vmatpush1.msra.mxu0 0.0
        %4589 = vmatprep.subr.mxu0 0.0
        %4590 = vmatpush1.msra.mxu0 0.0
        %4591 = vmatprep.subr.mxu0 0.0
        %4592 = vmatpush1.msra.mxu0 0.0
        %4593 = vmatprep.subr.mxu0 0.0
        %4594 = vmatpush1.msra.mxu0 0.0
        %4595 = vmatprep.subr.mxu0 0.0
        %4596 = vmatpush1.msra.mxu0 0.0
        %4597 = vmatprep.subr.mxu0 0.0
        %4598 = vmatpush1.msra.mxu0 0.0
        %4599 = vmatprep.subr.mxu0 0.0
        %4600 = vmatpush1.msra.mxu0 0.0
        %4601 = vmatprep.mubr.f32.mxu0 0.0
        %v4602 = vand.u32 %v4423, 4294901760
        %4603 = vmatmul.mubr.f32.gmra.mrb[0].mxu0 %v4602
        %v4604 = vpop.f32.mrb[0].mxu0
        %v4605 = vadd.f32 %v4504, %v4604
        %v4606 = vpop.f32.mrb[0].mxu0
        %4607 = vmatprep.mubr.f32.mxu0 0.0
        %v4608 = vand.u32 %v4426, 4294901760
        %4609 = vmatmul.mubr.f32.gmra.mrb[0].mxu0 %v4608
        %v4610 = vpop.f32.mrb[0].mxu0
        %v4611 = vadd.f32 %v4514, %v4610
        %v4612 = vpop.f32.mrb[0].mxu0
        %4613 = vdwg.mxu0
        %4614 = vmatprep.subr.mxu0 0.0
        %v4615 = vand.u32 %v4411, 4294901760
        %v4616 = vsub.f32 %v4411, %v4615
        %4617 = vmatpush1.msra.mxu0 %v4616
        %4618 = vmatprep.subr.mxu0 0.0
        %v4619 = vand.u32 %v4412, 4294901760
        %v4620 = vsub.f32 %v4412, %v4619
        %4621 = vmatpush1.msra.mxu0 %v4620
        %4622 = vmatprep.subr.mxu0 0.0
        %v4623 = vand.u32 %v4413, 4294901760
        %v4624 = vsub.f32 %v4413, %v4623
        %4625 = vmatpush1.msra.mxu0 %v4624
        %4626 = vmatprep.subr.mxu0 0.0
        %v4627 = vand.u32 %v4414, 4294901760
        %v4628 = vsub.f32 %v4414, %v4627
        %4629 = vmatpush1.msra.mxu0 %v4628
        %4630 = vmatprep.subr.mxu0 0.0
        %4631 = vmatpush1.msra.mxu0 0.0
        %4632 = vmatprep.subr.mxu0 0.0
        %4633 = vmatpush1.msra.mxu0 0.0
        %4634 = vmatprep.subr.mxu0 0.0
        %4635 = vmatpush1.msra.mxu0 0.0
        %4636 = vmatprep.subr.mxu0 0.0
        %4637 = vmatpush1.msra.mxu0 0.0
        %4638 = vmatprep.subr.mxu0 0.0
        %4639 = vmatpush1.msra.mxu0 0.0
        %4640 = vmatprep.subr.mxu0 0.0
        %4641 = vmatpush1.msra.mxu0 0.0
        %4642 = vmatprep.subr.mxu0 0.0
        %4643 = vmatpush1.msra.mxu0 0.0
        %4644 = vmatprep.subr.mxu0 0.0
        %4645 = vmatpush1.msra.mxu0 0.0
        %4646 = vmatprep.subr.mxu0 0.0
        %4647 = vmatpush1.msra.mxu0 0.0
        %4648 = vmatprep.subr.mxu0 0.0
        %4649 = vmatpush1.msra.mxu0 0.0
        %4650 = vmatprep.subr.mxu0 0.0
        %4651 = vmatpush1.msra.mxu0 0.0
        %4652 = vmatprep.subr.mxu0 0.0
        %4653 = vmatpush1.msra.mxu0 0.0
        %4654 = vmatprep.subr.mxu0 0.0
        %4655 = vmatpush1.msra.mxu0 0.0
        %4656 = vmatprep.subr.mxu0 0.0
        %4657 = vmatpush1.msra.mxu0 0.0
        %4658 = vmatprep.subr.mxu0 0.0
        %4659 = vmatpush1.msra.mxu0 0.0
        %4660 = vmatprep.subr.mxu0 0.0
        %4661 = vmatpush1.msra.mxu0 0.0
        %4662 = vmatprep.subr.mxu0 0.0
        %4663 = vmatpush1.msra.mxu0 0.0
        %4664 = vmatprep.subr.mxu0 0.0
        %4665 = vmatpush1.msra.mxu0 0.0
        %4666 = vmatprep.subr.mxu0 0.0
        %4667 = vmatpush1.msra.mxu0 0.0
        %4668 = vmatprep.subr.mxu0 0.0
        %4669 = vmatpush1.msra.mxu0 0.0
        %4670 = vmatprep.subr.mxu0 0.0
        %4671 = vmatpush1.msra.mxu0 0.0
        %4672 = vmatprep.subr.mxu0 0.0
        %4673 = vmatpush1.msra.mxu0 0.0
        %4674 = vmatprep.subr.mxu0 0.0
        %4675 = vmatpush1.msra.mxu0 0.0
        %4676 = vmatprep.subr.mxu0 0.0
        %4677 = vmatpush1.msra.mxu0 0.0
        %4678 = vmatprep.subr.mxu0 0.0
        %4679 = vmatpush1.msra.mxu0 0.0
        %4680 = vmatprep.subr.mxu0 0.0
        %4681 = vmatpush1.msra.mxu0 0.0
        %4682 = vmatprep.subr.mxu0 0.0
        %4683 = vmatpush1.msra.mxu0 0.0
        %4684 = vmatprep.subr.mxu0 0.0
        %4685 = vmatpush1.msra.mxu0 0.0
        %4686 = vmatprep.mubr.f32.mxu0 0.0
        %v4687 = vand.u32 %v4423, 4294901760
        %v4688 = vsub.f32 %v4423, %v4687
        %4689 = vmatmul.mubr.f32.gmra.mrb[0].mxu0 %v4688
        %v4690 = vpop.f32.mrb[0].mxu0
        %v4691 = vadd.f32 %v4605, %v4690
        %v4692 = vpop.f32.mrb[0].mxu0
        %4693 = vmatprep.mubr.f32.mxu0 0.0
        %v4694 = vand.u32 %v4426, 4294901760
        %v4695 = vsub.f32 %v4426, %v4694
        %4696 = vmatmul.mubr.f32.gmra.mrb[0].mxu0 %v4695
        %v4697 = vpop.f32.mrb[0].mxu0
        %v4698 = vadd.f32 %v4611, %v4697
        %v4699 = vpop.f32.mrb[0].mxu0
        %4700 = vdwg.mxu0
        %4701 = vmatprep.subr.mxu0 0.0
        %v4702 = vand.u32 %v4411, 4294901760
        %4703 = vmatpush1.msra.mxu0 %v4702
        %4704 = vmatprep.subr.mxu0 0.0
        %v4705 = vand.u32 %v4412, 4294901760
        %4706 = vmatpush1.msra.mxu0 %v4705
        %4707 = vmatprep.subr.mxu0 0.0
        %v4708 = vand.u32 %v4413, 4294901760
        %4709 = vmatpush1.msra.mxu0 %v4708
        %4710 = vmatprep.subr.mxu0 0.0
        %v4711 = vand.u32 %v4414, 4294901760
        %4712 = vmatpush1.msra.mxu0 %v4711
        %4713 = vmatprep.subr.mxu0 0.0
        %4714 = vmatpush1.msra.mxu0 0.0
        %4715 = vmatprep.subr.mxu0 0.0
        %4716 = vmatpush1.msra.mxu0 0.0
        %4717 = vmatprep.subr.mxu0 0.0
        %4718 = vmatpush1.msra.mxu0 0.0
        %4719 = vmatprep.subr.mxu0 0.0
        %4720 = vmatpush1.msra.mxu0 0.0
        %4721 = vmatprep.subr.mxu0 0.0
        %4722 = vmatpush1.msra.mxu0 0.0
        %4723 = vmatprep.subr.mxu0 0.0
        %4724 = vmatpush1.msra.mxu0 0.0
        %4725 = vmatprep.subr.mxu0 0.0
        %4726 = vmatpush1.msra.mxu0 0.0
        %4727 = vmatprep.subr.mxu0 0.0
        %4728 = vmatpush1.msra.mxu0 0.0
        %4729 = vmatprep.subr.mxu0 0.0
        %4730 = vmatpush1.msra.mxu0 0.0
        %4731 = vmatprep.subr.mxu0 0.0
        %4732 = vmatpush1.msra.mxu0 0.0
        %4733 = vmatprep.subr.mxu0 0.0
        %4734 = vmatpush1.msra.mxu0 0.0
        %4735 = vmatprep.subr.mxu0 0.0
        %4736 = vmatpush1.msra.mxu0 0.0
        %4737 = vmatprep.subr.mxu0 0.0
        %4738 = vmatpush1.msra.mxu0 0.0
        %4739 = vmatprep.subr.mxu0 0.0
        %4740 = vmatpush1.msra.mxu0 0.0
        %4741 = vmatprep.subr.mxu0 0.0
        %4742 = vmatpush1.msra.mxu0 0.0
        %4743 = vmatprep.subr.mxu0 0.0
        %4744 = vmatpush1.msra.mxu0 0.0
        %4745 = vmatprep.subr.mxu0 0.0
        %4746 = vmatpush1.msra.mxu0 0.0
        %4747 = vmatprep.subr.mxu0 0.0
        %4748 = vmatpush1.msra.mxu0 0.0
        %4749 = vmatprep.subr.mxu0 0.0
        %4750 = vmatpush1.msra.mxu0 0.0
        %4751 = vmatprep.subr.mxu0 0.0
        %4752 = vmatpush1.msra.mxu0 0.0
        %4753 = vmatprep.subr.mxu0 0.0
        %4754 = vmatpush1.msra.mxu0 0.0
        %4755 = vmatprep.subr.mxu0 0.0
        %4756 = vmatpush1.msra.mxu0 0.0
        %4757 = vmatprep.subr.mxu0 0.0
        %4758 = vmatpush1.msra.mxu0 0.0
        %4759 = vmatprep.subr.mxu0 0.0
        %4760 = vmatpush1.msra.mxu0 0.0
        %4761 = vmatprep.subr.mxu0 0.0
        %4762 = vmatpush1.msra.mxu0 0.0
        %4763 = vmatprep.subr.mxu0 0.0
        %4764 = vmatpush1.msra.mxu0 0.0
        %4765 = vmatprep.subr.mxu0 0.0
        %4766 = vmatpush1.msra.mxu0 0.0
        %4767 = vmatprep.subr.mxu0 0.0
        %4768 = vmatpush1.msra.mxu0 0.0
        %4769 = vmatprep.mubr.f32.mxu0 0.0
        %v4770 = vand.u32 %v4423, 4294901760
        %v4771 = vsub.f32 %v4423, %v4770
        %v4772 = vand.u32 %v4771, 4294901760
        %4773 = vmatmul.mubr.f32.gmra.mrb[0].mxu0 %v4772
        %v4774 = vpop.f32.mrb[0].mxu0
        %v4775 = vadd.f32 %v4691, %v4774
        %v4776 = vpop.f32.mrb[0].mxu0
        %4777 = vmatprep.mubr.f32.mxu0 0.0
        %v4778 = vand.u32 %v4426, 4294901760
        %v4779 = vsub.f32 %v4426, %v4778
        %v4780 = vand.u32 %v4779, 4294901760
        %4781 = vmatmul.mubr.f32.gmra.mrb[0].mxu0 %v4780
        %v4782 = vpop.f32.mrb[0].mxu0
        %v4783 = vadd.f32 %v4698, %v4782
        %v4784 = vpop.f32.mrb[0].mxu0
        %4785 = vdwg.mxu0
        %4786 = vmatprep.subr.mxu0 0.0
        %v4787 = vand.u32 %v4411, 4294901760
        %v4788 = vsub.f32 %v4411, %v4787
        %v4789 = vand.u32 %v4788, 4294901760
        %4790 = vmatpush1.msra.mxu0 %v4789
        %4791 = vmatprep.subr.mxu0 0.0
        %v4792 = vand.u32 %v4412, 4294901760
        %v4793 = vsub.f32 %v4412, %v4792
        %v4794 = vand.u32 %v4793, 4294901760
        %4795 = vmatpush1.msra.mxu0 %v4794
        %4796 = vmatprep.subr.mxu0 0.0
        %v4797 = vand.u32 %v4413, 4294901760
        %v4798 = vsub.f32 %v4413, %v4797
        %v4799 = vand.u32 %v4798, 4294901760
        %4800 = vmatpush1.msra.mxu0 %v4799
        %4801 = vmatprep.subr.mxu0 0.0
        %v4802 = vand.u32 %v4414, 4294901760
        %v4803 = vsub.f32 %v4414, %v4802
        %v4804 = vand.u32 %v4803, 4294901760
        %4805 = vmatpush1.msra.mxu0 %v4804
        %4806 = vmatprep.subr.mxu0 0.0
        %4807 = vmatpush1.msra.mxu0 0.0
        %4808 = vmatprep.subr.mxu0 0.0
        %4809 = vmatpush1.msra.mxu0 0.0
        %4810 = vmatprep.subr.mxu0 0.0
        %4811 = vmatpush1.msra.mxu0 0.0
        %4812 = vmatprep.subr.mxu0 0.0
        %4813 = vmatpush1.msra.mxu0 0.0
        %4814 = vmatprep.subr.mxu0 0.0
        %4815 = vmatpush1.msra.mxu0 0.0
        %4816 = vmatprep.subr.mxu0 0.0
        %4817 = vmatpush1.msra.mxu0 0.0
        %4818 = vmatprep.subr.mxu0 0.0
        %4819 = vmatpush1.msra.mxu0 0.0
        %4820 = vmatprep.subr.mxu0 0.0
        %4821 = vmatpush1.msra.mxu0 0.0
        %4822 = vmatprep.subr.mxu0 0.0
        %4823 = vmatpush1.msra.mxu0 0.0
        %4824 = vmatprep.subr.mxu0 0.0
        %4825 = vmatpush1.msra.mxu0 0.0
        %4826 = vmatprep.subr.mxu0 0.0
        %4827 = vmatpush1.msra.mxu0 0.0
        %4828 = vmatprep.subr.mxu0 0.0
        %4829 = vmatpush1.msra.mxu0 0.0
        %4830 = vmatprep.subr.mxu0 0.0
        %4831 = vmatpush1.msra.mxu0 0.0
        %4832 = vmatprep.subr.mxu0 0.0
        %4833 = vmatpush1.msra.mxu0 0.0
        %4834 = vmatprep.subr.mxu0 0.0
        %4835 = vmatpush1.msra.mxu0 0.0
        %4836 = vmatprep.subr.mxu0 0.0
        %4837 = vmatpush1.msra.mxu0 0.0
        %4838 = vmatprep.subr.mxu0 0.0
        %4839 = vmatpush1.msra.mxu0 0.0
        %4840 = vmatprep.subr.mxu0 0.0
        %4841 = vmatpush1.msra.mxu0 0.0
        %4842 = vmatprep.subr.mxu0 0.0
        %4843 = vmatpush1.msra.mxu0 0.0
        %4844 = vmatprep.subr.mxu0 0.0
        %4845 = vmatpush1.msra.mxu0 0.0
        %4846 = vmatprep.subr.mxu0 0.0
        %4847 = vmatpush1.msra.mxu0 0.0
        %4848 = vmatprep.subr.mxu0 0.0
        %4849 = vmatpush1.msra.mxu0 0.0
        %4850 = vmatprep.subr.mxu0 0.0
        %4851 = vmatpush1.msra.mxu0 0.0
        %4852 = vmatprep.subr.mxu0 0.0
        %4853 = vmatpush1.msra.mxu0 0.0
        %4854 = vmatprep.subr.mxu0 0.0
        %4855 = vmatpush1.msra.mxu0 0.0
        %4856 = vmatprep.subr.mxu0 0.0
        %4857 = vmatpush1.msra.mxu0 0.0
        %4858 = vmatprep.subr.mxu0 0.0
        %4859 = vmatpush1.msra.mxu0 0.0
        %4860 = vmatprep.subr.mxu0 0.0
        %4861 = vmatpush1.msra.mxu0 0.0
        %4862 = vmatprep.mubr.f32.mxu0 0.0
        %v4863 = vand.u32 %v4423, 4294901760
        %4864 = vmatmul.mubr.f32.gmra.mrb[0].mxu0 %v4863
        %v4865 = vpop.f32.mrb[0].mxu0
        %v4866 = vadd.f32 %v4775, %v4865
        %v4867 = vpop.f32.mrb[0].mxu0
        %4868 = vmatprep.mubr.f32.mxu0 0.0
        %v4869 = vand.u32 %v4426, 4294901760
        %4870 = vmatmul.mubr.f32.gmra.mrb[0].mxu0 %v4869
        %v4871 = vpop.f32.mrb[0].mxu0
        %v4872 = vadd.f32 %v4783, %v4871
        %v4873 = vpop.f32.mrb[0].mxu0
        %4874 = vdwg.mxu0
        %4875 = vmatprep.subr.mxu0 0.0
        %v4876 = vand.u32 %v4411, 4294901760
        %4877 = vmatpush1.msra.mxu0 %v4876
        %4878 = vmatprep.subr.mxu0 0.0
        %v4879 = vand.u32 %v4412, 4294901760
        %4880 = vmatpush1.msra.mxu0 %v4879
        %4881 = vmatprep.subr.mxu0 0.0
        %v4882 = vand.u32 %v4413, 4294901760
        %4883 = vmatpush1.msra.mxu0 %v4882
        %4884 = vmatprep.subr.mxu0 0.0
        %v4885 = vand.u32 %v4414, 4294901760
        %4886 = vmatpush1.msra.mxu0 %v4885
        %4887 = vmatprep.subr.mxu0 0.0
        %4888 = vmatpush1.msra.mxu0 0.0
        %4889 = vmatprep.subr.mxu0 0.0
        %4890 = vmatpush1.msra.mxu0 0.0
        %4891 = vmatprep.subr.mxu0 0.0
        %4892 = vmatpush1.msra.mxu0 0.0
        %4893 = vmatprep.subr.mxu0 0.0
        %4894 = vmatpush1.msra.mxu0 0.0
        %4895 = vmatprep.subr.mxu0 0.0
        %4896 = vmatpush1.msra.mxu0 0.0
        %4897 = vmatprep.subr.mxu0 0.0
        %4898 = vmatpush1.msra.mxu0 0.0
        %4899 = vmatprep.subr.mxu0 0.0
        %4900 = vmatpush1.msra.mxu0 0.0
        %4901 = vmatprep.subr.mxu0 0.0
        %4902 = vmatpush1.msra.mxu0 0.0
        %4903 = vmatprep.subr.mxu0 0.0
        %4904 = vmatpush1.msra.mxu0 0.0
        %4905 = vmatprep.subr.mxu0 0.0
        %4906 = vmatpush1.msra.mxu0 0.0
        %4907 = vmatprep.subr.mxu0 0.0
        %4908 = vmatpush1.msra.mxu0 0.0
        %4909 = vmatprep.subr.mxu0 0.0
        %4910 = vmatpush1.msra.mxu0 0.0
        %4911 = vmatprep.subr.mxu0 0.0
        %4912 = vmatpush1.msra.mxu0 0.0
        %4913 = vmatprep.subr.mxu0 0.0
        %4914 = vmatpush1.msra.mxu0 0.0
        %4915 = vmatprep.subr.mxu0 0.0
        %4916 = vmatpush1.msra.mxu0 0.0
        %4917 = vmatprep.subr.mxu0 0.0
        %4918 = vmatpush1.msra.mxu0 0.0
        %4919 = vmatprep.subr.mxu0 0.0
        %4920 = vmatpush1.msra.mxu0 0.0
        %4921 = vmatprep.subr.mxu0 0.0
        %4922 = vmatpush1.msra.mxu0 0.0
        %4923 = vmatprep.subr.mxu0 0.0
        %4924 = vmatpush1.msra.mxu0 0.0
        %4925 = vmatprep.subr.mxu0 0.0
        %4926 = vmatpush1.msra.mxu0 0.0
        %4927 = vmatprep.subr.mxu0 0.0
        %4928 = vmatpush1.msra.mxu0 0.0
        %4929 = vmatprep.subr.mxu0 0.0
        %4930 = vmatpush1.msra.mxu0 0.0
        %4931 = vmatprep.subr.mxu0 0.0
        %4932 = vmatpush1.msra.mxu0 0.0
        %4933 = vmatprep.subr.mxu0 0.0
        %4934 = vmatpush1.msra.mxu0 0.0
        %4935 = vmatprep.subr.mxu0 0.0
        %4936 = vmatpush1.msra.mxu0 0.0
        %4937 = vmatprep.subr.mxu0 0.0
        %4938 = vmatpush1.msra.mxu0 0.0
        %4939 = vmatprep.subr.mxu0 0.0
        %4940 = vmatpush1.msra.mxu0 0.0
        %4941 = vmatprep.subr.mxu0 0.0
        %4942 = vmatpush1.msra.mxu0 0.0
        %4943 = vmatprep.mubr.f32.mxu0 0.0
        %v4944 = vand.u32 %v4423, 4294901760
        %4945 = vmatmul.mubr.f32.gmra.mrb[0].mxu0 %v4944
        %v4946 = vpop.f32.mrb[0].mxu0
        %v4947 = vadd.f32 %v4866, %v4946
        %v4948 = vpop.f32.mrb[0].mxu0
        %4949 = vmatprep.mubr.f32.mxu0 0.0
        %v4950 = vand.u32 %v4426, 4294901760
        %4951 = vmatmul.mubr.f32.gmra.mrb[0].mxu0 %v4950
        %v4952 = vpop.f32.mrb[0].mxu0
        %v4953 = vadd.f32 %v4872, %v4952
        %v4954 = vpop.f32.mrb[0].mxu0
        %4955 = vdwg.mxu0
        %v4956 = vadd.f32 %v4947, %v653
        %v4957 = vadd.f32 %v4953, %v654
        %v4958 = vsel %vm670, %v4956, 0.0
        %4959 = vadd.xlane.f32.xlu0 %v4958
        %v4960 = vpop.xlane.xlu0 %4959
        %v4961 = vsel %vm670, %v4957, 0.0
        %4962 = vadd.xlane.f32.xlu0 %v4961
        %v4963 = vpop.xlane.xlu0 %4962
        %v4964 = vrcp.pop 32.0
        %v4965 = vmul.f32 %v4960, %v4964
        %v4966 = vmul.f32 %v4963, %v4964
        %v4967 = vsub.f32 %v4956, %v4965
        %v4968 = vsub.f32 %v4957, %v4966
        %v4969 = vmul.f32 %v4967, %v4967
        %v4970 = vmul.f32 %v4968, %v4968
        %v4971 = vsel %vm670, %v4969, 0.0
        %4972 = vadd.xlane.f32.xlu0 %v4971
        %v4973 = vpop.xlane.xlu0 %4972
        %v4974 = vsel %vm670, %v4970, 0.0
        %4975 = vadd.xlane.f32.xlu0 %v4974
        %v4976 = vpop.xlane.xlu0 %4975
        %v4977 = vmul.f32 %v4973, %v4964
        %v4978 = vmul.f32 %v4976, %v4964
        %v4979 = vadd.f32 %v4977, 1e-05
        %v4980 = vadd.f32 %v4978, 1e-05
        %v4981 = vrsqrt.pop %v4979
        %v4982 = vrsqrt.pop %v4980
        %v4983 = vmul.f32 %v4967, %v4981
        %v4984 = vmul.f32 %v4968, %v4982
        %v4985 = vld [vmem:[%s11] sm:$0x1]
        %v4987 = vlaneseq
        %v4988 = vshrl.u32 %v4987, 7
        %v4989 = vsub.s32 0, %v4988
        %v4990 = vrot.slane %v4985, %v4989
        %v4992 = vmul.f32 %v4983, %v4990
        %v4993 = vmul.f32 %v4984, %v4990
        %v4994 = vld [vmem:[%s12] sm:$0x1]
        %v4996 = vlaneseq
        %v4997 = vshrl.u32 %v4996, 7
        %v4998 = vsub.s32 0, %v4997
        %v4999 = vrot.slane %v4994, %v4998
        %v5001 = vadd.f32 %v4992, %v4999
        %v5002 = vadd.f32 %v4993, %v4999
        %5003 = vst.msk [vmem:[%s642] sm:$0xff] %vm670, %v5001
        %5004 = vst.msk [vmem:[%s642 + $0x8] sm:$0xff] %vm670, %v5002
        %s5005 = sand.u32 %s352, 1
        %s5006 = scalar_lea.sflag [#allocation4], %s5005
        %s5007 = sand.u32 %s352, 1
        %s5008 = smul.addr %s5007, 16
        %s5009 = scalar_lea.vmem [#allocation14], %s5008
        %s5010 = sand.u32 %s380, 1
        %s5011 = scalar_lea.sflag [#allocation16], %s5010
        %s5012 = sand.u32 %s380, 1
        %s5013 = smul.addr %s5012, 32
        %s5014 = scalar_lea.vmem [#allocation15], %s5013
        // Predicated region
        $region101: #{tpu_custom_call.1} parent=71 // pred_check
          %p5015 = pneg %p362
        $region102: #{tpu_custom_call.1} parent=71 // pred_check_branch
          %5017 = sbr.rel (%p5015) target = $region104
        $region103: #{tpu_custom_call.1} parent=71 // pred_region
          %s5018 = smul.u32 2, %s45
          %s5020 = ssub.s32 256, 256
          %5021 = vsyncadd %s5006, %s5020
          %s5022 = smul.addr %s44, 2
          %s5023 = sadd.s32 %s5018, %s5022
          %s5024 = smul.addr %s5023, 128
          %s5025 = scalar_lea.hbm %s13, %s5024
          %s5026 = sshll.u32 %s5009, 4
          %s5027 = int_to_ptr.vmem [resolvable:$true] %s5026
          %5032 = dma.vmem_to_hbm [thread:$0]  %s5027, 256, %s5025, %s5006, 128, 128, 8
        $region104: #{tpu_custom_call.1} parent=71 // pred_fallthru
          _
        // Predicated region
        $region105: #{tpu_custom_call.1} parent=71 // pred_check
          %p5033 = pneg %p390
        $region106: #{tpu_custom_call.1} parent=71 // pred_check_branch
          %5035 = sbr.rel (%p5033) target = $region108
        $region107: #{tpu_custom_call.1} parent=71 // pred_region
          #allocation18 [shape = 'u32[6]{0}', space=smem, size = 0x18, scoped, tag = 'DMA stride descriptor']
          %s5036 = smul.u32 2, %s45
          %s5038 = ssub.s32 512, 512
          %5039 = vsyncadd %s5011, %s5038
          %s5040 = smul.addr %s44, 2
          %s5041 = sadd.s32 %s5036, %s5040
          %s5042 = smul.addr %s5041, 128
          %s5043 = scalar_lea.hbm %s14, %s5042
          %s5045 = sshll.u32 1, 14
          %s5046 = sxor.u32 4294967295, %s5045
          %s5049 = sshll.u32 7, 18
          %s5050 = sxor.u32 4294967295, %s5049
          %s5051 = sand.u32 0, %s5050
          %s5053 = sor.u32 %s5051, 0
          %s5055 = sshll.u32 3, 24
          %s5056 = sxor.u32 4294967295, %s5055
          %s5057 = sand.u32 %s5053, %s5056
          %s5059 = sor.u32 %s5057, 0
          %s5060 = sshll.u32 %s5014, 4
          %s5061 = int_to_ptr.vmem [resolvable:$true] %s5060
          %5067 = sst [smem:[#allocation18]] 256
          %s5068 = scalar_lea.smem [#allocation18], 1
          %5069 = sst [smem:[%s5068]] 512
          %s5070 = scalar_lea.smem [#allocation18], 2
          %5071 = sst [smem:[%s5070]] 2
          %s5072 = scalar_lea.smem [#allocation18], 3
          %5073 = sst [smem:[%s5072]] 128
          %s5074 = scalar_lea.smem [#allocation18], 4
          %5075 = sst [smem:[%s5074]] 128
          %s5076 = scalar_lea.smem [#allocation18], 5
          %5077 = sst [smem:[%s5076]] 8
          %5079 = dma.general %s5061, 512, %s5043, %s5011, [#allocation17], [#allocation18], %s5059, 0
        $region108: #{tpu_custom_call.1} parent=71 // pred_fallthru
          _
      $region72: #{tpu_custom_call.1} parent=5 // pred_fallthru
        _
      %p5080 = scmp.le.s32.totalorder 2, %s35
      // Predicated region
      $region109: #{tpu_custom_call.1} parent=5 // pred_check
        %p5081 = pneg %p5080
      $region110: #{tpu_custom_call.1} parent=5 // pred_check_branch
        %5083 = sbr.rel (%p5081) target = $region112
      $region111: #{tpu_custom_call.1} parent=5 // pred_region
        %s5084 = ssub.s32 %s35, 2
        // Predicated region
        $region113: #{tpu_custom_call.1} parent=111 // pred_check
          %p5085 = pneg %p368
        $region114: #{tpu_custom_call.1} parent=111 // pred_check_branch
          %5087 = sbr.rel (%p5085) target = $region116
        $region115: #{tpu_custom_call.1} parent=111 // pred_region
          %s5088 = sand.u32 %s353, 1
          %s5089 = scalar_lea.sflag [#allocation4], %s5088
          %s5090 = sand.u32 %s353, 1
          %s5091 = smul.addr %s5090, 16
          %s5092 = scalar_lea.vmem [#allocation14], %s5091
          %5093 = dma.done %s5089, 256
        $region116: #{tpu_custom_call.1} parent=111 // pred_fallthru
          _
        // Predicated region
        $region117: #{tpu_custom_call.1} parent=111 // pred_check
          %p5094 = pneg %p396
        $region118: #{tpu_custom_call.1} parent=111 // pred_check_branch
          %5096 = sbr.rel (%p5094) target = $region120
        $region119: #{tpu_custom_call.1} parent=111 // pred_region
          %s5097 = sand.u32 %s381, 1
          %s5098 = scalar_lea.sflag [#allocation16], %s5097
          %s5099 = sand.u32 %s381, 1
          %s5100 = smul.addr %s5099, 32
          %s5101 = scalar_lea.vmem [#allocation15], %s5100
          %5102 = dma.done %s5098, 512
        $region120: #{tpu_custom_call.1} parent=111 // pred_fallthru
          _
      $region112: #{tpu_custom_call.1} parent=5 // pred_fallthru
        _
    $region6: #{tpu_custom_call.1} parent=1 // loop_footer
      %s39 = sadd.s32 1, %s35
    $region7: #{tpu_custom_call.1} parent=1 // loop_footer_branch
      %34 = sbr.rel target = $region3
    $region8: #{tpu_custom_call.1} parent=1 // loop_exit
      _
    %5103 = vsyncpa [#allocation3], 1
    %s5104 = scalar_lea.sflag [#allocation3], 1
    %5105 = vsyncpa %s5104, 1
    %5106 = vsyncpa [#allocation6], 1
    %s5107 = scalar_lea.sflag [#allocation6], 1
    %5108 = vsyncpa %s5107, 1
    %5109 = vsyncpa [#allocation9], 1
    %5110 = vsyncpa [#allocation12], 1
    %5111 = vsyncpa [#allocation4], 1
    %s5112 = scalar_lea.sflag [#allocation4], 1
    %5113 = vsyncpa %s5112, 1
    %5114 = vsyncpa [#allocation16], 1
    %s5115 = scalar_lea.sflag [#allocation16], 1
    %5116 = vsyncpa %s5115, 1

</llo_original>
